<compile_context>
chip_gen: v7x
topology: tpu7x:2x2x1
jax: 0.10.0
libtpu: 0.0.40
codegen_flags: <defaults>
</compile_context>

<pallas_src>
import functools

import jax
import jax.numpy as jnp
from jax.experimental import pallas as pl
from jax.experimental.pallas import tpu as pltpu


def _round_up(x, m):
    return (x + m - 1) // m * m


def _mlp_kernel(x_ref, w1_ref, b1_ref, w2_ref, b2_ref, w3_ref, b3_ref, o_ref):
    # layer 1: bf16 matmul on the MXU, f32 accumulate; bias + ReLU in f32.
    h1 = jnp.dot(x_ref[...], w1_ref[...], preferred_element_type=jnp.float32)
    h1 = jnp.maximum(h1 + b1_ref[...], 0.0).astype(jnp.bfloat16)
    # layer 2
    h2 = jnp.dot(h1, w2_ref[...], preferred_element_type=jnp.float32)
    h2 = jnp.maximum(h2 + b2_ref[...], 0.0).astype(jnp.bfloat16)
    # layer 3
    out = jnp.dot(h2, w3_ref[...], preferred_element_type=jnp.float32)
    o_ref[...] = (out + b3_ref[...]).astype(o_ref.dtype)


def prepare_params(params):
    """One-time weight prep: pad 100->128 feature dims, cast weights to bf16.

    Do NOT call this per forward pass — cache the result and reuse it, so the
    per-call jitted path never re-reads / re-writes the weights.
    """
    w1, b1 = params["w1"], params["b1"]
    w2, b2 = params["w2"], params["b2"]
    w3, b3 = params["w3"], params["b3"]

    num_inputs, hidden = w1.shape
    num_outputs = w3.shape[1]
    in_p = _round_up(num_inputs, 128)
    out_p = _round_up(num_outputs, 128)

    w1p = (jnp.zeros((in_p, hidden), jnp.bfloat16)
           .at[:num_inputs, :].set(w1.astype(jnp.bfloat16)))
    w2p = w2.astype(jnp.bfloat16)
    w3p = (jnp.zeros((hidden, out_p), jnp.bfloat16)
           .at[:, :num_outputs].set(w3.astype(jnp.bfloat16)))
    b1p = b1.astype(jnp.float32).reshape(1, hidden)
    b2p = b2.astype(jnp.float32).reshape(1, hidden)
    b3p = (jnp.zeros((1, out_p), jnp.float32)
           .at[:, :num_outputs].set(b3.astype(jnp.float32).reshape(1, num_outputs)))

    prepped = {"w1": w1p, "b1": b1p, "w2": w2p, "b2": b2p, "w3": w3p, "b3": b3p}
    prepped = jax.tree_util.tree_map(jax.block_until_ready,
                                     jax.device_put(prepped))
    meta = {"num_inputs": num_inputs, "num_outputs": num_outputs}
    return prepped, meta


@functools.partial(
    jax.jit,
    static_argnames=("num_inputs", "num_outputs", "max_batch_tile", "slice_output"))
def fibonacci_mlp_forward(x, prepped, *, num_inputs, num_outputs,
                          max_batch_tile=512, slice_output=True):
    """x: [B, num_inputs] f32.  prepped: output of prepare_params (padded bf16)."""
    w1p, b1p = prepped["w1"], prepped["b1"]
    w2p, b2p = prepped["w2"], prepped["b2"]
    w3p, b3p = prepped["w3"], prepped["b3"]

    B = x.shape[0]
    in_p, hidden = w1p.shape
    out_p = w3p.shape[1]

    # bf16 packs 16 rows per sublane tile -> 16-aligned batch tile; cap at
    # max_batch_tile so large B yields >= 2 grid steps (megacore sharding).
    tb = min(max_batch_tile, _round_up(max(B, 16), 16))
    b_pad = _round_up(B, tb)
    n_tiles = b_pad // tb

    # Per-call activation pad + bf16 cast (cheap; weights already prepped).
    xp = (jnp.zeros((b_pad, in_p), jnp.bfloat16)
          .at[:B, :num_inputs].set(x.astype(jnp.bfloat16)))

    const = lambda i: (0, 0)  # weights/biases: same block every step -> VMEM-resident

    flops = 2 * b_pad * (in_p * hidden + hidden * hidden + hidden * out_p)
    bytes_accessed = (xp.size * 2 + b_pad * out_p * 4
                      + (w1p.size + w2p.size + w3p.size) * 2
                      + (b1p.size + b2p.size + b3p.size) * 4)
    cost = pl.CostEstimate(flops=flops, transcendentals=0,
                           bytes_accessed=bytes_accessed)

    out = pl.pallas_call(
        _mlp_kernel,
        out_shape=jax.ShapeDtypeStruct((b_pad, out_p), jnp.float32),
        grid=(n_tiles,),
        in_specs=[
            pl.BlockSpec((tb, in_p), lambda i: (i, 0)),      # x tile
            pl.BlockSpec((in_p, hidden), const),             # w1
            pl.BlockSpec((1, hidden), const),                # b1
            pl.BlockSpec((hidden, hidden), const),           # w2
            pl.BlockSpec((1, hidden), const),                # b2
            pl.BlockSpec((hidden, out_p), const),            # w3
            pl.BlockSpec((1, out_p), const),                 # b3
        ],
        out_specs=pl.BlockSpec((tb, out_p), lambda i: (i, 0)),
        compiler_params=pltpu.CompilerParams(
            dimension_semantics=("parallel",),
            vmem_limit_bytes=32 << 20,
        ),
        cost_estimate=cost,
    )(xp, w1p, b1p, w2p, b2p, w3p, b3p)

    if slice_output:
        return out[:B, :num_outputs]
    # Padded (b_pad, out_p) slab; rows >= B and cols >= num_outputs are junk.
    return out


def init_params(key, num_inputs=100, hidden=1024, num_outputs=100):
    """Deterministic synthetic parameters (PyTorch Linear-style uniform init)."""
    ks = jax.random.split(key, 6)

    def linear(kw, kb, fan_in, fan_out):
        bound = 1.0 / jnp.sqrt(fan_in)
        # stored as [in, out] (transpose of torch's [out, in])
        w = jax.random.uniform(kw, (fan_in, fan_out), jnp.float32, -bound, bound)
        b = jax.random.uniform(kb, (1, fan_out), jnp.float32, -bound, bound)
        return w, b

    w1, b1 = linear(ks[0], ks[1], num_inputs, hidden)
    w2, b2 = linear(ks[2], ks[3], hidden, hidden)
    w3, b3 = linear(ks[4], ks[5], hidden, num_outputs)
    return {"w1": w1, "b1": b1, "w2": w2, "b2": b2, "w3": w3, "b3": b3}


def _reference_bf16(x, p):
    """Pure-JAX reference with the same bf16 quantization points as the kernel."""
    q = lambda a: a.astype(jnp.bfloat16).astype(jnp.float32)
    h1 = jnp.maximum(q(x) @ q(p["w1"]) + p["b1"], 0.0)
    h2 = jnp.maximum(q(h1) @ q(p["w2"]) + p["b2"], 0.0)
    return q(h2) @ q(p["w3"]) + p["b3"]


if __name__ == "__main__":
    num_inputs, num_outputs, batch = 100, 100, 8

    key = jax.random.PRNGKey(0)
    k_params, k_x = jax.random.split(key)
    params = init_params(k_params, num_inputs=num_inputs, num_outputs=num_outputs)
    x = jax.random.normal(k_x, (batch, num_inputs), jnp.float32)

    # Pad/cast the weights once (hoisted out of the per-call path).
    prepped, meta = prepare_params(params)

    out = fibonacci_mlp_forward(x, prepped,
                                num_inputs=meta["num_inputs"],
                                num_outputs=meta["num_outputs"])
    out = jax.block_until_ready(out)

    ref = jax.block_until_ready(_reference_bf16(x, params))
    assert out.shape == (batch, num_outputs)
    assert out.dtype == jnp.float32
    assert jnp.allclose(out, ref, atol=1e-2, rtol=1e-2)

    print("KERNEL_OK")
</pallas_src>

<mosaic_0001>
module attributes {stable_mosaic.version = 11 : i64} {
  func.func @_mlp_kernel(%arg0: i32, %arg1: memref<16x128xbf16, #tpu.memory_space<vmem>>, %arg2: memref<128x1024xbf16, #tpu.memory_space<vmem>>, %arg3: memref<1x1024xf32, #tpu.memory_space<vmem>>, %arg4: memref<1024x1024xbf16, #tpu.memory_space<vmem>>, %arg5: memref<1x1024xf32, #tpu.memory_space<vmem>>, %arg6: memref<1024x128xbf16, #tpu.memory_space<vmem>>, %arg7: memref<1x128xf32, #tpu.memory_space<vmem>>, %arg8: memref<16x128xf32, #tpu.memory_space<vmem>>) attributes {dimension_semantics = [#tpu.dimension_semantics<parallel>], iteration_bounds = array<i64: 1>, scalar_prefetch = 0 : i64, scratch_operands = 0 : i64, tpu.core_type = #tpu.core_type<tc>, window_params = [{transform_indices = @transform_0, window_bounds = array<i64: 16, 128>}, {pipeline_mode = #tpu.pipeline_mode<synchronous>, transform_indices = @transform_1, window_bounds = array<i64: 128, 1024>}, {pipeline_mode = #tpu.pipeline_mode<synchronous>, transform_indices = @transform_2, window_bounds = array<i64: 1, 1024>}, {pipeline_mode = #tpu.pipeline_mode<synchronous>, transform_indices = @transform_3, window_bounds = array<i64: 1024, 1024>}, {pipeline_mode = #tpu.pipeline_mode<synchronous>, transform_indices = @transform_4, window_bounds = array<i64: 1, 1024>}, {pipeline_mode = #tpu.pipeline_mode<synchronous>, transform_indices = @transform_5, window_bounds = array<i64: 1024, 128>}, {pipeline_mode = #tpu.pipeline_mode<synchronous>, transform_indices = @transform_6, window_bounds = array<i64: 1, 128>}, {transform_indices = @transform_7, window_bounds = array<i64: 16, 128>}]} {
    %c0 = arith.constant 0 : index
    %c0_0 = arith.constant 0 : index
    %0 = vector.load %arg1[%c0, %c0_0] : memref<16x128xbf16, #tpu.memory_space<vmem>>, vector<16x128xbf16>
    %c0_1 = arith.constant 0 : index
    %c0_2 = arith.constant 0 : index
    %1 = vector.load %arg2[%c0_1, %c0_2] : memref<128x1024xbf16, #tpu.memory_space<vmem>>, vector<128x1024xbf16>
    %cst = arith.constant dense<0.000000e+00> : vector<16x1024xf32>
    %2 = tpu.matmul %0, %1, %cst {dimension_numbers = #tpu.dot_dimension_numbers<[1], [0], [0], [1], [0, 0, 1, 1], [], []>} : vector<16x128xbf16>, vector<128x1024xbf16>, vector<16x1024xf32> -> vector<16x1024xf32>
    %c0_3 = arith.constant 0 : index
    %c0_4 = arith.constant 0 : index
    %3 = vector.load %arg3[%c0_3, %c0_4] : memref<1x1024xf32, #tpu.memory_space<vmem>>, vector<1x1024xf32>
    %4 = vector.broadcast %3 : vector<1x1024xf32> to vector<16x1024xf32>
    %5 = arith.addf %2, %4 : vector<16x1024xf32>
    %cst_5 = arith.constant 0.000000e+00 : f32
    %6 = vector.broadcast %cst_5 : f32 to vector<16x1024xf32>
    %7 = arith.maximumf %5, %6 : vector<16x1024xf32>
    %8 = arith.truncf %7 : vector<16x1024xf32> to vector<16x1024xbf16>
    %c0_6 = arith.constant 0 : index
    %c0_7 = arith.constant 0 : index
    %9 = vector.load %arg4[%c0_6, %c0_7] : memref<1024x1024xbf16, #tpu.memory_space<vmem>>, vector<1024x1024xbf16>
    %cst_8 = arith.constant dense<0.000000e+00> : vector<16x1024xf32>
    %10 = tpu.matmul %8, %9, %cst_8 {dimension_numbers = #tpu.dot_dimension_numbers<[1], [0], [0], [1], [0, 0, 1, 1], [], []>} : vector<16x1024xbf16>, vector<1024x1024xbf16>, vector<16x1024xf32> -> vector<16x1024xf32>
    %c0_9 = arith.constant 0 : index
    %c0_10 = arith.constant 0 : index
    %11 = vector.load %arg5[%c0_9, %c0_10] : memref<1x1024xf32, #tpu.memory_space<vmem>>, vector<1x1024xf32>
    %12 = vector.broadcast %11 : vector<1x1024xf32> to vector<16x1024xf32>
    %13 = arith.addf %10, %12 : vector<16x1024xf32>
    %cst_11 = arith.constant 0.000000e+00 : f32
    %14 = vector.broadcast %cst_11 : f32 to vector<16x1024xf32>
    %15 = arith.maximumf %13, %14 : vector<16x1024xf32>
    %16 = arith.truncf %15 : vector<16x1024xf32> to vector<16x1024xbf16>
    %c0_12 = arith.constant 0 : index
    %c0_13 = arith.constant 0 : index
    %17 = vector.load %arg6[%c0_12, %c0_13] : memref<1024x128xbf16, #tpu.memory_space<vmem>>, vector<1024x128xbf16>
    %cst_14 = arith.constant dense<0.000000e+00> : vector<16x128xf32>
    %18 = tpu.matmul %16, %17, %cst_14 {dimension_numbers = #tpu.dot_dimension_numbers<[1], [0], [0], [1], [0, 0, 1, 1], [], []>} : vector<16x1024xbf16>, vector<1024x128xbf16>, vector<16x128xf32> -> vector<16x128xf32>
    %c0_15 = arith.constant 0 : index
    %c0_16 = arith.constant 0 : index
    %19 = vector.load %arg7[%c0_15, %c0_16] : memref<1x128xf32, #tpu.memory_space<vmem>>, vector<1x128xf32>
    %20 = vector.broadcast %19 : vector<1x128xf32> to vector<16x128xf32>
    %21 = arith.addf %18, %20 : vector<16x128xf32>
    %c0_17 = arith.constant 0 : index
    %c0_18 = arith.constant 0 : index
    %22 = vector.load %arg8[%c0_17, %c0_18] : memref<16x128xf32, #tpu.memory_space<vmem>>, vector<16x128xf32>
    tpu.vector_store %arg8[%c0_17, %c0_18], %21 {strides = array<i32>} : memref<16x128xf32, #tpu.memory_space<vmem>>, vector<16x128xf32>,
    return
  }
  func.func @transform_0(%arg0: i32) -> (i32, i32) {
    %c0_i32 = arith.constant 0 : i32
    %c0_i32_0 = arith.constant 0 : i32
    return %arg0, %c0_i32 : i32, i32
  }
  func.func @transform_1(%arg0: i32) -> (i32, i32) {
    %c0_i32 = arith.constant 0 : i32
    %c0_i32_0 = arith.constant 0 : i32
    %c0_i32_1 = arith.constant 0 : i32
    return %c0_i32, %c0_i32_0 : i32, i32
  }
  func.func @transform_2(%arg0: i32) -> (i32, i32) {
    %c0_i32 = arith.constant 0 : i32
    %c0_i32_0 = arith.constant 0 : i32
    %c0_i32_1 = arith.constant 0 : i32
    return %c0_i32, %c0_i32_0 : i32, i32
  }
  func.func @transform_3(%arg0: i32) -> (i32, i32) {
    %c0_i32 = arith.constant 0 : i32
    %c0_i32_0 = arith.constant 0 : i32
    %c0_i32_1 = arith.constant 0 : i32
    return %c0_i32, %c0_i32_0 : i32, i32
  }
  func.func @transform_4(%arg0: i32) -> (i32, i32) {
    %c0_i32 = arith.constant 0 : i32
    %c0_i32_0 = arith.constant 0 : i32
    %c0_i32_1 = arith.constant 0 : i32
    return %c0_i32, %c0_i32_0 : i32, i32
  }
  func.func @transform_5(%arg0: i32) -> (i32, i32) {
    %c0_i32 = arith.constant 0 : i32
    %c0_i32_0 = arith.constant 0 : i32
    %c0_i32_1 = arith.constant 0 : i32
    return %c0_i32, %c0_i32_0 : i32, i32
  }
  func.func @transform_6(%arg0: i32) -> (i32, i32) {
    %c0_i32 = arith.constant 0 : i32
    %c0_i32_0 = arith.constant 0 : i32
    %c0_i32_1 = arith.constant 0 : i32
    return %c0_i32, %c0_i32_0 : i32, i32
  }
  func.func @transform_7(%arg0: i32) -> (i32, i32) {
    %c0_i32 = arith.constant 0 : i32
    %c0_i32_0 = arith.constant 0 : i32
    return %arg0, %c0_i32 : i32, i32
  }
}

</mosaic_0001>

<llo_original>
// kernel: fibonacci_mlp_forward.1
$region0: #{fibonacci_mlp_forward.1}
  #allocation0 [shape = 'u32[]', space=smem, size = 0x4, offset = 0x4, fixed_abs, tag = 'smem constant byte address 0x4 - core index']
  #allocation1 [shape = 'u32[144,128]{1,0:T(1,128)}', space=vmem, size = 0x12000, scoped, tag = 'internal scratch']
  %s0 = inlined_call_operand.vmem [shape: bf16[16,128], index: 0, kind: input, shape index: {}]
  %s1 = inlined_call_operand.hbm [shape: bf16[128,1024], index: 1, kind: input, shape index: {}]
  %s2 = inlined_call_operand.hbm [shape: f32[1,1024], index: 2, kind: input, shape index: {}]
  %s3 = inlined_call_operand.hbm [shape: bf16[1024,1024], index: 3, kind: input, shape index: {}]
  %s4 = inlined_call_operand.hbm [shape: f32[1,1024], index: 4, kind: input, shape index: {}]
  %s5 = inlined_call_operand.hbm [shape: bf16[1024,128], index: 5, kind: input, shape index: {}]
  %s6 = inlined_call_operand.hbm [shape: f32[1,128], index: 6, kind: input, shape index: {}]
  %s7 = inlined_call_operand.vmem [shape: f32[16,128], index: 7, kind: output, shape index: {}]
  %s8 = sld [smem:[#allocation0]]
  $region62: #{fibonacci_mlp_forward.1} parent=0
    _
  %s10 = ssub.s32 1, %s8
  %s11 = scalar_select 0, %s10, %s8
  $region1: #{fibonacci_mlp_forward.1} parent=0
    #allocation2 [shape = 'u8[262144]{0}', space=vmem, size = 0x40000, scoped, tag = 'input window, operand 1, single buffered']
    #allocation3 [shape = 's32[1]{0}', space=sflag, size = 0x4, scoped, tag = 'scoped memory for fibonacci_mlp_forward.1']
    #allocation4 [shape = 'u8[4096]{0}', space=vmem, size = 0x1000, scoped, tag = 'input window, operand 2, single buffered']
    #allocation5 [shape = 's32[1]{0}', space=sflag, size = 0x4, scoped, tag = 'scoped memory for fibonacci_mlp_forward.1']
    #allocation6 [shape = 'u8[2097152]{0}', space=vmem, size = 0x200000, scoped, tag = 'input window, operand 3, single buffered']
    #allocation7 [shape = 'u8[4096]{0}', space=vmem, size = 0x1000, scoped, tag = 'input window, operand 4, single buffered']
    #allocation8 [shape = 's32[1]{0}', space=sflag, size = 0x4, scoped, tag = 'scoped memory for fibonacci_mlp_forward.1']
    #allocation9 [shape = 'u8[262144]{0}', space=vmem, size = 0x40000, scoped, tag = 'input window, operand 5, single buffered']
    #allocation10 [shape = 'u8[512]{0}', space=vmem, size = 0x400, scoped, tag = 'input window, operand 6, single buffered']
    #allocation11 [shape = 's32[1]{0}', space=sflag, size = 0x4, scoped, tag = 'scoped memory for fibonacci_mlp_forward.1']
    %12 = vsyncpa [#allocation3], 0
    %13 = vsyncpa [#allocation5], 0
    %14 = vsyncpa [#allocation8], 0
    %15 = vsyncpa [#allocation11], 0
    // Predicated region
    $region2: #{fibonacci_mlp_forward.1} parent=1 // pred_check
      _
    $region3: #{fibonacci_mlp_forward.1} parent=1 // pred_check_branch
      %17 = sbr.rel (0) target = $region5
    $region4: #{fibonacci_mlp_forward.1} parent=1 // pred_region
      _
    $region5: #{fibonacci_mlp_forward.1} parent=1 // pred_fallthru
      _
    // Predicated region
    $region6: #{fibonacci_mlp_forward.1} parent=1 // pred_check
      _
    $region7: #{fibonacci_mlp_forward.1} parent=1 // pred_check_branch
      %19 = sbr.rel (0) target = $region9
    $region8: #{fibonacci_mlp_forward.1} parent=1 // pred_region
      %s21 = ssub.s32 8192, 8192
      %22 = vsyncadd [#allocation3], %s21
      %s23 = sshll.u32 [#allocation2], 4
      %s24 = int_to_ptr.vmem [resolvable:$true] %s23
      %29 = dma.hbm_to_vmem [thread:$0]  %s1, 8192, %s24, [#allocation3], 512, 512, 32
    $region9: #{fibonacci_mlp_forward.1} parent=1 // pred_fallthru
      _
    // Predicated region
    $region10: #{fibonacci_mlp_forward.1} parent=1 // pred_check
      _
    $region11: #{fibonacci_mlp_forward.1} parent=1 // pred_check_branch
      %31 = sbr.rel (0) target = $region13
    $region12: #{fibonacci_mlp_forward.1} parent=1 // pred_region
      %s33 = ssub.s32 128, 128
      %34 = vsyncadd [#allocation5], %s33
      %s36 = sshll.u32 [#allocation4], 4
      %s37 = int_to_ptr.vmem [resolvable:$true] %s36
      %39 = dma.hbm_to_vmem [thread:$0]  %s2, 128, %s37, [#allocation5]
    $region13: #{fibonacci_mlp_forward.1} parent=1 // pred_fallthru
      _
    // Predicated region
    $region14: #{fibonacci_mlp_forward.1} parent=1 // pred_check
      _
    $region15: #{fibonacci_mlp_forward.1} parent=1 // pred_check_branch
      %41 = sbr.rel (0) target = $region17
    $region16: #{fibonacci_mlp_forward.1} parent=1 // pred_region
      %s43 = ssub.s32 65536, 65536
      %44 = vsyncadd [#allocation5], %s43
      %s45 = sshll.u32 [#allocation6], 4
      %s46 = int_to_ptr.vmem [resolvable:$true] %s45
      %51 = dma.hbm_to_vmem [thread:$0]  %s3, 65536, %s46, [#allocation5], 512, 512, 32
    $region17: #{fibonacci_mlp_forward.1} parent=1 // pred_fallthru
      _
    // Predicated region
    $region18: #{fibonacci_mlp_forward.1} parent=1 // pred_check
      _
    $region19: #{fibonacci_mlp_forward.1} parent=1 // pred_check_branch
      %53 = sbr.rel (0) target = $region21
    $region20: #{fibonacci_mlp_forward.1} parent=1 // pred_region
      %s55 = ssub.s32 128, 128
      %56 = vsyncadd [#allocation8], %s55
      %s58 = sshll.u32 [#allocation7], 4
      %s59 = int_to_ptr.vmem [resolvable:$true] %s58
      %61 = dma.hbm_to_vmem [thread:$0]  %s4, 128, %s59, [#allocation8]
    $region21: #{fibonacci_mlp_forward.1} parent=1 // pred_fallthru
      _
    // Predicated region
    $region22: #{fibonacci_mlp_forward.1} parent=1 // pred_check
      _
    $region23: #{fibonacci_mlp_forward.1} parent=1 // pred_check_branch
      %63 = sbr.rel (0) target = $region25
    $region24: #{fibonacci_mlp_forward.1} parent=1 // pred_region
      %s65 = ssub.s32 8192, 8192
      %66 = vsyncadd [#allocation8], %s65
      %s67 = sshll.u32 [#allocation9], 4
      %s68 = int_to_ptr.vmem [resolvable:$true] %s67
      %73 = dma.hbm_to_vmem [thread:$0]  %s5, 8192, %s68, [#allocation8], 64, 64, 4
    $region25: #{fibonacci_mlp_forward.1} parent=1 // pred_fallthru
      _
    // Predicated region
    $region26: #{fibonacci_mlp_forward.1} parent=1 // pred_check
      _
    $region27: #{fibonacci_mlp_forward.1} parent=1 // pred_check_branch
      %75 = sbr.rel (0) target = $region29
    $region28: #{fibonacci_mlp_forward.1} parent=1 // pred_region
      %s77 = ssub.s32 16, 16
      %78 = vsyncadd [#allocation11], %s77
      %s80 = sshll.u32 [#allocation10], 4
      %s81 = int_to_ptr.vmem [resolvable:$true] %s80
      %83 = dma.hbm_to_vmem [thread:$0]  %s6, 16, %s81, [#allocation11]
    $region29: #{fibonacci_mlp_forward.1} parent=1 // pred_fallthru
      _
    // Predicated region
    $region30: #{fibonacci_mlp_forward.1} parent=1 // pred_check
      _
    $region31: #{fibonacci_mlp_forward.1} parent=1 // pred_check_branch
      %85 = sbr.rel (0) target = $region33
    $region32: #{fibonacci_mlp_forward.1} parent=1 // pred_region
      %86 = dma.done [#allocation3], 8192
    $region33: #{fibonacci_mlp_forward.1} parent=1 // pred_fallthru
      _
    // Predicated region
    $region34: #{fibonacci_mlp_forward.1} parent=1 // pred_check
      _
    $region35: #{fibonacci_mlp_forward.1} parent=1 // pred_check_branch
      %88 = sbr.rel (0) target = $region37
    $region36: #{fibonacci_mlp_forward.1} parent=1 // pred_region
      %89 = dma.done [#allocation5], 128
    $region37: #{fibonacci_mlp_forward.1} parent=1 // pred_fallthru
      _
    // Predicated region
    $region38: #{fibonacci_mlp_forward.1} parent=1 // pred_check
      _
    $region39: #{fibonacci_mlp_forward.1} parent=1 // pred_check_branch
      %91 = sbr.rel (0) target = $region41
    $region40: #{fibonacci_mlp_forward.1} parent=1 // pred_region
      %92 = dma.done [#allocation5], 65536
    $region41: #{fibonacci_mlp_forward.1} parent=1 // pred_fallthru
      _
    // Predicated region
    $region42: #{fibonacci_mlp_forward.1} parent=1 // pred_check
      _
    $region43: #{fibonacci_mlp_forward.1} parent=1 // pred_check_branch
      %94 = sbr.rel (0) target = $region45
    $region44: #{fibonacci_mlp_forward.1} parent=1 // pred_region
      %95 = dma.done [#allocation8], 128
    $region45: #{fibonacci_mlp_forward.1} parent=1 // pred_fallthru
      _
    // Predicated region
    $region46: #{fibonacci_mlp_forward.1} parent=1 // pred_check
      _
    $region47: #{fibonacci_mlp_forward.1} parent=1 // pred_check_branch
      %97 = sbr.rel (0) target = $region49
    $region48: #{fibonacci_mlp_forward.1} parent=1 // pred_region
      %98 = dma.done [#allocation8], 8192
    $region49: #{fibonacci_mlp_forward.1} parent=1 // pred_fallthru
      _
    // Predicated region
    $region50: #{fibonacci_mlp_forward.1} parent=1 // pred_check
      _
    $region51: #{fibonacci_mlp_forward.1} parent=1 // pred_check_branch
      %100 = sbr.rel (0) target = $region53
    $region52: #{fibonacci_mlp_forward.1} parent=1 // pred_region
      %101 = dma.done [#allocation11], 16
    $region53: #{fibonacci_mlp_forward.1} parent=1 // pred_fallthru
      _
    %v103 = vld [vmem:[%s0] sm:$0xf]
    %v104 = vld [vmem:[%s0 + $0x4] sm:$0xf]
    %v105 = vld [vmem:[#allocation2] sm:$0xff]
    %v106 = vld [vmem:[#allocation2 + $0x8] sm:$0xff]
    %v107 = vld [vmem:[#allocation2 + $0x10] sm:$0xff]
    %v108 = vld [vmem:[#allocation2 + $0x18] sm:$0xff]
    %v109 = vld [vmem:[#allocation2 + $0x20] sm:$0xff]
    %v110 = vld [vmem:[#allocation2 + $0x28] sm:$0xff]
    %v111 = vld [vmem:[#allocation2 + $0x30] sm:$0xff]
    %v112 = vld [vmem:[#allocation2 + $0x38] sm:$0xff]
    %v113 = vld [vmem:[#allocation2 + $0x40] sm:$0xff]
    %v114 = vld [vmem:[#allocation2 + $0x48] sm:$0xff]
    %v115 = vld [vmem:[#allocation2 + $0x50] sm:$0xff]
    %v116 = vld [vmem:[#allocation2 + $0x58] sm:$0xff]
    %v117 = vld [vmem:[#allocation2 + $0x60] sm:$0xff]
    %v118 = vld [vmem:[#allocation2 + $0x68] sm:$0xff]
    %v119 = vld [vmem:[#allocation2 + $0x70] sm:$0xff]
    %v120 = vld [vmem:[#allocation2 + $0x78] sm:$0xff]
    %v121 = vld [vmem:[#allocation2 + $0x80] sm:$0xff]
    %v122 = vld [vmem:[#allocation2 + $0x88] sm:$0xff]
    %v123 = vld [vmem:[#allocation2 + $0x90] sm:$0xff]
    %v124 = vld [vmem:[#allocation2 + $0x98] sm:$0xff]
    %v125 = vld [vmem:[#allocation2 + $0xa0] sm:$0xff]
    %v126 = vld [vmem:[#allocation2 + $0xa8] sm:$0xff]
    %v127 = vld [vmem:[#allocation2 + $0xb0] sm:$0xff]
    %v128 = vld [vmem:[#allocation2 + $0xb8] sm:$0xff]
    %v129 = vld [vmem:[#allocation2 + $0xc0] sm:$0xff]
    %v130 = vld [vmem:[#allocation2 + $0xc8] sm:$0xff]
    %v131 = vld [vmem:[#allocation2 + $0xd0] sm:$0xff]
    %v132 = vld [vmem:[#allocation2 + $0xd8] sm:$0xff]
    %v133 = vld [vmem:[#allocation2 + $0xe0] sm:$0xff]
    %v134 = vld [vmem:[#allocation2 + $0xe8] sm:$0xff]
    %v135 = vld [vmem:[#allocation2 + $0xf0] sm:$0xff]
    %v136 = vld [vmem:[#allocation2 + $0xf8] sm:$0xff]
    %v137 = vld [vmem:[#allocation2 + $0x100] sm:$0xff]
    %v138 = vld [vmem:[#allocation2 + $0x108] sm:$0xff]
    %v139 = vld [vmem:[#allocation2 + $0x110] sm:$0xff]
    %v140 = vld [vmem:[#allocation2 + $0x118] sm:$0xff]
    %v141 = vld [vmem:[#allocation2 + $0x120] sm:$0xff]
    %v142 = vld [vmem:[#allocation2 + $0x128] sm:$0xff]
    %v143 = vld [vmem:[#allocation2 + $0x130] sm:$0xff]
    %v144 = vld [vmem:[#allocation2 + $0x138] sm:$0xff]
    %v145 = vld [vmem:[#allocation2 + $0x140] sm:$0xff]
    %v146 = vld [vmem:[#allocation2 + $0x148] sm:$0xff]
    %v147 = vld [vmem:[#allocation2 + $0x150] sm:$0xff]
    %v148 = vld [vmem:[#allocation2 + $0x158] sm:$0xff]
    %v149 = vld [vmem:[#allocation2 + $0x160] sm:$0xff]
    %v150 = vld [vmem:[#allocation2 + $0x168] sm:$0xff]
    %v151 = vld [vmem:[#allocation2 + $0x170] sm:$0xff]
    %v152 = vld [vmem:[#allocation2 + $0x178] sm:$0xff]
    %v153 = vld [vmem:[#allocation2 + $0x180] sm:$0xff]
    %v154 = vld [vmem:[#allocation2 + $0x188] sm:$0xff]
    %v155 = vld [vmem:[#allocation2 + $0x190] sm:$0xff]
    %v156 = vld [vmem:[#allocation2 + $0x198] sm:$0xff]
    %v157 = vld [vmem:[#allocation2 + $0x1a0] sm:$0xff]
    %v158 = vld [vmem:[#allocation2 + $0x1a8] sm:$0xff]
    %v159 = vld [vmem:[#allocation2 + $0x1b0] sm:$0xff]
    %v160 = vld [vmem:[#allocation2 + $0x1b8] sm:$0xff]
    %v161 = vld [vmem:[#allocation2 + $0x1c0] sm:$0xff]
    %v162 = vld [vmem:[#allocation2 + $0x1c8] sm:$0xff]
    %v163 = vld [vmem:[#allocation2 + $0x1d0] sm:$0xff]
    %v164 = vld [vmem:[#allocation2 + $0x1d8] sm:$0xff]
    %v165 = vld [vmem:[#allocation2 + $0x1e0] sm:$0xff]
    %v166 = vld [vmem:[#allocation2 + $0x1e8] sm:$0xff]
    %v167 = vld [vmem:[#allocation2 + $0x1f0] sm:$0xff]
    %v168 = vld [vmem:[#allocation2 + $0x1f8] sm:$0xff]
    %v169 = vld [vmem:[#allocation4] sm:$0xff]
    %v171 = vlaneseq
    %v172 = vshrl.u32 %v171, 7
    %v173 = vsub.s32 0, %v172
    %v174 = vrot.slane %v169, %v173
    %v175 = vlaneseq
    %v176 = vshrl.u32 %v175, 7
    %v177 = vsub.s32 1, %v176
    %v178 = vrot.slane %v169, %v177
    %v179 = vlaneseq
    %v180 = vshrl.u32 %v179, 7
    %v181 = vsub.s32 2, %v180
    %v182 = vrot.slane %v169, %v181
    %v183 = vlaneseq
    %v184 = vshrl.u32 %v183, 7
    %v185 = vsub.s32 3, %v184
    %v186 = vrot.slane %v169, %v185
    %v187 = vlaneseq
    %v188 = vshrl.u32 %v187, 7
    %v189 = vsub.s32 4, %v188
    %v190 = vrot.slane %v169, %v189
    %v191 = vlaneseq
    %v192 = vshrl.u32 %v191, 7
    %v193 = vsub.s32 5, %v192
    %v194 = vrot.slane %v169, %v193
    %v195 = vlaneseq
    %v196 = vshrl.u32 %v195, 7
    %v197 = vsub.s32 6, %v196
    %v198 = vrot.slane %v169, %v197
    %v199 = vlaneseq
    %v200 = vshrl.u32 %v199, 7
    %v201 = vsub.s32 7, %v200
    %v202 = vrot.slane %v169, %v201
    %v213 = vunpack.c.l.b16 %v103
    %v214 = vunpack.c.l.b16 %v104
    %v215 = vpack.c.b16 %v214, %v213
    %v281 = vunpack.c.l.b16 %v105
    %v282 = vunpack.c.h.b16 %v105
    %v283 = vunpack.c.l.b16 %v106
    %v284 = vunpack.c.h.b16 %v106
    %v285 = vunpack.c.l.b16 %v107
    %v286 = vunpack.c.h.b16 %v107
    %v287 = vunpack.c.l.b16 %v108
    %v288 = vunpack.c.h.b16 %v108
    %v289 = vunpack.c.l.b16 %v109
    %v290 = vunpack.c.h.b16 %v109
    %v291 = vunpack.c.l.b16 %v110
    %v292 = vunpack.c.h.b16 %v110
    %v293 = vunpack.c.l.b16 %v111
    %v294 = vunpack.c.h.b16 %v111
    %v295 = vunpack.c.l.b16 %v112
    %v296 = vunpack.c.h.b16 %v112
    %v297 = vunpack.c.l.b16 %v113
    %v298 = vunpack.c.h.b16 %v113
    %v299 = vunpack.c.l.b16 %v114
    %v300 = vunpack.c.h.b16 %v114
    %v301 = vunpack.c.l.b16 %v115
    %v302 = vunpack.c.h.b16 %v115
    %v303 = vunpack.c.l.b16 %v116
    %v304 = vunpack.c.h.b16 %v116
    %v305 = vunpack.c.l.b16 %v117
    %v306 = vunpack.c.h.b16 %v117
    %v307 = vunpack.c.l.b16 %v118
    %v308 = vunpack.c.h.b16 %v118
    %v309 = vunpack.c.l.b16 %v119
    %v310 = vunpack.c.h.b16 %v119
    %v311 = vunpack.c.l.b16 %v120
    %v312 = vunpack.c.h.b16 %v120
    %v313 = vunpack.c.l.b16 %v121
    %v314 = vunpack.c.h.b16 %v121
    %v315 = vunpack.c.l.b16 %v122
    %v316 = vunpack.c.h.b16 %v122
    %v317 = vunpack.c.l.b16 %v123
    %v318 = vunpack.c.h.b16 %v123
    %v319 = vunpack.c.l.b16 %v124
    %v320 = vunpack.c.h.b16 %v124
    %v321 = vunpack.c.l.b16 %v125
    %v322 = vunpack.c.h.b16 %v125
    %v323 = vunpack.c.l.b16 %v126
    %v324 = vunpack.c.h.b16 %v126
    %v325 = vunpack.c.l.b16 %v127
    %v326 = vunpack.c.h.b16 %v127
    %v327 = vunpack.c.l.b16 %v128
    %v328 = vunpack.c.h.b16 %v128
    %v329 = vunpack.c.l.b16 %v129
    %v330 = vunpack.c.h.b16 %v129
    %v331 = vunpack.c.l.b16 %v130
    %v332 = vunpack.c.h.b16 %v130
    %v333 = vunpack.c.l.b16 %v131
    %v334 = vunpack.c.h.b16 %v131
    %v335 = vunpack.c.l.b16 %v132
    %v336 = vunpack.c.h.b16 %v132
    %v337 = vunpack.c.l.b16 %v133
    %v338 = vunpack.c.h.b16 %v133
    %v339 = vunpack.c.l.b16 %v134
    %v340 = vunpack.c.h.b16 %v134
    %v341 = vunpack.c.l.b16 %v135
    %v342 = vunpack.c.h.b16 %v135
    %v343 = vunpack.c.l.b16 %v136
    %v344 = vunpack.c.h.b16 %v136
    %v345 = vunpack.c.l.b16 %v137
    %v346 = vunpack.c.h.b16 %v137
    %v347 = vunpack.c.l.b16 %v138
    %v348 = vunpack.c.h.b16 %v138
    %v349 = vunpack.c.l.b16 %v139
    %v350 = vunpack.c.h.b16 %v139
    %v351 = vunpack.c.l.b16 %v140
    %v352 = vunpack.c.h.b16 %v140
    %v353 = vunpack.c.l.b16 %v141
    %v354 = vunpack.c.h.b16 %v141
    %v355 = vunpack.c.l.b16 %v142
    %v356 = vunpack.c.h.b16 %v142
    %v357 = vunpack.c.l.b16 %v143
    %v358 = vunpack.c.h.b16 %v143
    %v359 = vunpack.c.l.b16 %v144
    %v360 = vunpack.c.h.b16 %v144
    %v361 = vunpack.c.l.b16 %v145
    %v362 = vunpack.c.h.b16 %v145
    %v363 = vunpack.c.l.b16 %v146
    %v364 = vunpack.c.h.b16 %v146
    %v365 = vunpack.c.l.b16 %v147
    %v366 = vunpack.c.h.b16 %v147
    %v367 = vunpack.c.l.b16 %v148
    %v368 = vunpack.c.h.b16 %v148
    %v369 = vunpack.c.l.b16 %v149
    %v370 = vunpack.c.h.b16 %v149
    %v371 = vunpack.c.l.b16 %v150
    %v372 = vunpack.c.h.b16 %v150
    %v373 = vunpack.c.l.b16 %v151
    %v374 = vunpack.c.h.b16 %v151
    %v375 = vunpack.c.l.b16 %v152
    %v376 = vunpack.c.h.b16 %v152
    %v377 = vunpack.c.l.b16 %v153
    %v378 = vunpack.c.h.b16 %v153
    %v379 = vunpack.c.l.b16 %v154
    %v380 = vunpack.c.h.b16 %v154
    %v381 = vunpack.c.l.b16 %v155
    %v382 = vunpack.c.h.b16 %v155
    %v383 = vunpack.c.l.b16 %v156
    %v384 = vunpack.c.h.b16 %v156
    %v385 = vunpack.c.l.b16 %v157
    %v386 = vunpack.c.h.b16 %v157
    %v387 = vunpack.c.l.b16 %v158
    %v388 = vunpack.c.h.b16 %v158
    %v389 = vunpack.c.l.b16 %v159
    %v390 = vunpack.c.h.b16 %v159
    %v391 = vunpack.c.l.b16 %v160
    %v392 = vunpack.c.h.b16 %v160
    %v393 = vunpack.c.l.b16 %v161
    %v394 = vunpack.c.h.b16 %v161
    %v395 = vunpack.c.l.b16 %v162
    %v396 = vunpack.c.h.b16 %v162
    %v397 = vunpack.c.l.b16 %v163
    %v398 = vunpack.c.h.b16 %v163
    %v399 = vunpack.c.l.b16 %v164
    %v400 = vunpack.c.h.b16 %v164
    %v401 = vunpack.c.l.b16 %v165
    %v402 = vunpack.c.h.b16 %v165
    %v403 = vunpack.c.l.b16 %v166
    %v404 = vunpack.c.h.b16 %v166
    %v405 = vunpack.c.l.b16 %v167
    %v406 = vunpack.c.h.b16 %v167
    %v407 = vunpack.c.l.b16 %v168
    %v408 = vunpack.c.h.b16 %v168
    %v409 = vpack.c.b16 %v289, %v281
    %v410 = vpack.c.b16 %v290, %v282
    %v411 = vpack.c.b16 %v291, %v283
    %v412 = vpack.c.b16 %v292, %v284
    %v413 = vpack.c.b16 %v293, %v285
    %v414 = vpack.c.b16 %v294, %v286
    %v415 = vpack.c.b16 %v295, %v287
    %v416 = vpack.c.b16 %v296, %v288
    %v417 = vpack.c.b16 %v305, %v297
    %v418 = vpack.c.b16 %v306, %v298
    %v419 = vpack.c.b16 %v307, %v299
    %v420 = vpack.c.b16 %v308, %v300
    %v421 = vpack.c.b16 %v309, %v301
    %v422 = vpack.c.b16 %v310, %v302
    %v423 = vpack.c.b16 %v311, %v303
    %v424 = vpack.c.b16 %v312, %v304
    %v425 = vpack.c.b16 %v321, %v313
    %v426 = vpack.c.b16 %v322, %v314
    %v427 = vpack.c.b16 %v323, %v315
    %v428 = vpack.c.b16 %v324, %v316
    %v429 = vpack.c.b16 %v325, %v317
    %v430 = vpack.c.b16 %v326, %v318
    %v431 = vpack.c.b16 %v327, %v319
    %v432 = vpack.c.b16 %v328, %v320
    %v433 = vpack.c.b16 %v337, %v329
    %v434 = vpack.c.b16 %v338, %v330
    %v435 = vpack.c.b16 %v339, %v331
    %v436 = vpack.c.b16 %v340, %v332
    %v437 = vpack.c.b16 %v341, %v333
    %v438 = vpack.c.b16 %v342, %v334
    %v439 = vpack.c.b16 %v343, %v335
    %v440 = vpack.c.b16 %v344, %v336
    %v441 = vpack.c.b16 %v353, %v345
    %v442 = vpack.c.b16 %v354, %v346
    %v443 = vpack.c.b16 %v355, %v347
    %v444 = vpack.c.b16 %v356, %v348
    %v445 = vpack.c.b16 %v357, %v349
    %v446 = vpack.c.b16 %v358, %v350
    %v447 = vpack.c.b16 %v359, %v351
    %v448 = vpack.c.b16 %v360, %v352
    %v449 = vpack.c.b16 %v369, %v361
    %v450 = vpack.c.b16 %v370, %v362
    %v451 = vpack.c.b16 %v371, %v363
    %v452 = vpack.c.b16 %v372, %v364
    %v453 = vpack.c.b16 %v373, %v365
    %v454 = vpack.c.b16 %v374, %v366
    %v455 = vpack.c.b16 %v375, %v367
    %v456 = vpack.c.b16 %v376, %v368
    %v457 = vpack.c.b16 %v385, %v377
    %v458 = vpack.c.b16 %v386, %v378
    %v459 = vpack.c.b16 %v387, %v379
    %v460 = vpack.c.b16 %v388, %v380
    %v461 = vpack.c.b16 %v389, %v381
    %v462 = vpack.c.b16 %v390, %v382
    %v463 = vpack.c.b16 %v391, %v383
    %v464 = vpack.c.b16 %v392, %v384
    %v465 = vpack.c.b16 %v401, %v393
    %v466 = vpack.c.b16 %v402, %v394
    %v467 = vpack.c.b16 %v403, %v395
    %v468 = vpack.c.b16 %v404, %v396
    %v469 = vpack.c.b16 %v405, %v397
    %v470 = vpack.c.b16 %v406, %v398
    %v471 = vpack.c.b16 %v407, %v399
    %v472 = vpack.c.b16 %v408, %v400
    %537 = vmatprep.subr.bf16.mxu0 %v410
    %538 = vmatpush1.bf16.msra.mxu0 %v409
    %539 = vmatprep.subr.bf16.mxu0 %v418
    %540 = vmatpush1.bf16.msra.mxu0 %v417
    %541 = vmatprep.subr.bf16.mxu0 %v426
    %542 = vmatpush1.bf16.msra.mxu0 %v425
    %543 = vmatprep.subr.bf16.mxu0 %v434
    %544 = vmatpush1.bf16.msra.mxu0 %v433
    %545 = vmatprep.subr.bf16.mxu0 %v442
    %546 = vmatpush1.bf16.msra.mxu0 %v441
    %547 = vmatprep.subr.bf16.mxu0 %v450
    %548 = vmatpush1.bf16.msra.mxu0 %v449
    %549 = vmatprep.subr.bf16.mxu0 %v458
    %550 = vmatpush1.bf16.msra.mxu0 %v457
    %551 = vmatprep.subr.bf16.mxu0 %v466
    %552 = vmatpush1.bf16.msra.mxu0 %v465
    %553 = vmatprep.subr.bf16.mxu0 0
    %554 = vmatpush1.bf16.msra.mxu0 0
    %555 = vmatprep.subr.bf16.mxu0 0
    %556 = vmatpush1.bf16.msra.mxu0 0
    %557 = vmatprep.subr.bf16.mxu0 0
    %558 = vmatpush1.bf16.msra.mxu0 0
    %559 = vmatprep.subr.bf16.mxu0 0
    %560 = vmatpush1.bf16.msra.mxu0 0
    %561 = vmatprep.subr.bf16.mxu0 0
    %562 = vmatpush1.bf16.msra.mxu0 0
    %563 = vmatprep.subr.bf16.mxu0 0
    %564 = vmatpush1.bf16.msra.mxu0 0
    %565 = vmatprep.subr.bf16.mxu0 0
    %566 = vmatpush1.bf16.msra.mxu0 0
    %567 = vmatprep.subr.bf16.mxu0 0
    %568 = vmatpush1.bf16.msra.mxu0 0
    %569 = vmatprep.mubr.bf16.mxu0 0
    %570 = vmatmul.mubr.bf16.gmra.mrb[0].mxu0 %v215
    %v571 = vpop.f32.mrb[0].mxu0
    %v572 = vadd.f32 %v174, %v571
    %v573 = vpop.f32.mrb[0].mxu0
    %v574 = vadd.f32 %v178, %v573
    %v575 = vpop.f32.mrb[0].mxu0
    %v576 = vadd.f32 %v174, %v575
    %v577 = vpop.f32.mrb[0].mxu0
    %v578 = vadd.f32 %v178, %v577
    %579 = vdwg.mxu0
    %580 = vmatprep.subr.bf16.mxu0 %v412
    %581 = vmatpush1.bf16.msra.mxu0 %v411
    %582 = vmatprep.subr.bf16.mxu0 %v420
    %583 = vmatpush1.bf16.msra.mxu0 %v419
    %584 = vmatprep.subr.bf16.mxu0 %v428
    %585 = vmatpush1.bf16.msra.mxu0 %v427
    %586 = vmatprep.subr.bf16.mxu0 %v436
    %587 = vmatpush1.bf16.msra.mxu0 %v435
    %588 = vmatprep.subr.bf16.mxu0 %v444
    %589 = vmatpush1.bf16.msra.mxu0 %v443
    %590 = vmatprep.subr.bf16.mxu0 %v452
    %591 = vmatpush1.bf16.msra.mxu0 %v451
    %592 = vmatprep.subr.bf16.mxu0 %v460
    %593 = vmatpush1.bf16.msra.mxu0 %v459
    %594 = vmatprep.subr.bf16.mxu0 %v468
    %595 = vmatpush1.bf16.msra.mxu0 %v467
    %596 = vmatprep.subr.bf16.mxu0 0
    %597 = vmatpush1.bf16.msra.mxu0 0
    %598 = vmatprep.subr.bf16.mxu0 0
    %599 = vmatpush1.bf16.msra.mxu0 0
    %600 = vmatprep.subr.bf16.mxu0 0
    %601 = vmatpush1.bf16.msra.mxu0 0
    %602 = vmatprep.subr.bf16.mxu0 0
    %603 = vmatpush1.bf16.msra.mxu0 0
    %604 = vmatprep.subr.bf16.mxu0 0
    %605 = vmatpush1.bf16.msra.mxu0 0
    %606 = vmatprep.subr.bf16.mxu0 0
    %607 = vmatpush1.bf16.msra.mxu0 0
    %608 = vmatprep.subr.bf16.mxu0 0
    %609 = vmatpush1.bf16.msra.mxu0 0
    %610 = vmatprep.subr.bf16.mxu0 0
    %611 = vmatpush1.bf16.msra.mxu0 0
    %612 = vmatprep.mubr.bf16.mxu0 0
    %613 = vmatmul.mubr.bf16.gmra.mrb[0].mxu0 %v215
    %v614 = vpop.f32.mrb[0].mxu0
    %v615 = vadd.f32 %v182, %v614
    %v616 = vpop.f32.mrb[0].mxu0
    %v617 = vadd.f32 %v186, %v616
    %v618 = vpop.f32.mrb[0].mxu0
    %v619 = vadd.f32 %v182, %v618
    %v620 = vpop.f32.mrb[0].mxu0
    %v621 = vadd.f32 %v186, %v620
    %622 = vdwg.mxu0
    %623 = vmatprep.subr.bf16.mxu0 %v414
    %624 = vmatpush1.bf16.msra.mxu0 %v413
    %625 = vmatprep.subr.bf16.mxu0 %v422
    %626 = vmatpush1.bf16.msra.mxu0 %v421
    %627 = vmatprep.subr.bf16.mxu0 %v430
    %628 = vmatpush1.bf16.msra.mxu0 %v429
    %629 = vmatprep.subr.bf16.mxu0 %v438
    %630 = vmatpush1.bf16.msra.mxu0 %v437
    %631 = vmatprep.subr.bf16.mxu0 %v446
    %632 = vmatpush1.bf16.msra.mxu0 %v445
    %633 = vmatprep.subr.bf16.mxu0 %v454
    %634 = vmatpush1.bf16.msra.mxu0 %v453
    %635 = vmatprep.subr.bf16.mxu0 %v462
    %636 = vmatpush1.bf16.msra.mxu0 %v461
    %637 = vmatprep.subr.bf16.mxu0 %v470
    %638 = vmatpush1.bf16.msra.mxu0 %v469
    %639 = vmatprep.subr.bf16.mxu0 0
    %640 = vmatpush1.bf16.msra.mxu0 0
    %641 = vmatprep.subr.bf16.mxu0 0
    %642 = vmatpush1.bf16.msra.mxu0 0
    %643 = vmatprep.subr.bf16.mxu0 0
    %644 = vmatpush1.bf16.msra.mxu0 0
    %645 = vmatprep.subr.bf16.mxu0 0
    %646 = vmatpush1.bf16.msra.mxu0 0
    %647 = vmatprep.subr.bf16.mxu0 0
    %648 = vmatpush1.bf16.msra.mxu0 0
    %649 = vmatprep.subr.bf16.mxu0 0
    %650 = vmatpush1.bf16.msra.mxu0 0
    %651 = vmatprep.subr.bf16.mxu0 0
    %652 = vmatpush1.bf16.msra.mxu0 0
    %653 = vmatprep.subr.bf16.mxu0 0
    %654 = vmatpush1.bf16.msra.mxu0 0
    %655 = vmatprep.mubr.bf16.mxu0 0
    %656 = vmatmul.mubr.bf16.gmra.mrb[0].mxu0 %v215
    %v657 = vpop.f32.mrb[0].mxu0
    %v658 = vadd.f32 %v190, %v657
    %v659 = vpop.f32.mrb[0].mxu0
    %v660 = vadd.f32 %v194, %v659
    %v661 = vpop.f32.mrb[0].mxu0
    %v662 = vadd.f32 %v190, %v661
    %v663 = vpop.f32.mrb[0].mxu0
    %v664 = vadd.f32 %v194, %v663
    %665 = vdwg.mxu0
    %666 = vmatprep.subr.bf16.mxu0 %v416
    %667 = vmatpush1.bf16.msra.mxu0 %v415
    %668 = vmatprep.subr.bf16.mxu0 %v424
    %669 = vmatpush1.bf16.msra.mxu0 %v423
    %670 = vmatprep.subr.bf16.mxu0 %v432
    %671 = vmatpush1.bf16.msra.mxu0 %v431
    %672 = vmatprep.subr.bf16.mxu0 %v440
    %673 = vmatpush1.bf16.msra.mxu0 %v439
    %674 = vmatprep.subr.bf16.mxu0 %v448
    %675 = vmatpush1.bf16.msra.mxu0 %v447
    %676 = vmatprep.subr.bf16.mxu0 %v456
    %677 = vmatpush1.bf16.msra.mxu0 %v455
    %678 = vmatprep.subr.bf16.mxu0 %v464
    %679 = vmatpush1.bf16.msra.mxu0 %v463
    %680 = vmatprep.subr.bf16.mxu0 %v472
    %681 = vmatpush1.bf16.msra.mxu0 %v471
    %682 = vmatprep.subr.bf16.mxu0 0
    %683 = vmatpush1.bf16.msra.mxu0 0
    %684 = vmatprep.subr.bf16.mxu0 0
    %685 = vmatpush1.bf16.msra.mxu0 0
    %686 = vmatprep.subr.bf16.mxu0 0
    %687 = vmatpush1.bf16.msra.mxu0 0
    %688 = vmatprep.subr.bf16.mxu0 0
    %689 = vmatpush1.bf16.msra.mxu0 0
    %690 = vmatprep.subr.bf16.mxu0 0
    %691 = vmatpush1.bf16.msra.mxu0 0
    %692 = vmatprep.subr.bf16.mxu0 0
    %693 = vmatpush1.bf16.msra.mxu0 0
    %694 = vmatprep.subr.bf16.mxu0 0
    %695 = vmatpush1.bf16.msra.mxu0 0
    %696 = vmatprep.subr.bf16.mxu0 0
    %697 = vmatpush1.bf16.msra.mxu0 0
    %698 = vmatprep.mubr.bf16.mxu0 0
    %699 = vmatmul.mubr.bf16.gmra.mrb[0].mxu0 %v215
    %v700 = vpop.f32.mrb[0].mxu0
    %v701 = vadd.f32 %v198, %v700
    %v702 = vpop.f32.mrb[0].mxu0
    %v703 = vadd.f32 %v202, %v702
    %v704 = vpop.f32.mrb[0].mxu0
    %v705 = vadd.f32 %v198, %v704
    %v706 = vpop.f32.mrb[0].mxu0
    %v707 = vadd.f32 %v202, %v706
    %708 = vdwg.mxu0
    %v709 = vmax.f32 %v572, 0.0
    %v710 = vmax.f32 %v574, 0.0
    %v711 = vmax.f32 %v615, 0.0
    %v712 = vmax.f32 %v617, 0.0
    %v713 = vmax.f32 %v658, 0.0
    %v714 = vmax.f32 %v660, 0.0
    %v715 = vmax.f32 %v701, 0.0
    %v716 = vmax.f32 %v703, 0.0
    %v717 = vmax.f32 %v576, 0.0
    %v718 = vmax.f32 %v578, 0.0
    %v719 = vmax.f32 %v619, 0.0
    %v720 = vmax.f32 %v621, 0.0
    %v721 = vmax.f32 %v662, 0.0
    %v722 = vmax.f32 %v664, 0.0
    %v723 = vmax.f32 %v705, 0.0
    %v724 = vmax.f32 %v707, 0.0
    %v725 = vpack.c.bf16 %v717, %v709
    %v726 = vpack.c.bf16 %v718, %v710
    %v727 = vpack.c.bf16 %v719, %v711
    %v728 = vpack.c.bf16 %v720, %v712
    %v729 = vpack.c.bf16 %v721, %v713
    %v730 = vpack.c.bf16 %v722, %v714
    %v731 = vpack.c.bf16 %v723, %v715
    %v732 = vpack.c.bf16 %v724, %v716
    %v733 = vld [vmem:[#allocation6] sm:$0xff]
    %v734 = vld [vmem:[#allocation6 + $0x8] sm:$0xff]
    %v735 = vld [vmem:[#allocation6 + $0x10] sm:$0xff]
    %v736 = vld [vmem:[#allocation6 + $0x18] sm:$0xff]
    %v737 = vld [vmem:[#allocation6 + $0x20] sm:$0xff]
    %v738 = vld [vmem:[#allocation6 + $0x28] sm:$0xff]
    %v739 = vld [vmem:[#allocation6 + $0x30] sm:$0xff]
    %v740 = vld [vmem:[#allocation6 + $0x38] sm:$0xff]
    %v741 = vld [vmem:[#allocation6 + $0x40] sm:$0xff]
    %v742 = vld [vmem:[#allocation6 + $0x48] sm:$0xff]
    %v743 = vld [vmem:[#allocation6 + $0x50] sm:$0xff]
    %v744 = vld [vmem:[#allocation6 + $0x58] sm:$0xff]
    %v745 = vld [vmem:[#allocation6 + $0x60] sm:$0xff]
    %v746 = vld [vmem:[#allocation6 + $0x68] sm:$0xff]
    %v747 = vld [vmem:[#allocation6 + $0x70] sm:$0xff]
    %v748 = vld [vmem:[#allocation6 + $0x78] sm:$0xff]
    %v749 = vld [vmem:[#allocation6 + $0x80] sm:$0xff]
    %v750 = vld [vmem:[#allocation6 + $0x88] sm:$0xff]
    %v751 = vld [vmem:[#allocation6 + $0x90] sm:$0xff]
    %v752 = vld [vmem:[#allocation6 + $0x98] sm:$0xff]
    %v753 = vld [vmem:[#allocation6 + $0xa0] sm:$0xff]
    %v754 = vld [vmem:[#allocation6 + $0xa8] sm:$0xff]
    %v755 = vld [vmem:[#allocation6 + $0xb0] sm:$0xff]
    %v756 = vld [vmem:[#allocation6 + $0xb8] sm:$0xff]
    %v757 = vld [vmem:[#allocation6 + $0xc0] sm:$0xff]
    %v758 = vld [vmem:[#allocation6 + $0xc8] sm:$0xff]
    %v759 = vld [vmem:[#allocation6 + $0xd0] sm:$0xff]
    %v760 = vld [vmem:[#allocation6 + $0xd8] sm:$0xff]
    %v761 = vld [vmem:[#allocation6 + $0xe0] sm:$0xff]
    %v762 = vld [vmem:[#allocation6 + $0xe8] sm:$0xff]
    %v763 = vld [vmem:[#allocation6 + $0xf0] sm:$0xff]
    %v764 = vld [vmem:[#allocation6 + $0xf8] sm:$0xff]
    %v765 = vld [vmem:[#allocation6 + $0x100] sm:$0xff]
    %v766 = vld [vmem:[#allocation6 + $0x108] sm:$0xff]
    %v767 = vld [vmem:[#allocation6 + $0x110] sm:$0xff]
    %v768 = vld [vmem:[#allocation6 + $0x118] sm:$0xff]
    %v769 = vld [vmem:[#allocation6 + $0x120] sm:$0xff]
    %v770 = vld [vmem:[#allocation6 + $0x128] sm:$0xff]
    %v771 = vld [vmem:[#allocation6 + $0x130] sm:$0xff]
    %v772 = vld [vmem:[#allocation6 + $0x138] sm:$0xff]
    %v773 = vld [vmem:[#allocation6 + $0x140] sm:$0xff]
    %v774 = vld [vmem:[#allocation6 + $0x148] sm:$0xff]
    %v775 = vld [vmem:[#allocation6 + $0x150] sm:$0xff]
    %v776 = vld [vmem:[#allocation6 + $0x158] sm:$0xff]
    %v777 = vld [vmem:[#allocation6 + $0x160] sm:$0xff]
    %v778 = vld [vmem:[#allocation6 + $0x168] sm:$0xff]
    %v779 = vld [vmem:[#allocation6 + $0x170] sm:$0xff]
    %v780 = vld [vmem:[#allocation6 + $0x178] sm:$0xff]
    %v781 = vld [vmem:[#allocation6 + $0x180] sm:$0xff]
    %v782 = vld [vmem:[#allocation6 + $0x188] sm:$0xff]
    %v783 = vld [vmem:[#allocation6 + $0x190] sm:$0xff]
    %v784 = vld [vmem:[#allocation6 + $0x198] sm:$0xff]
    %v785 = vld [vmem:[#allocation6 + $0x1a0] sm:$0xff]
    %v786 = vld [vmem:[#allocation6 + $0x1a8] sm:$0xff]
    %v787 = vld [vmem:[#allocation6 + $0x1b0] sm:$0xff]
    %v788 = vld [vmem:[#allocation6 + $0x1b8] sm:$0xff]
    %v789 = vld [vmem:[#allocation6 + $0x1c0] sm:$0xff]
    %v790 = vld [vmem:[#allocation6 + $0x1c8] sm:$0xff]
    %v791 = vld [vmem:[#allocation6 + $0x1d0] sm:$0xff]
    %v792 = vld [vmem:[#allocation6 + $0x1d8] sm:$0xff]
    %v793 = vld [vmem:[#allocation6 + $0x1e0] sm:$0xff]
    %v794 = vld [vmem:[#allocation6 + $0x1e8] sm:$0xff]
    %v795 = vld [vmem:[#allocation6 + $0x1f0] sm:$0xff]
    %v796 = vld [vmem:[#allocation6 + $0x1f8] sm:$0xff]
    %v797 = vld [vmem:[#allocation6 + $0x200] sm:$0xff]
    %v798 = vld [vmem:[#allocation6 + $0x208] sm:$0xff]
    %v799 = vld [vmem:[#allocation6 + $0x210] sm:$0xff]
    %v800 = vld [vmem:[#allocation6 + $0x218] sm:$0xff]
    %v801 = vld [vmem:[#allocation6 + $0x220] sm:$0xff]
    %v802 = vld [vmem:[#allocation6 + $0x228] sm:$0xff]
    %v803 = vld [vmem:[#allocation6 + $0x230] sm:$0xff]
    %v804 = vld [vmem:[#allocation6 + $0x238] sm:$0xff]
    %v805 = vld [vmem:[#allocation6 + $0x240] sm:$0xff]
    %v806 = vld [vmem:[#allocation6 + $0x248] sm:$0xff]
    %v807 = vld [vmem:[#allocation6 + $0x250] sm:$0xff]
    %v808 = vld [vmem:[#allocation6 + $0x258] sm:$0xff]
    %v809 = vld [vmem:[#allocation6 + $0x260] sm:$0xff]
    %v810 = vld [vmem:[#allocation6 + $0x268] sm:$0xff]
    %v811 = vld [vmem:[#allocation6 + $0x270] sm:$0xff]
    %v812 = vld [vmem:[#allocation6 + $0x278] sm:$0xff]
    %v813 = vld [vmem:[#allocation6 + $0x280] sm:$0xff]
    %v814 = vld [vmem:[#allocation6 + $0x288] sm:$0xff]
    %v815 = vld [vmem:[#allocation6 + $0x290] sm:$0xff]
    %v816 = vld [vmem:[#allocation6 + $0x298] sm:$0xff]
    %v817 = vld [vmem:[#allocation6 + $0x2a0] sm:$0xff]
    %v818 = vld [vmem:[#allocation6 + $0x2a8] sm:$0xff]
    %v819 = vld [vmem:[#allocation6 + $0x2b0] sm:$0xff]
    %v820 = vld [vmem:[#allocation6 + $0x2b8] sm:$0xff]
    %v821 = vld [vmem:[#allocation6 + $0x2c0] sm:$0xff]
    %v822 = vld [vmem:[#allocation6 + $0x2c8] sm:$0xff]
    %v823 = vld [vmem:[#allocation6 + $0x2d0] sm:$0xff]
    %v824 = vld [vmem:[#allocation6 + $0x2d8] sm:$0xff]
    %v825 = vld [vmem:[#allocation6 + $0x2e0] sm:$0xff]
    %v826 = vld [vmem:[#allocation6 + $0x2e8] sm:$0xff]
    %v827 = vld [vmem:[#allocation6 + $0x2f0] sm:$0xff]
    %v828 = vld [vmem:[#allocation6 + $0x2f8] sm:$0xff]
    %v829 = vld [vmem:[#allocation6 + $0x300] sm:$0xff]
    %v830 = vld [vmem:[#allocation6 + $0x308] sm:$0xff]
    %v831 = vld [vmem:[#allocation6 + $0x310] sm:$0xff]
    %v832 = vld [vmem:[#allocation6 + $0x318] sm:$0xff]
    %v833 = vld [vmem:[#allocation6 + $0x320] sm:$0xff]
    %v834 = vld [vmem:[#allocation6 + $0x328] sm:$0xff]
    %v835 = vld [vmem:[#allocation6 + $0x330] sm:$0xff]
    %v836 = vld [vmem:[#allocation6 + $0x338] sm:$0xff]
    %v837 = vld [vmem:[#allocation6 + $0x340] sm:$0xff]
    %v838 = vld [vmem:[#allocation6 + $0x348] sm:$0xff]
    %v839 = vld [vmem:[#allocation6 + $0x350] sm:$0xff]
    %v840 = vld [vmem:[#allocation6 + $0x358] sm:$0xff]
    %v841 = vld [vmem:[#allocation6 + $0x360] sm:$0xff]
    %v842 = vld [vmem:[#allocation6 + $0x368] sm:$0xff]
    %v843 = vld [vmem:[#allocation6 + $0x370] sm:$0xff]
    %v844 = vld [vmem:[#allocation6 + $0x378] sm:$0xff]
    %v845 = vld [vmem:[#allocation6 + $0x380] sm:$0xff]
    %v846 = vld [vmem:[#allocation6 + $0x388] sm:$0xff]
    %v847 = vld [vmem:[#allocation6 + $0x390] sm:$0xff]
    %v848 = vld [vmem:[#allocation6 + $0x398] sm:$0xff]
    %v849 = vld [vmem:[#allocation6 + $0x3a0] sm:$0xff]
    %v850 = vld [vmem:[#allocation6 + $0x3a8] sm:$0xff]
    %v851 = vld [vmem:[#allocation6 + $0x3b0] sm:$0xff]
    %v852 = vld [vmem:[#allocation6 + $0x3b8] sm:$0xff]
    %v853 = vld [vmem:[#allocation6 + $0x3c0] sm:$0xff]
    %v854 = vld [vmem:[#allocation6 + $0x3c8] sm:$0xff]
    %v855 = vld [vmem:[#allocation6 + $0x3d0] sm:$0xff]
    %v856 = vld [vmem:[#allocation6 + $0x3d8] sm:$0xff]
    %v857 = vld [vmem:[#allocation6 + $0x3e0] sm:$0xff]
    %v858 = vld [vmem:[#allocation6 + $0x3e8] sm:$0xff]
    %v859 = vld [vmem:[#allocation6 + $0x3f0] sm:$0xff]
    %v860 = vld [vmem:[#allocation6 + $0x3f8] sm:$0xff]
    %v861 = vld [vmem:[#allocation6 + $0x400] sm:$0xff]
    %v862 = vld [vmem:[#allocation6 + $0x408] sm:$0xff]
    %v863 = vld [vmem:[#allocation6 + $0x410] sm:$0xff]
    %v864 = vld [vmem:[#allocation6 + $0x418] sm:$0xff]
    %v865 = vld [vmem:[#allocation6 + $0x420] sm:$0xff]
    %v866 = vld [vmem:[#allocation6 + $0x428] sm:$0xff]
    %v867 = vld [vmem:[#allocation6 + $0x430] sm:$0xff]
    %v868 = vld [vmem:[#allocation6 + $0x438] sm:$0xff]
    %v869 = vld [vmem:[#allocation6 + $0x440] sm:$0xff]
    %v870 = vld [vmem:[#allocation6 + $0x448] sm:$0xff]
    %v871 = vld [vmem:[#allocation6 + $0x450] sm:$0xff]
    %v872 = vld [vmem:[#allocation6 + $0x458] sm:$0xff]
    %v873 = vld [vmem:[#allocation6 + $0x460] sm:$0xff]
    %v874 = vld [vmem:[#allocation6 + $0x468] sm:$0xff]
    %v875 = vld [vmem:[#allocation6 + $0x470] sm:$0xff]
    %v876 = vld [vmem:[#allocation6 + $0x478] sm:$0xff]
    %v877 = vld [vmem:[#allocation6 + $0x480] sm:$0xff]
    %v878 = vld [vmem:[#allocation6 + $0x488] sm:$0xff]
    %v879 = vld [vmem:[#allocation6 + $0x490] sm:$0xff]
    %v880 = vld [vmem:[#allocation6 + $0x498] sm:$0xff]
    %v881 = vld [vmem:[#allocation6 + $0x4a0] sm:$0xff]
    %v882 = vld [vmem:[#allocation6 + $0x4a8] sm:$0xff]
    %v883 = vld [vmem:[#allocation6 + $0x4b0] sm:$0xff]
    %v884 = vld [vmem:[#allocation6 + $0x4b8] sm:$0xff]
    %v885 = vld [vmem:[#allocation6 + $0x4c0] sm:$0xff]
    %v886 = vld [vmem:[#allocation6 + $0x4c8] sm:$0xff]
    %v887 = vld [vmem:[#allocation6 + $0x4d0] sm:$0xff]
    %v888 = vld [vmem:[#allocation6 + $0x4d8] sm:$0xff]
    %v889 = vld [vmem:[#allocation6 + $0x4e0] sm:$0xff]
    %v890 = vld [vmem:[#allocation6 + $0x4e8] sm:$0xff]
    %v891 = vld [vmem:[#allocation6 + $0x4f0] sm:$0xff]
    %v892 = vld [vmem:[#allocation6 + $0x4f8] sm:$0xff]
    %v893 = vld [vmem:[#allocation6 + $0x500] sm:$0xff]
    %v894 = vld [vmem:[#allocation6 + $0x508] sm:$0xff]
    %v895 = vld [vmem:[#allocation6 + $0x510] sm:$0xff]
    %v896 = vld [vmem:[#allocation6 + $0x518] sm:$0xff]
    %v897 = vld [vmem:[#allocation6 + $0x520] sm:$0xff]
    %v898 = vld [vmem:[#allocation6 + $0x528] sm:$0xff]
    %v899 = vld [vmem:[#allocation6 + $0x530] sm:$0xff]
    %v900 = vld [vmem:[#allocation6 + $0x538] sm:$0xff]
    %v901 = vld [vmem:[#allocation6 + $0x540] sm:$0xff]
    %v902 = vld [vmem:[#allocation6 + $0x548] sm:$0xff]
    %v903 = vld [vmem:[#allocation6 + $0x550] sm:$0xff]
    %v904 = vld [vmem:[#allocation6 + $0x558] sm:$0xff]
    %v905 = vld [vmem:[#allocation6 + $0x560] sm:$0xff]
    %v906 = vld [vmem:[#allocation6 + $0x568] sm:$0xff]
    %v907 = vld [vmem:[#allocation6 + $0x570] sm:$0xff]
    %v908 = vld [vmem:[#allocation6 + $0x578] sm:$0xff]
    %v909 = vld [vmem:[#allocation6 + $0x580] sm:$0xff]
    %v910 = vld [vmem:[#allocation6 + $0x588] sm:$0xff]
    %v911 = vld [vmem:[#allocation6 + $0x590] sm:$0xff]
    %v912 = vld [vmem:[#allocation6 + $0x598] sm:$0xff]
    %v913 = vld [vmem:[#allocation6 + $0x5a0] sm:$0xff]
    %v914 = vld [vmem:[#allocation6 + $0x5a8] sm:$0xff]
    %v915 = vld [vmem:[#allocation6 + $0x5b0] sm:$0xff]
    %v916 = vld [vmem:[#allocation6 + $0x5b8] sm:$0xff]
    %v917 = vld [vmem:[#allocation6 + $0x5c0] sm:$0xff]
    %v918 = vld [vmem:[#allocation6 + $0x5c8] sm:$0xff]
    %v919 = vld [vmem:[#allocation6 + $0x5d0] sm:$0xff]
    %v920 = vld [vmem:[#allocation6 + $0x5d8] sm:$0xff]
    %v921 = vld [vmem:[#allocation6 + $0x5e0] sm:$0xff]
    %v922 = vld [vmem:[#allocation6 + $0x5e8] sm:$0xff]
    %v923 = vld [vmem:[#allocation6 + $0x5f0] sm:$0xff]
    %v924 = vld [vmem:[#allocation6 + $0x5f8] sm:$0xff]
    %v925 = vld [vmem:[#allocation6 + $0x600] sm:$0xff]
    %v926 = vld [vmem:[#allocation6 + $0x608] sm:$0xff]
    %v927 = vld [vmem:[#allocation6 + $0x610] sm:$0xff]
    %v928 = vld [vmem:[#allocation6 + $0x618] sm:$0xff]
    %v929 = vld [vmem:[#allocation6 + $0x620] sm:$0xff]
    %v930 = vld [vmem:[#allocation6 + $0x628] sm:$0xff]
    %v931 = vld [vmem:[#allocation6 + $0x630] sm:$0xff]
    %v932 = vld [vmem:[#allocation6 + $0x638] sm:$0xff]
    %v933 = vld [vmem:[#allocation6 + $0x640] sm:$0xff]
    %v934 = vld [vmem:[#allocation6 + $0x648] sm:$0xff]
    %v935 = vld [vmem:[#allocation6 + $0x650] sm:$0xff]
    %v936 = vld [vmem:[#allocation6 + $0x658] sm:$0xff]
    %v937 = vld [vmem:[#allocation6 + $0x660] sm:$0xff]
    %v938 = vld [vmem:[#allocation6 + $0x668] sm:$0xff]
    %v939 = vld [vmem:[#allocation6 + $0x670] sm:$0xff]
    %v940 = vld [vmem:[#allocation6 + $0x678] sm:$0xff]
    %v941 = vld [vmem:[#allocation6 + $0x680] sm:$0xff]
    %v942 = vld [vmem:[#allocation6 + $0x688] sm:$0xff]
    %v943 = vld [vmem:[#allocation6 + $0x690] sm:$0xff]
    %v944 = vld [vmem:[#allocation6 + $0x698] sm:$0xff]
    %v945 = vld [vmem:[#allocation6 + $0x6a0] sm:$0xff]
    %v946 = vld [vmem:[#allocation6 + $0x6a8] sm:$0xff]
    %v947 = vld [vmem:[#allocation6 + $0x6b0] sm:$0xff]
    %v948 = vld [vmem:[#allocation6 + $0x6b8] sm:$0xff]
    %v949 = vld [vmem:[#allocation6 + $0x6c0] sm:$0xff]
    %v950 = vld [vmem:[#allocation6 + $0x6c8] sm:$0xff]
    %v951 = vld [vmem:[#allocation6 + $0x6d0] sm:$0xff]
    %v952 = vld [vmem:[#allocation6 + $0x6d8] sm:$0xff]
    %v953 = vld [vmem:[#allocation6 + $0x6e0] sm:$0xff]
    %v954 = vld [vmem:[#allocation6 + $0x6e8] sm:$0xff]
    %v955 = vld [vmem:[#allocation6 + $0x6f0] sm:$0xff]
    %v956 = vld [vmem:[#allocation6 + $0x6f8] sm:$0xff]
    %v957 = vld [vmem:[#allocation6 + $0x700] sm:$0xff]
    %v958 = vld [vmem:[#allocation6 + $0x708] sm:$0xff]
    %v959 = vld [vmem:[#allocation6 + $0x710] sm:$0xff]
    %v960 = vld [vmem:[#allocation6 + $0x718] sm:$0xff]
    %v961 = vld [vmem:[#allocation6 + $0x720] sm:$0xff]
    %v962 = vld [vmem:[#allocation6 + $0x728] sm:$0xff]
    %v963 = vld [vmem:[#allocation6 + $0x730] sm:$0xff]
    %v964 = vld [vmem:[#allocation6 + $0x738] sm:$0xff]
    %v965 = vld [vmem:[#allocation6 + $0x740] sm:$0xff]
    %v966 = vld [vmem:[#allocation6 + $0x748] sm:$0xff]
    %v967 = vld [vmem:[#allocation6 + $0x750] sm:$0xff]
    %v968 = vld [vmem:[#allocation6 + $0x758] sm:$0xff]
    %v969 = vld [vmem:[#allocation6 + $0x760] sm:$0xff]
    %v970 = vld [vmem:[#allocation6 + $0x768] sm:$0xff]
    %v971 = vld [vmem:[#allocation6 + $0x770] sm:$0xff]
    %v972 = vld [vmem:[#allocation6 + $0x778] sm:$0xff]
    %v973 = vld [vmem:[#allocation6 + $0x780] sm:$0xff]
    %v974 = vld [vmem:[#allocation6 + $0x788] sm:$0xff]
    %v975 = vld [vmem:[#allocation6 + $0x790] sm:$0xff]
    %v976 = vld [vmem:[#allocation6 + $0x798] sm:$0xff]
    %v977 = vld [vmem:[#allocation6 + $0x7a0] sm:$0xff]
    %v978 = vld [vmem:[#allocation6 + $0x7a8] sm:$0xff]
    %v979 = vld [vmem:[#allocation6 + $0x7b0] sm:$0xff]
    %v980 = vld [vmem:[#allocation6 + $0x7b8] sm:$0xff]
    %v981 = vld [vmem:[#allocation6 + $0x7c0] sm:$0xff]
    %v982 = vld [vmem:[#allocation6 + $0x7c8] sm:$0xff]
    %v983 = vld [vmem:[#allocation6 + $0x7d0] sm:$0xff]
    %v984 = vld [vmem:[#allocation6 + $0x7d8] sm:$0xff]
    %v985 = vld [vmem:[#allocation6 + $0x7e0] sm:$0xff]
    %v986 = vld [vmem:[#allocation6 + $0x7e8] sm:$0xff]
    %v987 = vld [vmem:[#allocation6 + $0x7f0] sm:$0xff]
    %v988 = vld [vmem:[#allocation6 + $0x7f8] sm:$0xff]
    %v989 = vld [vmem:[#allocation6 + $0x800] sm:$0xff]
    %v990 = vld [vmem:[#allocation6 + $0x808] sm:$0xff]
    %v991 = vld [vmem:[#allocation6 + $0x810] sm:$0xff]
    %v992 = vld [vmem:[#allocation6 + $0x818] sm:$0xff]
    %v993 = vld [vmem:[#allocation6 + $0x820] sm:$0xff]
    %v994 = vld [vmem:[#allocation6 + $0x828] sm:$0xff]
    %v995 = vld [vmem:[#allocation6 + $0x830] sm:$0xff]
    %v996 = vld [vmem:[#allocation6 + $0x838] sm:$0xff]
    %v997 = vld [vmem:[#allocation6 + $0x840] sm:$0xff]
    %v998 = vld [vmem:[#allocation6 + $0x848] sm:$0xff]
    %v999 = vld [vmem:[#allocation6 + $0x850] sm:$0xff]
    %v1000 = vld [vmem:[#allocation6 + $0x858] sm:$0xff]
    %v1001 = vld [vmem:[#allocation6 + $0x860] sm:$0xff]
    %v1002 = vld [vmem:[#allocation6 + $0x868] sm:$0xff]
    %v1003 = vld [vmem:[#allocation6 + $0x870] sm:$0xff]
    %v1004 = vld [vmem:[#allocation6 + $0x878] sm:$0xff]
    %v1005 = vld [vmem:[#allocation6 + $0x880] sm:$0xff]
    %v1006 = vld [vmem:[#allocation6 + $0x888] sm:$0xff]
    %v1007 = vld [vmem:[#allocation6 + $0x890] sm:$0xff]
    %v1008 = vld [vmem:[#allocation6 + $0x898] sm:$0xff]
    %v1009 = vld [vmem:[#allocation6 + $0x8a0] sm:$0xff]
    %v1010 = vld [vmem:[#allocation6 + $0x8a8] sm:$0xff]
    %v1011 = vld [vmem:[#allocation6 + $0x8b0] sm:$0xff]
    %v1012 = vld [vmem:[#allocation6 + $0x8b8] sm:$0xff]
    %v1013 = vld [vmem:[#allocation6 + $0x8c0] sm:$0xff]
    %v1014 = vld [vmem:[#allocation6 + $0x8c8] sm:$0xff]
    %v1015 = vld [vmem:[#allocation6 + $0x8d0] sm:$0xff]
    %v1016 = vld [vmem:[#allocation6 + $0x8d8] sm:$0xff]
    %v1017 = vld [vmem:[#allocation6 + $0x8e0] sm:$0xff]
    %v1018 = vld [vmem:[#allocation6 + $0x8e8] sm:$0xff]
    %v1019 = vld [vmem:[#allocation6 + $0x8f0] sm:$0xff]
    %v1020 = vld [vmem:[#allocation6 + $0x8f8] sm:$0xff]
    %v1021 = vld [vmem:[#allocation6 + $0x900] sm:$0xff]
    %v1022 = vld [vmem:[#allocation6 + $0x908] sm:$0xff]
    %v1023 = vld [vmem:[#allocation6 + $0x910] sm:$0xff]
    %v1024 = vld [vmem:[#allocation6 + $0x918] sm:$0xff]
    %v1025 = vld [vmem:[#allocation6 + $0x920] sm:$0xff]
    %v1026 = vld [vmem:[#allocation6 + $0x928] sm:$0xff]
    %v1027 = vld [vmem:[#allocation6 + $0x930] sm:$0xff]
    %v1028 = vld [vmem:[#allocation6 + $0x938] sm:$0xff]
    %v1029 = vld [vmem:[#allocation6 + $0x940] sm:$0xff]
    %v1030 = vld [vmem:[#allocation6 + $0x948] sm:$0xff]
    %v1031 = vld [vmem:[#allocation6 + $0x950] sm:$0xff]
    %v1032 = vld [vmem:[#allocation6 + $0x958] sm:$0xff]
    %v1033 = vld [vmem:[#allocation6 + $0x960] sm:$0xff]
    %v1034 = vld [vmem:[#allocation6 + $0x968] sm:$0xff]
    %v1035 = vld [vmem:[#allocation6 + $0x970] sm:$0xff]
    %v1036 = vld [vmem:[#allocation6 + $0x978] sm:$0xff]
    %v1037 = vld [vmem:[#allocation6 + $0x980] sm:$0xff]
    %v1038 = vld [vmem:[#allocation6 + $0x988] sm:$0xff]
    %v1039 = vld [vmem:[#allocation6 + $0x990] sm:$0xff]
    %v1040 = vld [vmem:[#allocation6 + $0x998] sm:$0xff]
    %v1041 = vld [vmem:[#allocation6 + $0x9a0] sm:$0xff]
    %v1042 = vld [vmem:[#allocation6 + $0x9a8] sm:$0xff]
    %v1043 = vld [vmem:[#allocation6 + $0x9b0] sm:$0xff]
    %v1044 = vld [vmem:[#allocation6 + $0x9b8] sm:$0xff]
    %v1045 = vld [vmem:[#allocation6 + $0x9c0] sm:$0xff]
    %v1046 = vld [vmem:[#allocation6 + $0x9c8] sm:$0xff]
    %v1047 = vld [vmem:[#allocation6 + $0x9d0] sm:$0xff]
    %v1048 = vld [vmem:[#allocation6 + $0x9d8] sm:$0xff]
    %v1049 = vld [vmem:[#allocation6 + $0x9e0] sm:$0xff]
    %v1050 = vld [vmem:[#allocation6 + $0x9e8] sm:$0xff]
    %v1051 = vld [vmem:[#allocation6 + $0x9f0] sm:$0xff]
    %v1052 = vld [vmem:[#allocation6 + $0x9f8] sm:$0xff]
    %v1053 = vld [vmem:[#allocation6 + $0xa00] sm:$0xff]
    %v1054 = vld [vmem:[#allocation6 + $0xa08] sm:$0xff]
    %v1055 = vld [vmem:[#allocation6 + $0xa10] sm:$0xff]
    %v1056 = vld [vmem:[#allocation6 + $0xa18] sm:$0xff]
    %v1057 = vld [vmem:[#allocation6 + $0xa20] sm:$0xff]
    %v1058 = vld [vmem:[#allocation6 + $0xa28] sm:$0xff]
    %v1059 = vld [vmem:[#allocation6 + $0xa30] sm:$0xff]
    %v1060 = vld [vmem:[#allocation6 + $0xa38] sm:$0xff]
    %v1061 = vld [vmem:[#allocation6 + $0xa40] sm:$0xff]
    %v1062 = vld [vmem:[#allocation6 + $0xa48] sm:$0xff]
    %v1063 = vld [vmem:[#allocation6 + $0xa50] sm:$0xff]
    %v1064 = vld [vmem:[#allocation6 + $0xa58] sm:$0xff]
    %v1065 = vld [vmem:[#allocation6 + $0xa60] sm:$0xff]
    %v1066 = vld [vmem:[#allocation6 + $0xa68] sm:$0xff]
    %v1067 = vld [vmem:[#allocation6 + $0xa70] sm:$0xff]
    %v1068 = vld [vmem:[#allocation6 + $0xa78] sm:$0xff]
    %v1069 = vld [vmem:[#allocation6 + $0xa80] sm:$0xff]
    %v1070 = vld [vmem:[#allocation6 + $0xa88] sm:$0xff]
    %v1071 = vld [vmem:[#allocation6 + $0xa90] sm:$0xff]
    %v1072 = vld [vmem:[#allocation6 + $0xa98] sm:$0xff]
    %v1073 = vld [vmem:[#allocation6 + $0xaa0] sm:$0xff]
    %v1074 = vld [vmem:[#allocation6 + $0xaa8] sm:$0xff]
    %v1075 = vld [vmem:[#allocation6 + $0xab0] sm:$0xff]
    %v1076 = vld [vmem:[#allocation6 + $0xab8] sm:$0xff]
    %v1077 = vld [vmem:[#allocation6 + $0xac0] sm:$0xff]
    %v1078 = vld [vmem:[#allocation6 + $0xac8] sm:$0xff]
    %v1079 = vld [vmem:[#allocation6 + $0xad0] sm:$0xff]
    %v1080 = vld [vmem:[#allocation6 + $0xad8] sm:$0xff]
    %v1081 = vld [vmem:[#allocation6 + $0xae0] sm:$0xff]
    %v1082 = vld [vmem:[#allocation6 + $0xae8] sm:$0xff]
    %v1083 = vld [vmem:[#allocation6 + $0xaf0] sm:$0xff]
    %v1084 = vld [vmem:[#allocation6 + $0xaf8] sm:$0xff]
    %v1085 = vld [vmem:[#allocation6 + $0xb00] sm:$0xff]
    %v1086 = vld [vmem:[#allocation6 + $0xb08] sm:$0xff]
    %v1087 = vld [vmem:[#allocation6 + $0xb10] sm:$0xff]
    %v1088 = vld [vmem:[#allocation6 + $0xb18] sm:$0xff]
    %v1089 = vld [vmem:[#allocation6 + $0xb20] sm:$0xff]
    %v1090 = vld [vmem:[#allocation6 + $0xb28] sm:$0xff]
    %v1091 = vld [vmem:[#allocation6 + $0xb30] sm:$0xff]
    %v1092 = vld [vmem:[#allocation6 + $0xb38] sm:$0xff]
    %v1093 = vld [vmem:[#allocation6 + $0xb40] sm:$0xff]
    %v1094 = vld [vmem:[#allocation6 + $0xb48] sm:$0xff]
    %v1095 = vld [vmem:[#allocation6 + $0xb50] sm:$0xff]
    %v1096 = vld [vmem:[#allocation6 + $0xb58] sm:$0xff]
    %v1097 = vld [vmem:[#allocation6 + $0xb60] sm:$0xff]
    %v1098 = vld [vmem:[#allocation6 + $0xb68] sm:$0xff]
    %v1099 = vld [vmem:[#allocation6 + $0xb70] sm:$0xff]
    %v1100 = vld [vmem:[#allocation6 + $0xb78] sm:$0xff]
    %v1101 = vld [vmem:[#allocation6 + $0xb80] sm:$0xff]
    %v1102 = vld [vmem:[#allocation6 + $0xb88] sm:$0xff]
    %v1103 = vld [vmem:[#allocation6 + $0xb90] sm:$0xff]
    %v1104 = vld [vmem:[#allocation6 + $0xb98] sm:$0xff]
    %v1105 = vld [vmem:[#allocation6 + $0xba0] sm:$0xff]
    %v1106 = vld [vmem:[#allocation6 + $0xba8] sm:$0xff]
    %v1107 = vld [vmem:[#allocation6 + $0xbb0] sm:$0xff]
    %v1108 = vld [vmem:[#allocation6 + $0xbb8] sm:$0xff]
    %v1109 = vld [vmem:[#allocation6 + $0xbc0] sm:$0xff]
    %v1110 = vld [vmem:[#allocation6 + $0xbc8] sm:$0xff]
    %v1111 = vld [vmem:[#allocation6 + $0xbd0] sm:$0xff]
    %v1112 = vld [vmem:[#allocation6 + $0xbd8] sm:$0xff]
    %v1113 = vld [vmem:[#allocation6 + $0xbe0] sm:$0xff]
    %v1114 = vld [vmem:[#allocation6 + $0xbe8] sm:$0xff]
    %v1115 = vld [vmem:[#allocation6 + $0xbf0] sm:$0xff]
    %v1116 = vld [vmem:[#allocation6 + $0xbf8] sm:$0xff]
    %v1117 = vld [vmem:[#allocation6 + $0xc00] sm:$0xff]
    %v1118 = vld [vmem:[#allocation6 + $0xc08] sm:$0xff]
    %v1119 = vld [vmem:[#allocation6 + $0xc10] sm:$0xff]
    %v1120 = vld [vmem:[#allocation6 + $0xc18] sm:$0xff]
    %v1121 = vld [vmem:[#allocation6 + $0xc20] sm:$0xff]
    %v1122 = vld [vmem:[#allocation6 + $0xc28] sm:$0xff]
    %v1123 = vld [vmem:[#allocation6 + $0xc30] sm:$0xff]
    %v1124 = vld [vmem:[#allocation6 + $0xc38] sm:$0xff]
    %v1125 = vld [vmem:[#allocation6 + $0xc40] sm:$0xff]
    %v1126 = vld [vmem:[#allocation6 + $0xc48] sm:$0xff]
    %v1127 = vld [vmem:[#allocation6 + $0xc50] sm:$0xff]
    %v1128 = vld [vmem:[#allocation6 + $0xc58] sm:$0xff]
    %v1129 = vld [vmem:[#allocation6 + $0xc60] sm:$0xff]
    %v1130 = vld [vmem:[#allocation6 + $0xc68] sm:$0xff]
    %v1131 = vld [vmem:[#allocation6 + $0xc70] sm:$0xff]
    %v1132 = vld [vmem:[#allocation6 + $0xc78] sm:$0xff]
    %v1133 = vld [vmem:[#allocation6 + $0xc80] sm:$0xff]
    %v1134 = vld [vmem:[#allocation6 + $0xc88] sm:$0xff]
    %v1135 = vld [vmem:[#allocation6 + $0xc90] sm:$0xff]
    %v1136 = vld [vmem:[#allocation6 + $0xc98] sm:$0xff]
    %v1137 = vld [vmem:[#allocation6 + $0xca0] sm:$0xff]
    %v1138 = vld [vmem:[#allocation6 + $0xca8] sm:$0xff]
    %v1139 = vld [vmem:[#allocation6 + $0xcb0] sm:$0xff]
    %v1140 = vld [vmem:[#allocation6 + $0xcb8] sm:$0xff]
    %v1141 = vld [vmem:[#allocation6 + $0xcc0] sm:$0xff]
    %v1142 = vld [vmem:[#allocation6 + $0xcc8] sm:$0xff]
    %v1143 = vld [vmem:[#allocation6 + $0xcd0] sm:$0xff]
    %v1144 = vld [vmem:[#allocation6 + $0xcd8] sm:$0xff]
    %v1145 = vld [vmem:[#allocation6 + $0xce0] sm:$0xff]
    %v1146 = vld [vmem:[#allocation6 + $0xce8] sm:$0xff]
    %v1147 = vld [vmem:[#allocation6 + $0xcf0] sm:$0xff]
    %v1148 = vld [vmem:[#allocation6 + $0xcf8] sm:$0xff]
    %v1149 = vld [vmem:[#allocation6 + $0xd00] sm:$0xff]
    %v1150 = vld [vmem:[#allocation6 + $0xd08] sm:$0xff]
    %v1151 = vld [vmem:[#allocation6 + $0xd10] sm:$0xff]
    %v1152 = vld [vmem:[#allocation6 + $0xd18] sm:$0xff]
    %v1153 = vld [vmem:[#allocation6 + $0xd20] sm:$0xff]
    %v1154 = vld [vmem:[#allocation6 + $0xd28] sm:$0xff]
    %v1155 = vld [vmem:[#allocation6 + $0xd30] sm:$0xff]
    %v1156 = vld [vmem:[#allocation6 + $0xd38] sm:$0xff]
    %v1157 = vld [vmem:[#allocation6 + $0xd40] sm:$0xff]
    %v1158 = vld [vmem:[#allocation6 + $0xd48] sm:$0xff]
    %v1159 = vld [vmem:[#allocation6 + $0xd50] sm:$0xff]
    %v1160 = vld [vmem:[#allocation6 + $0xd58] sm:$0xff]
    %v1161 = vld [vmem:[#allocation6 + $0xd60] sm:$0xff]
    %v1162 = vld [vmem:[#allocation6 + $0xd68] sm:$0xff]
    %v1163 = vld [vmem:[#allocation6 + $0xd70] sm:$0xff]
    %v1164 = vld [vmem:[#allocation6 + $0xd78] sm:$0xff]
    %v1165 = vld [vmem:[#allocation6 + $0xd80] sm:$0xff]
    %v1166 = vld [vmem:[#allocation6 + $0xd88] sm:$0xff]
    %v1167 = vld [vmem:[#allocation6 + $0xd90] sm:$0xff]
    %v1168 = vld [vmem:[#allocation6 + $0xd98] sm:$0xff]
    %v1169 = vld [vmem:[#allocation6 + $0xda0] sm:$0xff]
    %v1170 = vld [vmem:[#allocation6 + $0xda8] sm:$0xff]
    %v1171 = vld [vmem:[#allocation6 + $0xdb0] sm:$0xff]
    %v1172 = vld [vmem:[#allocation6 + $0xdb8] sm:$0xff]
    %v1173 = vld [vmem:[#allocation6 + $0xdc0] sm:$0xff]
    %v1174 = vld [vmem:[#allocation6 + $0xdc8] sm:$0xff]
    %v1175 = vld [vmem:[#allocation6 + $0xdd0] sm:$0xff]
    %v1176 = vld [vmem:[#allocation6 + $0xdd8] sm:$0xff]
    %v1177 = vld [vmem:[#allocation6 + $0xde0] sm:$0xff]
    %v1178 = vld [vmem:[#allocation6 + $0xde8] sm:$0xff]
    %v1179 = vld [vmem:[#allocation6 + $0xdf0] sm:$0xff]
    %v1180 = vld [vmem:[#allocation6 + $0xdf8] sm:$0xff]
    %v1181 = vld [vmem:[#allocation6 + $0xe00] sm:$0xff]
    %v1182 = vld [vmem:[#allocation6 + $0xe08] sm:$0xff]
    %v1183 = vld [vmem:[#allocation6 + $0xe10] sm:$0xff]
    %v1184 = vld [vmem:[#allocation6 + $0xe18] sm:$0xff]
    %v1185 = vld [vmem:[#allocation6 + $0xe20] sm:$0xff]
    %v1186 = vld [vmem:[#allocation6 + $0xe28] sm:$0xff]
    %v1187 = vld [vmem:[#allocation6 + $0xe30] sm:$0xff]
    %v1188 = vld [vmem:[#allocation6 + $0xe38] sm:$0xff]
    %v1189 = vld [vmem:[#allocation6 + $0xe40] sm:$0xff]
    %v1190 = vld [vmem:[#allocation6 + $0xe48] sm:$0xff]
    %v1191 = vld [vmem:[#allocation6 + $0xe50] sm:$0xff]
    %v1192 = vld [vmem:[#allocation6 + $0xe58] sm:$0xff]
    %v1193 = vld [vmem:[#allocation6 + $0xe60] sm:$0xff]
    %v1194 = vld [vmem:[#allocation6 + $0xe68] sm:$0xff]
    %v1195 = vld [vmem:[#allocation6 + $0xe70] sm:$0xff]
    %v1196 = vld [vmem:[#allocation6 + $0xe78] sm:$0xff]
    %v1197 = vld [vmem:[#allocation6 + $0xe80] sm:$0xff]
    %v1198 = vld [vmem:[#allocation6 + $0xe88] sm:$0xff]
    %v1199 = vld [vmem:[#allocation6 + $0xe90] sm:$0xff]
    %v1200 = vld [vmem:[#allocation6 + $0xe98] sm:$0xff]
    %v1201 = vld [vmem:[#allocation6 + $0xea0] sm:$0xff]
    %v1202 = vld [vmem:[#allocation6 + $0xea8] sm:$0xff]
    %v1203 = vld [vmem:[#allocation6 + $0xeb0] sm:$0xff]
    %v1204 = vld [vmem:[#allocation6 + $0xeb8] sm:$0xff]
    %v1205 = vld [vmem:[#allocation6 + $0xec0] sm:$0xff]
    %v1206 = vld [vmem:[#allocation6 + $0xec8] sm:$0xff]
    %v1207 = vld [vmem:[#allocation6 + $0xed0] sm:$0xff]
    %v1208 = vld [vmem:[#allocation6 + $0xed8] sm:$0xff]
    %v1209 = vld [vmem:[#allocation6 + $0xee0] sm:$0xff]
    %v1210 = vld [vmem:[#allocation6 + $0xee8] sm:$0xff]
    %v1211 = vld [vmem:[#allocation6 + $0xef0] sm:$0xff]
    %v1212 = vld [vmem:[#allocation6 + $0xef8] sm:$0xff]
    %v1213 = vld [vmem:[#allocation6 + $0xf00] sm:$0xff]
    %v1214 = vld [vmem:[#allocation6 + $0xf08] sm:$0xff]
    %v1215 = vld [vmem:[#allocation6 + $0xf10] sm:$0xff]
    %v1216 = vld [vmem:[#allocation6 + $0xf18] sm:$0xff]
    %v1217 = vld [vmem:[#allocation6 + $0xf20] sm:$0xff]
    %v1218 = vld [vmem:[#allocation6 + $0xf28] sm:$0xff]
    %v1219 = vld [vmem:[#allocation6 + $0xf30] sm:$0xff]
    %v1220 = vld [vmem:[#allocation6 + $0xf38] sm:$0xff]
    %v1221 = vld [vmem:[#allocation6 + $0xf40] sm:$0xff]
    %v1222 = vld [vmem:[#allocation6 + $0xf48] sm:$0xff]
    %v1223 = vld [vmem:[#allocation6 + $0xf50] sm:$0xff]
    %v1224 = vld [vmem:[#allocation6 + $0xf58] sm:$0xff]
    %v1225 = vld [vmem:[#allocation6 + $0xf60] sm:$0xff]
    %v1226 = vld [vmem:[#allocation6 + $0xf68] sm:$0xff]
    %v1227 = vld [vmem:[#allocation6 + $0xf70] sm:$0xff]
    %v1228 = vld [vmem:[#allocation6 + $0xf78] sm:$0xff]
    %v1229 = vld [vmem:[#allocation6 + $0xf80] sm:$0xff]
    %v1230 = vld [vmem:[#allocation6 + $0xf88] sm:$0xff]
    %v1231 = vld [vmem:[#allocation6 + $0xf90] sm:$0xff]
    %v1232 = vld [vmem:[#allocation6 + $0xf98] sm:$0xff]
    %v1233 = vld [vmem:[#allocation6 + $0xfa0] sm:$0xff]
    %v1234 = vld [vmem:[#allocation6 + $0xfa8] sm:$0xff]
    %v1235 = vld [vmem:[#allocation6 + $0xfb0] sm:$0xff]
    %v1236 = vld [vmem:[#allocation6 + $0xfb8] sm:$0xff]
    %v1237 = vld [vmem:[#allocation6 + $0xfc0] sm:$0xff]
    %v1238 = vld [vmem:[#allocation6 + $0xfc8] sm:$0xff]
    %v1239 = vld [vmem:[#allocation6 + $0xfd0] sm:$0xff]
    %v1240 = vld [vmem:[#allocation6 + $0xfd8] sm:$0xff]
    %v1241 = vld [vmem:[#allocation6 + $0xfe0] sm:$0xff]
    %v1242 = vld [vmem:[#allocation6 + $0xfe8] sm:$0xff]
    %v1243 = vld [vmem:[#allocation6 + $0xff0] sm:$0xff]
    %v1244 = vld [vmem:[#allocation6 + $0xff8] sm:$0xff]
    %v1245 = vld [vmem:[#allocation7] sm:$0xff]
    %v1247 = vlaneseq
    %v1248 = vshrl.u32 %v1247, 7
    %v1249 = vsub.s32 0, %v1248
    %v1250 = vrot.slane %v1245, %v1249
    %v1251 = vlaneseq
    %v1252 = vshrl.u32 %v1251, 7
    %v1253 = vsub.s32 1, %v1252
    %v1254 = vrot.slane %v1245, %v1253
    %v1255 = vlaneseq
    %v1256 = vshrl.u32 %v1255, 7
    %v1257 = vsub.s32 2, %v1256
    %v1258 = vrot.slane %v1245, %v1257
    %v1259 = vlaneseq
    %v1260 = vshrl.u32 %v1259, 7
    %v1261 = vsub.s32 3, %v1260
    %v1262 = vrot.slane %v1245, %v1261
    %v1263 = vlaneseq
    %v1264 = vshrl.u32 %v1263, 7
    %v1265 = vsub.s32 4, %v1264
    %v1266 = vrot.slane %v1245, %v1265
    %v1267 = vlaneseq
    %v1268 = vshrl.u32 %v1267, 7
    %v1269 = vsub.s32 5, %v1268
    %v1270 = vrot.slane %v1245, %v1269
    %v1271 = vlaneseq
    %v1272 = vshrl.u32 %v1271, 7
    %v1273 = vsub.s32 6, %v1272
    %v1274 = vrot.slane %v1245, %v1273
    %v1275 = vlaneseq
    %v1276 = vshrl.u32 %v1275, 7
    %v1277 = vsub.s32 7, %v1276
    %v1278 = vrot.slane %v1245, %v1277
    %v1799 = vunpack.c.l.b16 %v733
    %v1800 = vunpack.c.h.b16 %v733
    %v1801 = vunpack.c.l.b16 %v734
    %v1802 = vunpack.c.h.b16 %v734
    %v1803 = vunpack.c.l.b16 %v735
    %v1804 = vunpack.c.h.b16 %v735
    %v1805 = vunpack.c.l.b16 %v736
    %v1806 = vunpack.c.h.b16 %v736
    %v1807 = vunpack.c.l.b16 %v737
    %v1808 = vunpack.c.h.b16 %v737
    %v1809 = vunpack.c.l.b16 %v738
    %v1810 = vunpack.c.h.b16 %v738
    %v1811 = vunpack.c.l.b16 %v739
    %v1812 = vunpack.c.h.b16 %v739
    %v1813 = vunpack.c.l.b16 %v740
    %v1814 = vunpack.c.h.b16 %v740
    %v1815 = vunpack.c.l.b16 %v741
    %v1816 = vunpack.c.h.b16 %v741
    %v1817 = vunpack.c.l.b16 %v742
    %v1818 = vunpack.c.h.b16 %v742
    %v1819 = vunpack.c.l.b16 %v743
    %v1820 = vunpack.c.h.b16 %v743
    %v1821 = vunpack.c.l.b16 %v744
    %v1822 = vunpack.c.h.b16 %v744
    %v1823 = vunpack.c.l.b16 %v745
    %v1824 = vunpack.c.h.b16 %v745
    %v1825 = vunpack.c.l.b16 %v746
    %v1826 = vunpack.c.h.b16 %v746
    %v1827 = vunpack.c.l.b16 %v747
    %v1828 = vunpack.c.h.b16 %v747
    %v1829 = vunpack.c.l.b16 %v748
    %v1830 = vunpack.c.h.b16 %v748
    %v1831 = vunpack.c.l.b16 %v749
    %v1832 = vunpack.c.h.b16 %v749
    %v1833 = vunpack.c.l.b16 %v750
    %v1834 = vunpack.c.h.b16 %v750
    %v1835 = vunpack.c.l.b16 %v751
    %v1836 = vunpack.c.h.b16 %v751
    %v1837 = vunpack.c.l.b16 %v752
    %v1838 = vunpack.c.h.b16 %v752
    %v1839 = vunpack.c.l.b16 %v753
    %v1840 = vunpack.c.h.b16 %v753
    %v1841 = vunpack.c.l.b16 %v754
    %v1842 = vunpack.c.h.b16 %v754
    %v1843 = vunpack.c.l.b16 %v755
    %v1844 = vunpack.c.h.b16 %v755
    %v1845 = vunpack.c.l.b16 %v756
    %v1846 = vunpack.c.h.b16 %v756
    %v1847 = vunpack.c.l.b16 %v757
    %v1848 = vunpack.c.h.b16 %v757
    %v1849 = vunpack.c.l.b16 %v758
    %v1850 = vunpack.c.h.b16 %v758
    %v1851 = vunpack.c.l.b16 %v759
    %v1852 = vunpack.c.h.b16 %v759
    %v1853 = vunpack.c.l.b16 %v760
    %v1854 = vunpack.c.h.b16 %v760
    %v1855 = vunpack.c.l.b16 %v761
    %v1856 = vunpack.c.h.b16 %v761
    %v1857 = vunpack.c.l.b16 %v762
    %v1858 = vunpack.c.h.b16 %v762
    %v1859 = vunpack.c.l.b16 %v763
    %v1860 = vunpack.c.h.b16 %v763
    %v1861 = vunpack.c.l.b16 %v764
    %v1862 = vunpack.c.h.b16 %v764
    %v1863 = vunpack.c.l.b16 %v765
    %v1864 = vunpack.c.h.b16 %v765
    %v1865 = vunpack.c.l.b16 %v766
    %v1866 = vunpack.c.h.b16 %v766
    %v1867 = vunpack.c.l.b16 %v767
    %v1868 = vunpack.c.h.b16 %v767
    %v1869 = vunpack.c.l.b16 %v768
    %v1870 = vunpack.c.h.b16 %v768
    %v1871 = vunpack.c.l.b16 %v769
    %v1872 = vunpack.c.h.b16 %v769
    %v1873 = vunpack.c.l.b16 %v770
    %v1874 = vunpack.c.h.b16 %v770
    %v1875 = vunpack.c.l.b16 %v771
    %v1876 = vunpack.c.h.b16 %v771
    %v1877 = vunpack.c.l.b16 %v772
    %v1878 = vunpack.c.h.b16 %v772
    %v1879 = vunpack.c.l.b16 %v773
    %v1880 = vunpack.c.h.b16 %v773
    %v1881 = vunpack.c.l.b16 %v774
    %v1882 = vunpack.c.h.b16 %v774
    %v1883 = vunpack.c.l.b16 %v775
    %v1884 = vunpack.c.h.b16 %v775
    %v1885 = vunpack.c.l.b16 %v776
    %v1886 = vunpack.c.h.b16 %v776
    %v1887 = vunpack.c.l.b16 %v777
    %v1888 = vunpack.c.h.b16 %v777
    %v1889 = vunpack.c.l.b16 %v778
    %v1890 = vunpack.c.h.b16 %v778
    %v1891 = vunpack.c.l.b16 %v779
    %v1892 = vunpack.c.h.b16 %v779
    %v1893 = vunpack.c.l.b16 %v780
    %v1894 = vunpack.c.h.b16 %v780
    %v1895 = vunpack.c.l.b16 %v781
    %v1896 = vunpack.c.h.b16 %v781
    %v1897 = vunpack.c.l.b16 %v782
    %v1898 = vunpack.c.h.b16 %v782
    %v1899 = vunpack.c.l.b16 %v783
    %v1900 = vunpack.c.h.b16 %v783
    %v1901 = vunpack.c.l.b16 %v784
    %v1902 = vunpack.c.h.b16 %v784
    %v1903 = vunpack.c.l.b16 %v785
    %v1904 = vunpack.c.h.b16 %v785
    %v1905 = vunpack.c.l.b16 %v786
    %v1906 = vunpack.c.h.b16 %v786
    %v1907 = vunpack.c.l.b16 %v787
    %v1908 = vunpack.c.h.b16 %v787
    %v1909 = vunpack.c.l.b16 %v788
    %v1910 = vunpack.c.h.b16 %v788
    %v1911 = vunpack.c.l.b16 %v789
    %v1912 = vunpack.c.h.b16 %v789
    %v1913 = vunpack.c.l.b16 %v790
    %v1914 = vunpack.c.h.b16 %v790
    %v1915 = vunpack.c.l.b16 %v791
    %v1916 = vunpack.c.h.b16 %v791
    %v1917 = vunpack.c.l.b16 %v792
    %v1918 = vunpack.c.h.b16 %v792
    %v1919 = vunpack.c.l.b16 %v793
    %v1920 = vunpack.c.h.b16 %v793
    %v1921 = vunpack.c.l.b16 %v794
    %v1922 = vunpack.c.h.b16 %v794
    %v1923 = vunpack.c.l.b16 %v795
    %v1924 = vunpack.c.h.b16 %v795
    %v1925 = vunpack.c.l.b16 %v796
    %v1926 = vunpack.c.h.b16 %v796
    %v1927 = vunpack.c.l.b16 %v797
    %v1928 = vunpack.c.h.b16 %v797
    %v1929 = vunpack.c.l.b16 %v798
    %v1930 = vunpack.c.h.b16 %v798
    %v1931 = vunpack.c.l.b16 %v799
    %v1932 = vunpack.c.h.b16 %v799
    %v1933 = vunpack.c.l.b16 %v800
    %v1934 = vunpack.c.h.b16 %v800
    %v1935 = vunpack.c.l.b16 %v801
    %v1936 = vunpack.c.h.b16 %v801
    %v1937 = vunpack.c.l.b16 %v802
    %v1938 = vunpack.c.h.b16 %v802
    %v1939 = vunpack.c.l.b16 %v803
    %v1940 = vunpack.c.h.b16 %v803
    %v1941 = vunpack.c.l.b16 %v804
    %v1942 = vunpack.c.h.b16 %v804
    %v1943 = vunpack.c.l.b16 %v805
    %v1944 = vunpack.c.h.b16 %v805
    %v1945 = vunpack.c.l.b16 %v806
    %v1946 = vunpack.c.h.b16 %v806
    %v1947 = vunpack.c.l.b16 %v807
    %v1948 = vunpack.c.h.b16 %v807
    %v1949 = vunpack.c.l.b16 %v808
    %v1950 = vunpack.c.h.b16 %v808
    %v1951 = vunpack.c.l.b16 %v809
    %v1952 = vunpack.c.h.b16 %v809
    %v1953 = vunpack.c.l.b16 %v810
    %v1954 = vunpack.c.h.b16 %v810
    %v1955 = vunpack.c.l.b16 %v811
    %v1956 = vunpack.c.h.b16 %v811
    %v1957 = vunpack.c.l.b16 %v812
    %v1958 = vunpack.c.h.b16 %v812
    %v1959 = vunpack.c.l.b16 %v813
    %v1960 = vunpack.c.h.b16 %v813
    %v1961 = vunpack.c.l.b16 %v814
    %v1962 = vunpack.c.h.b16 %v814
    %v1963 = vunpack.c.l.b16 %v815
    %v1964 = vunpack.c.h.b16 %v815
    %v1965 = vunpack.c.l.b16 %v816
    %v1966 = vunpack.c.h.b16 %v816
    %v1967 = vunpack.c.l.b16 %v817
    %v1968 = vunpack.c.h.b16 %v817
    %v1969 = vunpack.c.l.b16 %v818
    %v1970 = vunpack.c.h.b16 %v818
    %v1971 = vunpack.c.l.b16 %v819
    %v1972 = vunpack.c.h.b16 %v819
    %v1973 = vunpack.c.l.b16 %v820
    %v1974 = vunpack.c.h.b16 %v820
    %v1975 = vunpack.c.l.b16 %v821
    %v1976 = vunpack.c.h.b16 %v821
    %v1977 = vunpack.c.l.b16 %v822
    %v1978 = vunpack.c.h.b16 %v822
    %v1979 = vunpack.c.l.b16 %v823
    %v1980 = vunpack.c.h.b16 %v823
    %v1981 = vunpack.c.l.b16 %v824
    %v1982 = vunpack.c.h.b16 %v824
    %v1983 = vunpack.c.l.b16 %v825
    %v1984 = vunpack.c.h.b16 %v825
    %v1985 = vunpack.c.l.b16 %v826
    %v1986 = vunpack.c.h.b16 %v826
    %v1987 = vunpack.c.l.b16 %v827
    %v1988 = vunpack.c.h.b16 %v827
    %v1989 = vunpack.c.l.b16 %v828
    %v1990 = vunpack.c.h.b16 %v828
    %v1991 = vunpack.c.l.b16 %v829
    %v1992 = vunpack.c.h.b16 %v829
    %v1993 = vunpack.c.l.b16 %v830
    %v1994 = vunpack.c.h.b16 %v830
    %v1995 = vunpack.c.l.b16 %v831
    %v1996 = vunpack.c.h.b16 %v831
    %v1997 = vunpack.c.l.b16 %v832
    %v1998 = vunpack.c.h.b16 %v832
    %v1999 = vunpack.c.l.b16 %v833
    %v2000 = vunpack.c.h.b16 %v833
    %v2001 = vunpack.c.l.b16 %v834
    %v2002 = vunpack.c.h.b16 %v834
    %v2003 = vunpack.c.l.b16 %v835
    %v2004 = vunpack.c.h.b16 %v835
    %v2005 = vunpack.c.l.b16 %v836
    %v2006 = vunpack.c.h.b16 %v836
    %v2007 = vunpack.c.l.b16 %v837
    %v2008 = vunpack.c.h.b16 %v837
    %v2009 = vunpack.c.l.b16 %v838
    %v2010 = vunpack.c.h.b16 %v838
    %v2011 = vunpack.c.l.b16 %v839
    %v2012 = vunpack.c.h.b16 %v839
    %v2013 = vunpack.c.l.b16 %v840
    %v2014 = vunpack.c.h.b16 %v840
    %v2015 = vunpack.c.l.b16 %v841
    %v2016 = vunpack.c.h.b16 %v841
    %v2017 = vunpack.c.l.b16 %v842
    %v2018 = vunpack.c.h.b16 %v842
    %v2019 = vunpack.c.l.b16 %v843
    %v2020 = vunpack.c.h.b16 %v843
    %v2021 = vunpack.c.l.b16 %v844
    %v2022 = vunpack.c.h.b16 %v844
    %v2023 = vunpack.c.l.b16 %v845
    %v2024 = vunpack.c.h.b16 %v845
    %v2025 = vunpack.c.l.b16 %v846
    %v2026 = vunpack.c.h.b16 %v846
    %v2027 = vunpack.c.l.b16 %v847
    %v2028 = vunpack.c.h.b16 %v847
    %v2029 = vunpack.c.l.b16 %v848
    %v2030 = vunpack.c.h.b16 %v848
    %v2031 = vunpack.c.l.b16 %v849
    %v2032 = vunpack.c.h.b16 %v849
    %v2033 = vunpack.c.l.b16 %v850
    %v2034 = vunpack.c.h.b16 %v850
    %v2035 = vunpack.c.l.b16 %v851
    %v2036 = vunpack.c.h.b16 %v851
    %v2037 = vunpack.c.l.b16 %v852
    %v2038 = vunpack.c.h.b16 %v852
    %v2039 = vunpack.c.l.b16 %v853
    %v2040 = vunpack.c.h.b16 %v853
    %v2041 = vunpack.c.l.b16 %v854
    %v2042 = vunpack.c.h.b16 %v854
    %v2043 = vunpack.c.l.b16 %v855
    %v2044 = vunpack.c.h.b16 %v855
    %v2045 = vunpack.c.l.b16 %v856
    %v2046 = vunpack.c.h.b16 %v856
    %v2047 = vunpack.c.l.b16 %v857
    %v2048 = vunpack.c.h.b16 %v857
    %v2049 = vunpack.c.l.b16 %v858
    %v2050 = vunpack.c.h.b16 %v858
    %v2051 = vunpack.c.l.b16 %v859
    %v2052 = vunpack.c.h.b16 %v859
    %v2053 = vunpack.c.l.b16 %v860
    %v2054 = vunpack.c.h.b16 %v860
    %v2055 = vunpack.c.l.b16 %v861
    %v2056 = vunpack.c.h.b16 %v861
    %v2057 = vunpack.c.l.b16 %v862
    %v2058 = vunpack.c.h.b16 %v862
    %v2059 = vunpack.c.l.b16 %v863
    %v2060 = vunpack.c.h.b16 %v863
    %v2061 = vunpack.c.l.b16 %v864
    %v2062 = vunpack.c.h.b16 %v864
    %v2063 = vunpack.c.l.b16 %v865
    %v2064 = vunpack.c.h.b16 %v865
    %v2065 = vunpack.c.l.b16 %v866
    %v2066 = vunpack.c.h.b16 %v866
    %v2067 = vunpack.c.l.b16 %v867
    %v2068 = vunpack.c.h.b16 %v867
    %v2069 = vunpack.c.l.b16 %v868
    %v2070 = vunpack.c.h.b16 %v868
    %v2071 = vunpack.c.l.b16 %v869
    %v2072 = vunpack.c.h.b16 %v869
    %v2073 = vunpack.c.l.b16 %v870
    %v2074 = vunpack.c.h.b16 %v870
    %v2075 = vunpack.c.l.b16 %v871
    %v2076 = vunpack.c.h.b16 %v871
    %v2077 = vunpack.c.l.b16 %v872
    %v2078 = vunpack.c.h.b16 %v872
    %v2079 = vunpack.c.l.b16 %v873
    %v2080 = vunpack.c.h.b16 %v873
    %v2081 = vunpack.c.l.b16 %v874
    %v2082 = vunpack.c.h.b16 %v874
    %v2083 = vunpack.c.l.b16 %v875
    %v2084 = vunpack.c.h.b16 %v875
    %v2085 = vunpack.c.l.b16 %v876
    %v2086 = vunpack.c.h.b16 %v876
    %v2087 = vunpack.c.l.b16 %v877
    %v2088 = vunpack.c.h.b16 %v877
    %v2089 = vunpack.c.l.b16 %v878
    %v2090 = vunpack.c.h.b16 %v878
    %v2091 = vunpack.c.l.b16 %v879
    %v2092 = vunpack.c.h.b16 %v879
    %v2093 = vunpack.c.l.b16 %v880
    %v2094 = vunpack.c.h.b16 %v880
    %v2095 = vunpack.c.l.b16 %v881
    %v2096 = vunpack.c.h.b16 %v881
    %v2097 = vunpack.c.l.b16 %v882
    %v2098 = vunpack.c.h.b16 %v882
    %v2099 = vunpack.c.l.b16 %v883
    %v2100 = vunpack.c.h.b16 %v883
    %v2101 = vunpack.c.l.b16 %v884
    %v2102 = vunpack.c.h.b16 %v884
    %v2103 = vunpack.c.l.b16 %v885
    %v2104 = vunpack.c.h.b16 %v885
    %v2105 = vunpack.c.l.b16 %v886
    %v2106 = vunpack.c.h.b16 %v886
    %v2107 = vunpack.c.l.b16 %v887
    %v2108 = vunpack.c.h.b16 %v887
    %v2109 = vunpack.c.l.b16 %v888
    %v2110 = vunpack.c.h.b16 %v888
    %v2111 = vunpack.c.l.b16 %v889
    %v2112 = vunpack.c.h.b16 %v889
    %v2113 = vunpack.c.l.b16 %v890
    %v2114 = vunpack.c.h.b16 %v890
    %v2115 = vunpack.c.l.b16 %v891
    %v2116 = vunpack.c.h.b16 %v891
    %v2117 = vunpack.c.l.b16 %v892
    %v2118 = vunpack.c.h.b16 %v892
    %v2119 = vunpack.c.l.b16 %v893
    %v2120 = vunpack.c.h.b16 %v893
    %v2121 = vunpack.c.l.b16 %v894
    %v2122 = vunpack.c.h.b16 %v894
    %v2123 = vunpack.c.l.b16 %v895
    %v2124 = vunpack.c.h.b16 %v895
    %v2125 = vunpack.c.l.b16 %v896
    %v2126 = vunpack.c.h.b16 %v896
    %v2127 = vunpack.c.l.b16 %v897
    %v2128 = vunpack.c.h.b16 %v897
    %v2129 = vunpack.c.l.b16 %v898
    %v2130 = vunpack.c.h.b16 %v898
    %v2131 = vunpack.c.l.b16 %v899
    %v2132 = vunpack.c.h.b16 %v899
    %v2133 = vunpack.c.l.b16 %v900
    %v2134 = vunpack.c.h.b16 %v900
    %v2135 = vunpack.c.l.b16 %v901
    %v2136 = vunpack.c.h.b16 %v901
    %v2137 = vunpack.c.l.b16 %v902
    %v2138 = vunpack.c.h.b16 %v902
    %v2139 = vunpack.c.l.b16 %v903
    %v2140 = vunpack.c.h.b16 %v903
    %v2141 = vunpack.c.l.b16 %v904
    %v2142 = vunpack.c.h.b16 %v904
    %v2143 = vunpack.c.l.b16 %v905
    %v2144 = vunpack.c.h.b16 %v905
    %v2145 = vunpack.c.l.b16 %v906
    %v2146 = vunpack.c.h.b16 %v906
    %v2147 = vunpack.c.l.b16 %v907
    %v2148 = vunpack.c.h.b16 %v907
    %v2149 = vunpack.c.l.b16 %v908
    %v2150 = vunpack.c.h.b16 %v908
    %v2151 = vunpack.c.l.b16 %v909
    %v2152 = vunpack.c.h.b16 %v909
    %v2153 = vunpack.c.l.b16 %v910
    %v2154 = vunpack.c.h.b16 %v910
    %v2155 = vunpack.c.l.b16 %v911
    %v2156 = vunpack.c.h.b16 %v911
    %v2157 = vunpack.c.l.b16 %v912
    %v2158 = vunpack.c.h.b16 %v912
    %v2159 = vunpack.c.l.b16 %v913
    %v2160 = vunpack.c.h.b16 %v913
    %v2161 = vunpack.c.l.b16 %v914
    %v2162 = vunpack.c.h.b16 %v914
    %v2163 = vunpack.c.l.b16 %v915
    %v2164 = vunpack.c.h.b16 %v915
    %v2165 = vunpack.c.l.b16 %v916
    %v2166 = vunpack.c.h.b16 %v916
    %v2167 = vunpack.c.l.b16 %v917
    %v2168 = vunpack.c.h.b16 %v917
    %v2169 = vunpack.c.l.b16 %v918
    %v2170 = vunpack.c.h.b16 %v918
    %v2171 = vunpack.c.l.b16 %v919
    %v2172 = vunpack.c.h.b16 %v919
    %v2173 = vunpack.c.l.b16 %v920
    %v2174 = vunpack.c.h.b16 %v920
    %v2175 = vunpack.c.l.b16 %v921
    %v2176 = vunpack.c.h.b16 %v921
    %v2177 = vunpack.c.l.b16 %v922
    %v2178 = vunpack.c.h.b16 %v922
    %v2179 = vunpack.c.l.b16 %v923
    %v2180 = vunpack.c.h.b16 %v923
    %v2181 = vunpack.c.l.b16 %v924
    %v2182 = vunpack.c.h.b16 %v924
    %v2183 = vunpack.c.l.b16 %v925
    %v2184 = vunpack.c.h.b16 %v925
    %v2185 = vunpack.c.l.b16 %v926
    %v2186 = vunpack.c.h.b16 %v926
    %v2187 = vunpack.c.l.b16 %v927
    %v2188 = vunpack.c.h.b16 %v927
    %v2189 = vunpack.c.l.b16 %v928
    %v2190 = vunpack.c.h.b16 %v928
    %v2191 = vunpack.c.l.b16 %v929
    %v2192 = vunpack.c.h.b16 %v929
    %v2193 = vunpack.c.l.b16 %v930
    %v2194 = vunpack.c.h.b16 %v930
    %v2195 = vunpack.c.l.b16 %v931
    %v2196 = vunpack.c.h.b16 %v931
    %v2197 = vunpack.c.l.b16 %v932
    %v2198 = vunpack.c.h.b16 %v932
    %v2199 = vunpack.c.l.b16 %v933
    %v2200 = vunpack.c.h.b16 %v933
    %v2201 = vunpack.c.l.b16 %v934
    %v2202 = vunpack.c.h.b16 %v934
    %v2203 = vunpack.c.l.b16 %v935
    %v2204 = vunpack.c.h.b16 %v935
    %v2205 = vunpack.c.l.b16 %v936
    %v2206 = vunpack.c.h.b16 %v936
    %v2207 = vunpack.c.l.b16 %v937
    %v2208 = vunpack.c.h.b16 %v937
    %v2209 = vunpack.c.l.b16 %v938
    %v2210 = vunpack.c.h.b16 %v938
    %v2211 = vunpack.c.l.b16 %v939
    %v2212 = vunpack.c.h.b16 %v939
    %v2213 = vunpack.c.l.b16 %v940
    %v2214 = vunpack.c.h.b16 %v940
    %v2215 = vunpack.c.l.b16 %v941
    %v2216 = vunpack.c.h.b16 %v941
    %v2217 = vunpack.c.l.b16 %v942
    %v2218 = vunpack.c.h.b16 %v942
    %v2219 = vunpack.c.l.b16 %v943
    %v2220 = vunpack.c.h.b16 %v943
    %v2221 = vunpack.c.l.b16 %v944
    %v2222 = vunpack.c.h.b16 %v944
    %v2223 = vunpack.c.l.b16 %v945
    %v2224 = vunpack.c.h.b16 %v945
    %v2225 = vunpack.c.l.b16 %v946
    %v2226 = vunpack.c.h.b16 %v946
    %v2227 = vunpack.c.l.b16 %v947
    %v2228 = vunpack.c.h.b16 %v947
    %v2229 = vunpack.c.l.b16 %v948
    %v2230 = vunpack.c.h.b16 %v948
    %v2231 = vunpack.c.l.b16 %v949
    %v2232 = vunpack.c.h.b16 %v949
    %v2233 = vunpack.c.l.b16 %v950
    %v2234 = vunpack.c.h.b16 %v950
    %v2235 = vunpack.c.l.b16 %v951
    %v2236 = vunpack.c.h.b16 %v951
    %v2237 = vunpack.c.l.b16 %v952
    %v2238 = vunpack.c.h.b16 %v952
    %v2239 = vunpack.c.l.b16 %v953
    %v2240 = vunpack.c.h.b16 %v953
    %v2241 = vunpack.c.l.b16 %v954
    %v2242 = vunpack.c.h.b16 %v954
    %v2243 = vunpack.c.l.b16 %v955
    %v2244 = vunpack.c.h.b16 %v955
    %v2245 = vunpack.c.l.b16 %v956
    %v2246 = vunpack.c.h.b16 %v956
    %v2247 = vunpack.c.l.b16 %v957
    %v2248 = vunpack.c.h.b16 %v957
    %v2249 = vunpack.c.l.b16 %v958
    %v2250 = vunpack.c.h.b16 %v958
    %v2251 = vunpack.c.l.b16 %v959
    %v2252 = vunpack.c.h.b16 %v959
    %v2253 = vunpack.c.l.b16 %v960
    %v2254 = vunpack.c.h.b16 %v960
    %v2255 = vunpack.c.l.b16 %v961
    %v2256 = vunpack.c.h.b16 %v961
    %v2257 = vunpack.c.l.b16 %v962
    %v2258 = vunpack.c.h.b16 %v962
    %v2259 = vunpack.c.l.b16 %v963
    %v2260 = vunpack.c.h.b16 %v963
    %v2261 = vunpack.c.l.b16 %v964
    %v2262 = vunpack.c.h.b16 %v964
    %v2263 = vunpack.c.l.b16 %v965
    %v2264 = vunpack.c.h.b16 %v965
    %v2265 = vunpack.c.l.b16 %v966
    %v2266 = vunpack.c.h.b16 %v966
    %v2267 = vunpack.c.l.b16 %v967
    %v2268 = vunpack.c.h.b16 %v967
    %v2269 = vunpack.c.l.b16 %v968
    %v2270 = vunpack.c.h.b16 %v968
    %v2271 = vunpack.c.l.b16 %v969
    %v2272 = vunpack.c.h.b16 %v969
    %v2273 = vunpack.c.l.b16 %v970
    %v2274 = vunpack.c.h.b16 %v970
    %v2275 = vunpack.c.l.b16 %v971
    %v2276 = vunpack.c.h.b16 %v971
    %v2277 = vunpack.c.l.b16 %v972
    %v2278 = vunpack.c.h.b16 %v972
    %v2279 = vunpack.c.l.b16 %v973
    %v2280 = vunpack.c.h.b16 %v973
    %v2281 = vunpack.c.l.b16 %v974
    %v2282 = vunpack.c.h.b16 %v974
    %v2283 = vunpack.c.l.b16 %v975
    %v2284 = vunpack.c.h.b16 %v975
    %v2285 = vunpack.c.l.b16 %v976
    %v2286 = vunpack.c.h.b16 %v976
    %v2287 = vunpack.c.l.b16 %v977
    %v2288 = vunpack.c.h.b16 %v977
    %v2289 = vunpack.c.l.b16 %v978
    %v2290 = vunpack.c.h.b16 %v978
    %v2291 = vunpack.c.l.b16 %v979
    %v2292 = vunpack.c.h.b16 %v979
    %v2293 = vunpack.c.l.b16 %v980
    %v2294 = vunpack.c.h.b16 %v980
    %v2295 = vunpack.c.l.b16 %v981
    %v2296 = vunpack.c.h.b16 %v981
    %v2297 = vunpack.c.l.b16 %v982
    %v2298 = vunpack.c.h.b16 %v982
    %v2299 = vunpack.c.l.b16 %v983
    %v2300 = vunpack.c.h.b16 %v983
    %v2301 = vunpack.c.l.b16 %v984
    %v2302 = vunpack.c.h.b16 %v984
    %v2303 = vunpack.c.l.b16 %v985
    %v2304 = vunpack.c.h.b16 %v985
    %v2305 = vunpack.c.l.b16 %v986
    %v2306 = vunpack.c.h.b16 %v986
    %v2307 = vunpack.c.l.b16 %v987
    %v2308 = vunpack.c.h.b16 %v987
    %v2309 = vunpack.c.l.b16 %v988
    %v2310 = vunpack.c.h.b16 %v988
    %v2311 = vunpack.c.l.b16 %v989
    %v2312 = vunpack.c.h.b16 %v989
    %v2313 = vunpack.c.l.b16 %v990
    %v2314 = vunpack.c.h.b16 %v990
    %v2315 = vunpack.c.l.b16 %v991
    %v2316 = vunpack.c.h.b16 %v991
    %v2317 = vunpack.c.l.b16 %v992
    %v2318 = vunpack.c.h.b16 %v992
    %v2319 = vunpack.c.l.b16 %v993
    %v2320 = vunpack.c.h.b16 %v993
    %v2321 = vunpack.c.l.b16 %v994
    %v2322 = vunpack.c.h.b16 %v994
    %v2323 = vunpack.c.l.b16 %v995
    %v2324 = vunpack.c.h.b16 %v995
    %v2325 = vunpack.c.l.b16 %v996
    %v2326 = vunpack.c.h.b16 %v996
    %v2327 = vunpack.c.l.b16 %v997
    %v2328 = vunpack.c.h.b16 %v997
    %v2329 = vunpack.c.l.b16 %v998
    %v2330 = vunpack.c.h.b16 %v998
    %v2331 = vunpack.c.l.b16 %v999
    %v2332 = vunpack.c.h.b16 %v999
    %v2333 = vunpack.c.l.b16 %v1000
    %v2334 = vunpack.c.h.b16 %v1000
    %v2335 = vunpack.c.l.b16 %v1001
    %v2336 = vunpack.c.h.b16 %v1001
    %v2337 = vunpack.c.l.b16 %v1002
    %v2338 = vunpack.c.h.b16 %v1002
    %v2339 = vunpack.c.l.b16 %v1003
    %v2340 = vunpack.c.h.b16 %v1003
    %v2341 = vunpack.c.l.b16 %v1004
    %v2342 = vunpack.c.h.b16 %v1004
    %v2343 = vunpack.c.l.b16 %v1005
    %v2344 = vunpack.c.h.b16 %v1005
    %v2345 = vunpack.c.l.b16 %v1006
    %v2346 = vunpack.c.h.b16 %v1006
    %v2347 = vunpack.c.l.b16 %v1007
    %v2348 = vunpack.c.h.b16 %v1007
    %v2349 = vunpack.c.l.b16 %v1008
    %v2350 = vunpack.c.h.b16 %v1008
    %v2351 = vunpack.c.l.b16 %v1009
    %v2352 = vunpack.c.h.b16 %v1009
    %v2353 = vunpack.c.l.b16 %v1010
    %v2354 = vunpack.c.h.b16 %v1010
    %v2355 = vunpack.c.l.b16 %v1011
    %v2356 = vunpack.c.h.b16 %v1011
    %v2357 = vunpack.c.l.b16 %v1012
    %v2358 = vunpack.c.h.b16 %v1012
    %v2359 = vunpack.c.l.b16 %v1013
    %v2360 = vunpack.c.h.b16 %v1013
    %v2361 = vunpack.c.l.b16 %v1014
    %v2362 = vunpack.c.h.b16 %v1014
    %v2363 = vunpack.c.l.b16 %v1015
    %v2364 = vunpack.c.h.b16 %v1015
    %v2365 = vunpack.c.l.b16 %v1016
    %v2366 = vunpack.c.h.b16 %v1016
    %v2367 = vunpack.c.l.b16 %v1017
    %v2368 = vunpack.c.h.b16 %v1017
    %v2369 = vunpack.c.l.b16 %v1018
    %v2370 = vunpack.c.h.b16 %v1018
    %v2371 = vunpack.c.l.b16 %v1019
    %v2372 = vunpack.c.h.b16 %v1019
    %v2373 = vunpack.c.l.b16 %v1020
    %v2374 = vunpack.c.h.b16 %v1020
    %v2375 = vunpack.c.l.b16 %v1021
    %v2376 = vunpack.c.h.b16 %v1021
    %v2377 = vunpack.c.l.b16 %v1022
    %v2378 = vunpack.c.h.b16 %v1022
    %v2379 = vunpack.c.l.b16 %v1023
    %v2380 = vunpack.c.h.b16 %v1023
    %v2381 = vunpack.c.l.b16 %v1024
    %v2382 = vunpack.c.h.b16 %v1024
    %v2383 = vunpack.c.l.b16 %v1025
    %v2384 = vunpack.c.h.b16 %v1025
    %v2385 = vunpack.c.l.b16 %v1026
    %v2386 = vunpack.c.h.b16 %v1026
    %v2387 = vunpack.c.l.b16 %v1027
    %v2388 = vunpack.c.h.b16 %v1027
    %v2389 = vunpack.c.l.b16 %v1028
    %v2390 = vunpack.c.h.b16 %v1028
    %v2391 = vunpack.c.l.b16 %v1029
    %v2392 = vunpack.c.h.b16 %v1029
    %v2393 = vunpack.c.l.b16 %v1030
    %v2394 = vunpack.c.h.b16 %v1030
    %v2395 = vunpack.c.l.b16 %v1031
    %v2396 = vunpack.c.h.b16 %v1031
    %v2397 = vunpack.c.l.b16 %v1032
    %v2398 = vunpack.c.h.b16 %v1032
    %v2399 = vunpack.c.l.b16 %v1033
    %v2400 = vunpack.c.h.b16 %v1033
    %v2401 = vunpack.c.l.b16 %v1034
    %v2402 = vunpack.c.h.b16 %v1034
    %v2403 = vunpack.c.l.b16 %v1035
    %v2404 = vunpack.c.h.b16 %v1035
    %v2405 = vunpack.c.l.b16 %v1036
    %v2406 = vunpack.c.h.b16 %v1036
    %v2407 = vunpack.c.l.b16 %v1037
    %v2408 = vunpack.c.h.b16 %v1037
    %v2409 = vunpack.c.l.b16 %v1038
    %v2410 = vunpack.c.h.b16 %v1038
    %v2411 = vunpack.c.l.b16 %v1039
    %v2412 = vunpack.c.h.b16 %v1039
    %v2413 = vunpack.c.l.b16 %v1040
    %v2414 = vunpack.c.h.b16 %v1040
    %v2415 = vunpack.c.l.b16 %v1041
    %v2416 = vunpack.c.h.b16 %v1041
    %v2417 = vunpack.c.l.b16 %v1042
    %v2418 = vunpack.c.h.b16 %v1042
    %v2419 = vunpack.c.l.b16 %v1043
    %v2420 = vunpack.c.h.b16 %v1043
    %v2421 = vunpack.c.l.b16 %v1044
    %v2422 = vunpack.c.h.b16 %v1044
    %v2423 = vunpack.c.l.b16 %v1045
    %v2424 = vunpack.c.h.b16 %v1045
    %v2425 = vunpack.c.l.b16 %v1046
    %v2426 = vunpack.c.h.b16 %v1046
    %v2427 = vunpack.c.l.b16 %v1047
    %v2428 = vunpack.c.h.b16 %v1047
    %v2429 = vunpack.c.l.b16 %v1048
    %v2430 = vunpack.c.h.b16 %v1048
    %v2431 = vunpack.c.l.b16 %v1049
    %v2432 = vunpack.c.h.b16 %v1049
    %v2433 = vunpack.c.l.b16 %v1050
    %v2434 = vunpack.c.h.b16 %v1050
    %v2435 = vunpack.c.l.b16 %v1051
    %v2436 = vunpack.c.h.b16 %v1051
    %v2437 = vunpack.c.l.b16 %v1052
    %v2438 = vunpack.c.h.b16 %v1052
    %v2439 = vunpack.c.l.b16 %v1053
    %v2440 = vunpack.c.h.b16 %v1053
    %v2441 = vunpack.c.l.b16 %v1054
    %v2442 = vunpack.c.h.b16 %v1054
    %v2443 = vunpack.c.l.b16 %v1055
    %v2444 = vunpack.c.h.b16 %v1055
    %v2445 = vunpack.c.l.b16 %v1056
    %v2446 = vunpack.c.h.b16 %v1056
    %v2447 = vunpack.c.l.b16 %v1057
    %v2448 = vunpack.c.h.b16 %v1057
    %v2449 = vunpack.c.l.b16 %v1058
    %v2450 = vunpack.c.h.b16 %v1058
    %v2451 = vunpack.c.l.b16 %v1059
    %v2452 = vunpack.c.h.b16 %v1059
    %v2453 = vunpack.c.l.b16 %v1060
    %v2454 = vunpack.c.h.b16 %v1060
    %v2455 = vunpack.c.l.b16 %v1061
    %v2456 = vunpack.c.h.b16 %v1061
    %v2457 = vunpack.c.l.b16 %v1062
    %v2458 = vunpack.c.h.b16 %v1062
    %v2459 = vunpack.c.l.b16 %v1063
    %v2460 = vunpack.c.h.b16 %v1063
    %v2461 = vunpack.c.l.b16 %v1064
    %v2462 = vunpack.c.h.b16 %v1064
    %v2463 = vunpack.c.l.b16 %v1065
    %v2464 = vunpack.c.h.b16 %v1065
    %v2465 = vunpack.c.l.b16 %v1066
    %v2466 = vunpack.c.h.b16 %v1066
    %v2467 = vunpack.c.l.b16 %v1067
    %v2468 = vunpack.c.h.b16 %v1067
    %v2469 = vunpack.c.l.b16 %v1068
    %v2470 = vunpack.c.h.b16 %v1068
    %v2471 = vunpack.c.l.b16 %v1069
    %v2472 = vunpack.c.h.b16 %v1069
    %v2473 = vunpack.c.l.b16 %v1070
    %v2474 = vunpack.c.h.b16 %v1070
    %v2475 = vunpack.c.l.b16 %v1071
    %v2476 = vunpack.c.h.b16 %v1071
    %v2477 = vunpack.c.l.b16 %v1072
    %v2478 = vunpack.c.h.b16 %v1072
    %v2479 = vunpack.c.l.b16 %v1073
    %v2480 = vunpack.c.h.b16 %v1073
    %v2481 = vunpack.c.l.b16 %v1074
    %v2482 = vunpack.c.h.b16 %v1074
    %v2483 = vunpack.c.l.b16 %v1075
    %v2484 = vunpack.c.h.b16 %v1075
    %v2485 = vunpack.c.l.b16 %v1076
    %v2486 = vunpack.c.h.b16 %v1076
    %v2487 = vunpack.c.l.b16 %v1077
    %v2488 = vunpack.c.h.b16 %v1077
    %v2489 = vunpack.c.l.b16 %v1078
    %v2490 = vunpack.c.h.b16 %v1078
    %v2491 = vunpack.c.l.b16 %v1079
    %v2492 = vunpack.c.h.b16 %v1079
    %v2493 = vunpack.c.l.b16 %v1080
    %v2494 = vunpack.c.h.b16 %v1080
    %v2495 = vunpack.c.l.b16 %v1081
    %v2496 = vunpack.c.h.b16 %v1081
    %v2497 = vunpack.c.l.b16 %v1082
    %v2498 = vunpack.c.h.b16 %v1082
    %v2499 = vunpack.c.l.b16 %v1083
    %v2500 = vunpack.c.h.b16 %v1083
    %v2501 = vunpack.c.l.b16 %v1084
    %v2502 = vunpack.c.h.b16 %v1084
    %v2503 = vunpack.c.l.b16 %v1085
    %v2504 = vunpack.c.h.b16 %v1085
    %v2505 = vunpack.c.l.b16 %v1086
    %v2506 = vunpack.c.h.b16 %v1086
    %v2507 = vunpack.c.l.b16 %v1087
    %v2508 = vunpack.c.h.b16 %v1087
    %v2509 = vunpack.c.l.b16 %v1088
    %v2510 = vunpack.c.h.b16 %v1088
    %v2511 = vunpack.c.l.b16 %v1089
    %v2512 = vunpack.c.h.b16 %v1089
    %v2513 = vunpack.c.l.b16 %v1090
    %v2514 = vunpack.c.h.b16 %v1090
    %v2515 = vunpack.c.l.b16 %v1091
    %v2516 = vunpack.c.h.b16 %v1091
    %v2517 = vunpack.c.l.b16 %v1092
    %v2518 = vunpack.c.h.b16 %v1092
    %v2519 = vunpack.c.l.b16 %v1093
    %v2520 = vunpack.c.h.b16 %v1093
    %v2521 = vunpack.c.l.b16 %v1094
    %v2522 = vunpack.c.h.b16 %v1094
    %v2523 = vunpack.c.l.b16 %v1095
    %v2524 = vunpack.c.h.b16 %v1095
    %v2525 = vunpack.c.l.b16 %v1096
    %v2526 = vunpack.c.h.b16 %v1096
    %v2527 = vunpack.c.l.b16 %v1097
    %v2528 = vunpack.c.h.b16 %v1097
    %v2529 = vunpack.c.l.b16 %v1098
    %v2530 = vunpack.c.h.b16 %v1098
    %v2531 = vunpack.c.l.b16 %v1099
    %v2532 = vunpack.c.h.b16 %v1099
    %v2533 = vunpack.c.l.b16 %v1100
    %v2534 = vunpack.c.h.b16 %v1100
    %v2535 = vunpack.c.l.b16 %v1101
    %v2536 = vunpack.c.h.b16 %v1101
    %v2537 = vunpack.c.l.b16 %v1102
    %v2538 = vunpack.c.h.b16 %v1102
    %v2539 = vunpack.c.l.b16 %v1103
    %v2540 = vunpack.c.h.b16 %v1103
    %v2541 = vunpack.c.l.b16 %v1104
    %v2542 = vunpack.c.h.b16 %v1104
    %v2543 = vunpack.c.l.b16 %v1105
    %v2544 = vunpack.c.h.b16 %v1105
    %v2545 = vunpack.c.l.b16 %v1106
    %v2546 = vunpack.c.h.b16 %v1106
    %v2547 = vunpack.c.l.b16 %v1107
    %v2548 = vunpack.c.h.b16 %v1107
    %v2549 = vunpack.c.l.b16 %v1108
    %v2550 = vunpack.c.h.b16 %v1108
    %v2551 = vunpack.c.l.b16 %v1109
    %v2552 = vunpack.c.h.b16 %v1109
    %v2553 = vunpack.c.l.b16 %v1110
    %v2554 = vunpack.c.h.b16 %v1110
    %v2555 = vunpack.c.l.b16 %v1111
    %v2556 = vunpack.c.h.b16 %v1111
    %v2557 = vunpack.c.l.b16 %v1112
    %v2558 = vunpack.c.h.b16 %v1112
    %v2559 = vunpack.c.l.b16 %v1113
    %v2560 = vunpack.c.h.b16 %v1113
    %v2561 = vunpack.c.l.b16 %v1114
    %v2562 = vunpack.c.h.b16 %v1114
    %v2563 = vunpack.c.l.b16 %v1115
    %v2564 = vunpack.c.h.b16 %v1115
    %v2565 = vunpack.c.l.b16 %v1116
    %v2566 = vunpack.c.h.b16 %v1116
    %v2567 = vunpack.c.l.b16 %v1117
    %v2568 = vunpack.c.h.b16 %v1117
    %v2569 = vunpack.c.l.b16 %v1118
    %v2570 = vunpack.c.h.b16 %v1118
    %v2571 = vunpack.c.l.b16 %v1119
    %v2572 = vunpack.c.h.b16 %v1119
    %v2573 = vunpack.c.l.b16 %v1120
    %v2574 = vunpack.c.h.b16 %v1120
    %v2575 = vunpack.c.l.b16 %v1121
    %v2576 = vunpack.c.h.b16 %v1121
    %v2577 = vunpack.c.l.b16 %v1122
    %v2578 = vunpack.c.h.b16 %v1122
    %v2579 = vunpack.c.l.b16 %v1123
    %v2580 = vunpack.c.h.b16 %v1123
    %v2581 = vunpack.c.l.b16 %v1124
    %v2582 = vunpack.c.h.b16 %v1124
    %v2583 = vunpack.c.l.b16 %v1125
    %v2584 = vunpack.c.h.b16 %v1125
    %v2585 = vunpack.c.l.b16 %v1126
    %v2586 = vunpack.c.h.b16 %v1126
    %v2587 = vunpack.c.l.b16 %v1127
    %v2588 = vunpack.c.h.b16 %v1127
    %v2589 = vunpack.c.l.b16 %v1128
    %v2590 = vunpack.c.h.b16 %v1128
    %v2591 = vunpack.c.l.b16 %v1129
    %v2592 = vunpack.c.h.b16 %v1129
    %v2593 = vunpack.c.l.b16 %v1130
    %v2594 = vunpack.c.h.b16 %v1130
    %v2595 = vunpack.c.l.b16 %v1131
    %v2596 = vunpack.c.h.b16 %v1131
    %v2597 = vunpack.c.l.b16 %v1132
    %v2598 = vunpack.c.h.b16 %v1132
    %v2599 = vunpack.c.l.b16 %v1133
    %v2600 = vunpack.c.h.b16 %v1133
    %v2601 = vunpack.c.l.b16 %v1134
    %v2602 = vunpack.c.h.b16 %v1134
    %v2603 = vunpack.c.l.b16 %v1135
    %v2604 = vunpack.c.h.b16 %v1135
    %v2605 = vunpack.c.l.b16 %v1136
    %v2606 = vunpack.c.h.b16 %v1136
    %v2607 = vunpack.c.l.b16 %v1137
    %v2608 = vunpack.c.h.b16 %v1137
    %v2609 = vunpack.c.l.b16 %v1138
    %v2610 = vunpack.c.h.b16 %v1138
    %v2611 = vunpack.c.l.b16 %v1139
    %v2612 = vunpack.c.h.b16 %v1139
    %v2613 = vunpack.c.l.b16 %v1140
    %v2614 = vunpack.c.h.b16 %v1140
    %v2615 = vunpack.c.l.b16 %v1141
    %v2616 = vunpack.c.h.b16 %v1141
    %v2617 = vunpack.c.l.b16 %v1142
    %v2618 = vunpack.c.h.b16 %v1142
    %v2619 = vunpack.c.l.b16 %v1143
    %v2620 = vunpack.c.h.b16 %v1143
    %v2621 = vunpack.c.l.b16 %v1144
    %v2622 = vunpack.c.h.b16 %v1144
    %v2623 = vunpack.c.l.b16 %v1145
    %v2624 = vunpack.c.h.b16 %v1145
    %v2625 = vunpack.c.l.b16 %v1146
    %v2626 = vunpack.c.h.b16 %v1146
    %v2627 = vunpack.c.l.b16 %v1147
    %v2628 = vunpack.c.h.b16 %v1147
    %v2629 = vunpack.c.l.b16 %v1148
    %v2630 = vunpack.c.h.b16 %v1148
    %v2631 = vunpack.c.l.b16 %v1149
    %v2632 = vunpack.c.h.b16 %v1149
    %v2633 = vunpack.c.l.b16 %v1150
    %v2634 = vunpack.c.h.b16 %v1150
    %v2635 = vunpack.c.l.b16 %v1151
    %v2636 = vunpack.c.h.b16 %v1151
    %v2637 = vunpack.c.l.b16 %v1152
    %v2638 = vunpack.c.h.b16 %v1152
    %v2639 = vunpack.c.l.b16 %v1153
    %v2640 = vunpack.c.h.b16 %v1153
    %v2641 = vunpack.c.l.b16 %v1154
    %v2642 = vunpack.c.h.b16 %v1154
    %v2643 = vunpack.c.l.b16 %v1155
    %v2644 = vunpack.c.h.b16 %v1155
    %v2645 = vunpack.c.l.b16 %v1156
    %v2646 = vunpack.c.h.b16 %v1156
    %v2647 = vunpack.c.l.b16 %v1157
    %v2648 = vunpack.c.h.b16 %v1157
    %v2649 = vunpack.c.l.b16 %v1158
    %v2650 = vunpack.c.h.b16 %v1158
    %v2651 = vunpack.c.l.b16 %v1159
    %v2652 = vunpack.c.h.b16 %v1159
    %v2653 = vunpack.c.l.b16 %v1160
    %v2654 = vunpack.c.h.b16 %v1160
    %v2655 = vunpack.c.l.b16 %v1161
    %v2656 = vunpack.c.h.b16 %v1161
    %v2657 = vunpack.c.l.b16 %v1162
    %v2658 = vunpack.c.h.b16 %v1162
    %v2659 = vunpack.c.l.b16 %v1163
    %v2660 = vunpack.c.h.b16 %v1163
    %v2661 = vunpack.c.l.b16 %v1164
    %v2662 = vunpack.c.h.b16 %v1164
    %v2663 = vunpack.c.l.b16 %v1165
    %v2664 = vunpack.c.h.b16 %v1165
    %v2665 = vunpack.c.l.b16 %v1166
    %v2666 = vunpack.c.h.b16 %v1166
    %v2667 = vunpack.c.l.b16 %v1167
    %v2668 = vunpack.c.h.b16 %v1167
    %v2669 = vunpack.c.l.b16 %v1168
    %v2670 = vunpack.c.h.b16 %v1168
    %v2671 = vunpack.c.l.b16 %v1169
    %v2672 = vunpack.c.h.b16 %v1169
    %v2673 = vunpack.c.l.b16 %v1170
    %v2674 = vunpack.c.h.b16 %v1170
    %v2675 = vunpack.c.l.b16 %v1171
    %v2676 = vunpack.c.h.b16 %v1171
    %v2677 = vunpack.c.l.b16 %v1172
    %v2678 = vunpack.c.h.b16 %v1172
    %v2679 = vunpack.c.l.b16 %v1173
    %v2680 = vunpack.c.h.b16 %v1173
    %v2681 = vunpack.c.l.b16 %v1174
    %v2682 = vunpack.c.h.b16 %v1174
    %v2683 = vunpack.c.l.b16 %v1175
    %v2684 = vunpack.c.h.b16 %v1175
    %v2685 = vunpack.c.l.b16 %v1176
    %v2686 = vunpack.c.h.b16 %v1176
    %v2687 = vunpack.c.l.b16 %v1177
    %v2688 = vunpack.c.h.b16 %v1177
    %v2689 = vunpack.c.l.b16 %v1178
    %v2690 = vunpack.c.h.b16 %v1178
    %v2691 = vunpack.c.l.b16 %v1179
    %v2692 = vunpack.c.h.b16 %v1179
    %v2693 = vunpack.c.l.b16 %v1180
    %v2694 = vunpack.c.h.b16 %v1180
    %v2695 = vunpack.c.l.b16 %v1181
    %v2696 = vunpack.c.h.b16 %v1181
    %v2697 = vunpack.c.l.b16 %v1182
    %v2698 = vunpack.c.h.b16 %v1182
    %v2699 = vunpack.c.l.b16 %v1183
    %v2700 = vunpack.c.h.b16 %v1183
    %v2701 = vunpack.c.l.b16 %v1184
    %v2702 = vunpack.c.h.b16 %v1184
    %v2703 = vunpack.c.l.b16 %v1185
    %v2704 = vunpack.c.h.b16 %v1185
    %v2705 = vunpack.c.l.b16 %v1186
    %v2706 = vunpack.c.h.b16 %v1186
    %v2707 = vunpack.c.l.b16 %v1187
    %v2708 = vunpack.c.h.b16 %v1187
    %v2709 = vunpack.c.l.b16 %v1188
    %v2710 = vunpack.c.h.b16 %v1188
    %v2711 = vunpack.c.l.b16 %v1189
    %v2712 = vunpack.c.h.b16 %v1189
    %v2713 = vunpack.c.l.b16 %v1190
    %v2714 = vunpack.c.h.b16 %v1190
    %v2715 = vunpack.c.l.b16 %v1191
    %v2716 = vunpack.c.h.b16 %v1191
    %v2717 = vunpack.c.l.b16 %v1192
    %v2718 = vunpack.c.h.b16 %v1192
    %v2719 = vunpack.c.l.b16 %v1193
    %v2720 = vunpack.c.h.b16 %v1193
    %v2721 = vunpack.c.l.b16 %v1194
    %v2722 = vunpack.c.h.b16 %v1194
    %v2723 = vunpack.c.l.b16 %v1195
    %v2724 = vunpack.c.h.b16 %v1195
    %v2725 = vunpack.c.l.b16 %v1196
    %v2726 = vunpack.c.h.b16 %v1196
    %v2727 = vunpack.c.l.b16 %v1197
    %v2728 = vunpack.c.h.b16 %v1197
    %v2729 = vunpack.c.l.b16 %v1198
    %v2730 = vunpack.c.h.b16 %v1198
    %v2731 = vunpack.c.l.b16 %v1199
    %v2732 = vunpack.c.h.b16 %v1199
    %v2733 = vunpack.c.l.b16 %v1200
    %v2734 = vunpack.c.h.b16 %v1200
    %v2735 = vunpack.c.l.b16 %v1201
    %v2736 = vunpack.c.h.b16 %v1201
    %v2737 = vunpack.c.l.b16 %v1202
    %v2738 = vunpack.c.h.b16 %v1202
    %v2739 = vunpack.c.l.b16 %v1203
    %v2740 = vunpack.c.h.b16 %v1203
    %v2741 = vunpack.c.l.b16 %v1204
    %v2742 = vunpack.c.h.b16 %v1204
    %v2743 = vunpack.c.l.b16 %v1205
    %v2744 = vunpack.c.h.b16 %v1205
    %v2745 = vunpack.c.l.b16 %v1206
    %v2746 = vunpack.c.h.b16 %v1206
    %v2747 = vunpack.c.l.b16 %v1207
    %v2748 = vunpack.c.h.b16 %v1207
    %v2749 = vunpack.c.l.b16 %v1208
    %v2750 = vunpack.c.h.b16 %v1208
    %v2751 = vunpack.c.l.b16 %v1209
    %v2752 = vunpack.c.h.b16 %v1209
    %v2753 = vunpack.c.l.b16 %v1210
    %v2754 = vunpack.c.h.b16 %v1210
    %v2755 = vunpack.c.l.b16 %v1211
    %v2756 = vunpack.c.h.b16 %v1211
    %v2757 = vunpack.c.l.b16 %v1212
    %v2758 = vunpack.c.h.b16 %v1212
    %v2759 = vunpack.c.l.b16 %v1213
    %v2760 = vunpack.c.h.b16 %v1213
    %v2761 = vunpack.c.l.b16 %v1214
    %v2762 = vunpack.c.h.b16 %v1214
    %v2763 = vunpack.c.l.b16 %v1215
    %v2764 = vunpack.c.h.b16 %v1215
    %v2765 = vunpack.c.l.b16 %v1216
    %v2766 = vunpack.c.h.b16 %v1216
    %v2767 = vunpack.c.l.b16 %v1217
    %v2768 = vunpack.c.h.b16 %v1217
    %v2769 = vunpack.c.l.b16 %v1218
    %v2770 = vunpack.c.h.b16 %v1218
    %v2771 = vunpack.c.l.b16 %v1219
    %v2772 = vunpack.c.h.b16 %v1219
    %v2773 = vunpack.c.l.b16 %v1220
    %v2774 = vunpack.c.h.b16 %v1220
    %v2775 = vunpack.c.l.b16 %v1221
    %v2776 = vunpack.c.h.b16 %v1221
    %v2777 = vunpack.c.l.b16 %v1222
    %v2778 = vunpack.c.h.b16 %v1222
    %v2779 = vunpack.c.l.b16 %v1223
    %v2780 = vunpack.c.h.b16 %v1223
    %v2781 = vunpack.c.l.b16 %v1224
    %v2782 = vunpack.c.h.b16 %v1224
    %v2783 = vunpack.c.l.b16 %v1225
    %v2784 = vunpack.c.h.b16 %v1225
    %v2785 = vunpack.c.l.b16 %v1226
    %v2786 = vunpack.c.h.b16 %v1226
    %v2787 = vunpack.c.l.b16 %v1227
    %v2788 = vunpack.c.h.b16 %v1227
    %v2789 = vunpack.c.l.b16 %v1228
    %v2790 = vunpack.c.h.b16 %v1228
    %v2791 = vunpack.c.l.b16 %v1229
    %v2792 = vunpack.c.h.b16 %v1229
    %v2793 = vunpack.c.l.b16 %v1230
    %v2794 = vunpack.c.h.b16 %v1230
    %v2795 = vunpack.c.l.b16 %v1231
    %v2796 = vunpack.c.h.b16 %v1231
    %v2797 = vunpack.c.l.b16 %v1232
    %v2798 = vunpack.c.h.b16 %v1232
    %v2799 = vunpack.c.l.b16 %v1233
    %v2800 = vunpack.c.h.b16 %v1233
    %v2801 = vunpack.c.l.b16 %v1234
    %v2802 = vunpack.c.h.b16 %v1234
    %v2803 = vunpack.c.l.b16 %v1235
    %v2804 = vunpack.c.h.b16 %v1235
    %v2805 = vunpack.c.l.b16 %v1236
    %v2806 = vunpack.c.h.b16 %v1236
    %v2807 = vunpack.c.l.b16 %v1237
    %v2808 = vunpack.c.h.b16 %v1237
    %v2809 = vunpack.c.l.b16 %v1238
    %v2810 = vunpack.c.h.b16 %v1238
    %v2811 = vunpack.c.l.b16 %v1239
    %v2812 = vunpack.c.h.b16 %v1239
    %v2813 = vunpack.c.l.b16 %v1240
    %v2814 = vunpack.c.h.b16 %v1240
    %v2815 = vunpack.c.l.b16 %v1241
    %v2816 = vunpack.c.h.b16 %v1241
    %v2817 = vunpack.c.l.b16 %v1242
    %v2818 = vunpack.c.h.b16 %v1242
    %v2819 = vunpack.c.l.b16 %v1243
    %v2820 = vunpack.c.h.b16 %v1243
    %v2821 = vunpack.c.l.b16 %v1244
    %v2822 = vunpack.c.h.b16 %v1244
    %v2823 = vpack.c.b16 %v1807, %v1799
    %v2824 = vpack.c.b16 %v1808, %v1800
    %v2825 = vpack.c.b16 %v1809, %v1801
    %v2826 = vpack.c.b16 %v1810, %v1802
    %v2827 = vpack.c.b16 %v1811, %v1803
    %v2828 = vpack.c.b16 %v1812, %v1804
    %v2829 = vpack.c.b16 %v1813, %v1805
    %v2830 = vpack.c.b16 %v1814, %v1806
    %v2831 = vpack.c.b16 %v1823, %v1815
    %v2832 = vpack.c.b16 %v1824, %v1816
    %v2833 = vpack.c.b16 %v1825, %v1817
    %v2834 = vpack.c.b16 %v1826, %v1818
    %v2835 = vpack.c.b16 %v1827, %v1819
    %v2836 = vpack.c.b16 %v1828, %v1820
    %v2837 = vpack.c.b16 %v1829, %v1821
    %v2838 = vpack.c.b16 %v1830, %v1822
    %v2839 = vpack.c.b16 %v1839, %v1831
    %v2840 = vpack.c.b16 %v1840, %v1832
    %v2841 = vpack.c.b16 %v1841, %v1833
    %v2842 = vpack.c.b16 %v1842, %v1834
    %v2843 = vpack.c.b16 %v1843, %v1835
    %v2844 = vpack.c.b16 %v1844, %v1836
    %v2845 = vpack.c.b16 %v1845, %v1837
    %v2846 = vpack.c.b16 %v1846, %v1838
    %v2847 = vpack.c.b16 %v1855, %v1847
    %v2848 = vpack.c.b16 %v1856, %v1848
    %v2849 = vpack.c.b16 %v1857, %v1849
    %v2850 = vpack.c.b16 %v1858, %v1850
    %v2851 = vpack.c.b16 %v1859, %v1851
    %v2852 = vpack.c.b16 %v1860, %v1852
    %v2853 = vpack.c.b16 %v1861, %v1853
    %v2854 = vpack.c.b16 %v1862, %v1854
    %v2855 = vpack.c.b16 %v1871, %v1863
    %v2856 = vpack.c.b16 %v1872, %v1864
    %v2857 = vpack.c.b16 %v1873, %v1865
    %v2858 = vpack.c.b16 %v1874, %v1866
    %v2859 = vpack.c.b16 %v1875, %v1867
    %v2860 = vpack.c.b16 %v1876, %v1868
    %v2861 = vpack.c.b16 %v1877, %v1869
    %v2862 = vpack.c.b16 %v1878, %v1870
    %v2863 = vpack.c.b16 %v1887, %v1879
    %v2864 = vpack.c.b16 %v1888, %v1880
    %v2865 = vpack.c.b16 %v1889, %v1881
    %v2866 = vpack.c.b16 %v1890, %v1882
    %v2867 = vpack.c.b16 %v1891, %v1883
    %v2868 = vpack.c.b16 %v1892, %v1884
    %v2869 = vpack.c.b16 %v1893, %v1885
    %v2870 = vpack.c.b16 %v1894, %v1886
    %v2871 = vpack.c.b16 %v1903, %v1895
    %v2872 = vpack.c.b16 %v1904, %v1896
    %v2873 = vpack.c.b16 %v1905, %v1897
    %v2874 = vpack.c.b16 %v1906, %v1898
    %v2875 = vpack.c.b16 %v1907, %v1899
    %v2876 = vpack.c.b16 %v1908, %v1900
    %v2877 = vpack.c.b16 %v1909, %v1901
    %v2878 = vpack.c.b16 %v1910, %v1902
    %v2879 = vpack.c.b16 %v1919, %v1911
    %v2880 = vpack.c.b16 %v1920, %v1912
    %v2881 = vpack.c.b16 %v1921, %v1913
    %v2882 = vpack.c.b16 %v1922, %v1914
    %v2883 = vpack.c.b16 %v1923, %v1915
    %v2884 = vpack.c.b16 %v1924, %v1916
    %v2885 = vpack.c.b16 %v1925, %v1917
    %v2886 = vpack.c.b16 %v1926, %v1918
    %v2887 = vpack.c.b16 %v1935, %v1927
    %v2888 = vpack.c.b16 %v1936, %v1928
    %v2889 = vpack.c.b16 %v1937, %v1929
    %v2890 = vpack.c.b16 %v1938, %v1930
    %v2891 = vpack.c.b16 %v1939, %v1931
    %v2892 = vpack.c.b16 %v1940, %v1932
    %v2893 = vpack.c.b16 %v1941, %v1933
    %v2894 = vpack.c.b16 %v1942, %v1934
    %v2895 = vpack.c.b16 %v1951, %v1943
    %v2896 = vpack.c.b16 %v1952, %v1944
    %v2897 = vpack.c.b16 %v1953, %v1945
    %v2898 = vpack.c.b16 %v1954, %v1946
    %v2899 = vpack.c.b16 %v1955, %v1947
    %v2900 = vpack.c.b16 %v1956, %v1948
    %v2901 = vpack.c.b16 %v1957, %v1949
    %v2902 = vpack.c.b16 %v1958, %v1950
    %v2903 = vpack.c.b16 %v1967, %v1959
    %v2904 = vpack.c.b16 %v1968, %v1960
    %v2905 = vpack.c.b16 %v1969, %v1961
    %v2906 = vpack.c.b16 %v1970, %v1962
    %v2907 = vpack.c.b16 %v1971, %v1963
    %v2908 = vpack.c.b16 %v1972, %v1964
    %v2909 = vpack.c.b16 %v1973, %v1965
    %v2910 = vpack.c.b16 %v1974, %v1966
    %v2911 = vpack.c.b16 %v1983, %v1975
    %v2912 = vpack.c.b16 %v1984, %v1976
    %v2913 = vpack.c.b16 %v1985, %v1977
    %v2914 = vpack.c.b16 %v1986, %v1978
    %v2915 = vpack.c.b16 %v1987, %v1979
    %v2916 = vpack.c.b16 %v1988, %v1980
    %v2917 = vpack.c.b16 %v1989, %v1981
    %v2918 = vpack.c.b16 %v1990, %v1982
    %v2919 = vpack.c.b16 %v1999, %v1991
    %v2920 = vpack.c.b16 %v2000, %v1992
    %v2921 = vpack.c.b16 %v2001, %v1993
    %v2922 = vpack.c.b16 %v2002, %v1994
    %v2923 = vpack.c.b16 %v2003, %v1995
    %v2924 = vpack.c.b16 %v2004, %v1996
    %v2925 = vpack.c.b16 %v2005, %v1997
    %v2926 = vpack.c.b16 %v2006, %v1998
    %v2927 = vpack.c.b16 %v2015, %v2007
    %v2928 = vpack.c.b16 %v2016, %v2008
    %v2929 = vpack.c.b16 %v2017, %v2009
    %v2930 = vpack.c.b16 %v2018, %v2010
    %v2931 = vpack.c.b16 %v2019, %v2011
    %v2932 = vpack.c.b16 %v2020, %v2012
    %v2933 = vpack.c.b16 %v2021, %v2013
    %v2934 = vpack.c.b16 %v2022, %v2014
    %v2935 = vpack.c.b16 %v2031, %v2023
    %v2936 = vpack.c.b16 %v2032, %v2024
    %v2937 = vpack.c.b16 %v2033, %v2025
    %v2938 = vpack.c.b16 %v2034, %v2026
    %v2939 = vpack.c.b16 %v2035, %v2027
    %v2940 = vpack.c.b16 %v2036, %v2028
    %v2941 = vpack.c.b16 %v2037, %v2029
    %v2942 = vpack.c.b16 %v2038, %v2030
    %v2943 = vpack.c.b16 %v2047, %v2039
    %v2944 = vpack.c.b16 %v2048, %v2040
    %v2945 = vpack.c.b16 %v2049, %v2041
    %v2946 = vpack.c.b16 %v2050, %v2042
    %v2947 = vpack.c.b16 %v2051, %v2043
    %v2948 = vpack.c.b16 %v2052, %v2044
    %v2949 = vpack.c.b16 %v2053, %v2045
    %v2950 = vpack.c.b16 %v2054, %v2046
    %v2951 = vpack.c.b16 %v2063, %v2055
    %v2952 = vpack.c.b16 %v2064, %v2056
    %v2953 = vpack.c.b16 %v2065, %v2057
    %v2954 = vpack.c.b16 %v2066, %v2058
    %v2955 = vpack.c.b16 %v2067, %v2059
    %v2956 = vpack.c.b16 %v2068, %v2060
    %v2957 = vpack.c.b16 %v2069, %v2061
    %v2958 = vpack.c.b16 %v2070, %v2062
    %v2959 = vpack.c.b16 %v2079, %v2071
    %v2960 = vpack.c.b16 %v2080, %v2072
    %v2961 = vpack.c.b16 %v2081, %v2073
    %v2962 = vpack.c.b16 %v2082, %v2074
    %v2963 = vpack.c.b16 %v2083, %v2075
    %v2964 = vpack.c.b16 %v2084, %v2076
    %v2965 = vpack.c.b16 %v2085, %v2077
    %v2966 = vpack.c.b16 %v2086, %v2078
    %v2967 = vpack.c.b16 %v2095, %v2087
    %v2968 = vpack.c.b16 %v2096, %v2088
    %v2969 = vpack.c.b16 %v2097, %v2089
    %v2970 = vpack.c.b16 %v2098, %v2090
    %v2971 = vpack.c.b16 %v2099, %v2091
    %v2972 = vpack.c.b16 %v2100, %v2092
    %v2973 = vpack.c.b16 %v2101, %v2093
    %v2974 = vpack.c.b16 %v2102, %v2094
    %v2975 = vpack.c.b16 %v2111, %v2103
    %v2976 = vpack.c.b16 %v2112, %v2104
    %v2977 = vpack.c.b16 %v2113, %v2105
    %v2978 = vpack.c.b16 %v2114, %v2106
    %v2979 = vpack.c.b16 %v2115, %v2107
    %v2980 = vpack.c.b16 %v2116, %v2108
    %v2981 = vpack.c.b16 %v2117, %v2109
    %v2982 = vpack.c.b16 %v2118, %v2110
    %v2983 = vpack.c.b16 %v2127, %v2119
    %v2984 = vpack.c.b16 %v2128, %v2120
    %v2985 = vpack.c.b16 %v2129, %v2121
    %v2986 = vpack.c.b16 %v2130, %v2122
    %v2987 = vpack.c.b16 %v2131, %v2123
    %v2988 = vpack.c.b16 %v2132, %v2124
    %v2989 = vpack.c.b16 %v2133, %v2125
    %v2990 = vpack.c.b16 %v2134, %v2126
    %v2991 = vpack.c.b16 %v2143, %v2135
    %v2992 = vpack.c.b16 %v2144, %v2136
    %v2993 = vpack.c.b16 %v2145, %v2137
    %v2994 = vpack.c.b16 %v2146, %v2138
    %v2995 = vpack.c.b16 %v2147, %v2139
    %v2996 = vpack.c.b16 %v2148, %v2140
    %v2997 = vpack.c.b16 %v2149, %v2141
    %v2998 = vpack.c.b16 %v2150, %v2142
    %v2999 = vpack.c.b16 %v2159, %v2151
    %v3000 = vpack.c.b16 %v2160, %v2152
    %v3001 = vpack.c.b16 %v2161, %v2153
    %v3002 = vpack.c.b16 %v2162, %v2154
    %v3003 = vpack.c.b16 %v2163, %v2155
    %v3004 = vpack.c.b16 %v2164, %v2156
    %v3005 = vpack.c.b16 %v2165, %v2157
    %v3006 = vpack.c.b16 %v2166, %v2158
    %v3007 = vpack.c.b16 %v2175, %v2167
    %v3008 = vpack.c.b16 %v2176, %v2168
    %v3009 = vpack.c.b16 %v2177, %v2169
    %v3010 = vpack.c.b16 %v2178, %v2170
    %v3011 = vpack.c.b16 %v2179, %v2171
    %v3012 = vpack.c.b16 %v2180, %v2172
    %v3013 = vpack.c.b16 %v2181, %v2173
    %v3014 = vpack.c.b16 %v2182, %v2174
    %v3015 = vpack.c.b16 %v2191, %v2183
    %v3016 = vpack.c.b16 %v2192, %v2184
    %v3017 = vpack.c.b16 %v2193, %v2185
    %v3018 = vpack.c.b16 %v2194, %v2186
    %v3019 = vpack.c.b16 %v2195, %v2187
    %v3020 = vpack.c.b16 %v2196, %v2188
    %v3021 = vpack.c.b16 %v2197, %v2189
    %v3022 = vpack.c.b16 %v2198, %v2190
    %v3023 = vpack.c.b16 %v2207, %v2199
    %v3024 = vpack.c.b16 %v2208, %v2200
    %v3025 = vpack.c.b16 %v2209, %v2201
    %v3026 = vpack.c.b16 %v2210, %v2202
    %v3027 = vpack.c.b16 %v2211, %v2203
    %v3028 = vpack.c.b16 %v2212, %v2204
    %v3029 = vpack.c.b16 %v2213, %v2205
    %v3030 = vpack.c.b16 %v2214, %v2206
    %v3031 = vpack.c.b16 %v2223, %v2215
    %v3032 = vpack.c.b16 %v2224, %v2216
    %v3033 = vpack.c.b16 %v2225, %v2217
    %v3034 = vpack.c.b16 %v2226, %v2218
    %v3035 = vpack.c.b16 %v2227, %v2219
    %v3036 = vpack.c.b16 %v2228, %v2220
    %v3037 = vpack.c.b16 %v2229, %v2221
    %v3038 = vpack.c.b16 %v2230, %v2222
    %v3039 = vpack.c.b16 %v2239, %v2231
    %v3040 = vpack.c.b16 %v2240, %v2232
    %v3041 = vpack.c.b16 %v2241, %v2233
    %v3042 = vpack.c.b16 %v2242, %v2234
    %v3043 = vpack.c.b16 %v2243, %v2235
    %v3044 = vpack.c.b16 %v2244, %v2236
    %v3045 = vpack.c.b16 %v2245, %v2237
    %v3046 = vpack.c.b16 %v2246, %v2238
    %v3047 = vpack.c.b16 %v2255, %v2247
    %v3048 = vpack.c.b16 %v2256, %v2248
    %v3049 = vpack.c.b16 %v2257, %v2249
    %v3050 = vpack.c.b16 %v2258, %v2250
    %v3051 = vpack.c.b16 %v2259, %v2251
    %v3052 = vpack.c.b16 %v2260, %v2252
    %v3053 = vpack.c.b16 %v2261, %v2253
    %v3054 = vpack.c.b16 %v2262, %v2254
    %v3055 = vpack.c.b16 %v2271, %v2263
    %v3056 = vpack.c.b16 %v2272, %v2264
    %v3057 = vpack.c.b16 %v2273, %v2265
    %v3058 = vpack.c.b16 %v2274, %v2266
    %v3059 = vpack.c.b16 %v2275, %v2267
    %v3060 = vpack.c.b16 %v2276, %v2268
    %v3061 = vpack.c.b16 %v2277, %v2269
    %v3062 = vpack.c.b16 %v2278, %v2270
    %v3063 = vpack.c.b16 %v2287, %v2279
    %v3064 = vpack.c.b16 %v2288, %v2280
    %v3065 = vpack.c.b16 %v2289, %v2281
    %v3066 = vpack.c.b16 %v2290, %v2282
    %v3067 = vpack.c.b16 %v2291, %v2283
    %v3068 = vpack.c.b16 %v2292, %v2284
    %v3069 = vpack.c.b16 %v2293, %v2285
    %v3070 = vpack.c.b16 %v2294, %v2286
    %v3071 = vpack.c.b16 %v2303, %v2295
    %v3072 = vpack.c.b16 %v2304, %v2296
    %v3073 = vpack.c.b16 %v2305, %v2297
    %v3074 = vpack.c.b16 %v2306, %v2298
    %v3075 = vpack.c.b16 %v2307, %v2299
    %v3076 = vpack.c.b16 %v2308, %v2300
    %v3077 = vpack.c.b16 %v2309, %v2301
    %v3078 = vpack.c.b16 %v2310, %v2302
    %v3079 = vpack.c.b16 %v2319, %v2311
    %v3080 = vpack.c.b16 %v2320, %v2312
    %v3081 = vpack.c.b16 %v2321, %v2313
    %v3082 = vpack.c.b16 %v2322, %v2314
    %v3083 = vpack.c.b16 %v2323, %v2315
    %v3084 = vpack.c.b16 %v2324, %v2316
    %v3085 = vpack.c.b16 %v2325, %v2317
    %v3086 = vpack.c.b16 %v2326, %v2318
    %v3087 = vpack.c.b16 %v2335, %v2327
    %v3088 = vpack.c.b16 %v2336, %v2328
    %v3089 = vpack.c.b16 %v2337, %v2329
    %v3090 = vpack.c.b16 %v2338, %v2330
    %v3091 = vpack.c.b16 %v2339, %v2331
    %v3092 = vpack.c.b16 %v2340, %v2332
    %v3093 = vpack.c.b16 %v2341, %v2333
    %v3094 = vpack.c.b16 %v2342, %v2334
    %v3095 = vpack.c.b16 %v2351, %v2343
    %v3096 = vpack.c.b16 %v2352, %v2344
    %v3097 = vpack.c.b16 %v2353, %v2345
    %v3098 = vpack.c.b16 %v2354, %v2346
    %v3099 = vpack.c.b16 %v2355, %v2347
    %v3100 = vpack.c.b16 %v2356, %v2348
    %v3101 = vpack.c.b16 %v2357, %v2349
    %v3102 = vpack.c.b16 %v2358, %v2350
    %v3103 = vpack.c.b16 %v2367, %v2359
    %v3104 = vpack.c.b16 %v2368, %v2360
    %v3105 = vpack.c.b16 %v2369, %v2361
    %v3106 = vpack.c.b16 %v2370, %v2362
    %v3107 = vpack.c.b16 %v2371, %v2363
    %v3108 = vpack.c.b16 %v2372, %v2364
    %v3109 = vpack.c.b16 %v2373, %v2365
    %v3110 = vpack.c.b16 %v2374, %v2366
    %v3111 = vpack.c.b16 %v2383, %v2375
    %v3112 = vpack.c.b16 %v2384, %v2376
    %v3113 = vpack.c.b16 %v2385, %v2377
    %v3114 = vpack.c.b16 %v2386, %v2378
    %v3115 = vpack.c.b16 %v2387, %v2379
    %v3116 = vpack.c.b16 %v2388, %v2380
    %v3117 = vpack.c.b16 %v2389, %v2381
    %v3118 = vpack.c.b16 %v2390, %v2382
    %v3119 = vpack.c.b16 %v2399, %v2391
    %v3120 = vpack.c.b16 %v2400, %v2392
    %v3121 = vpack.c.b16 %v2401, %v2393
    %v3122 = vpack.c.b16 %v2402, %v2394
    %v3123 = vpack.c.b16 %v2403, %v2395
    %v3124 = vpack.c.b16 %v2404, %v2396
    %v3125 = vpack.c.b16 %v2405, %v2397
    %v3126 = vpack.c.b16 %v2406, %v2398
    %v3127 = vpack.c.b16 %v2415, %v2407
    %v3128 = vpack.c.b16 %v2416, %v2408
    %v3129 = vpack.c.b16 %v2417, %v2409
    %v3130 = vpack.c.b16 %v2418, %v2410
    %v3131 = vpack.c.b16 %v2419, %v2411
    %v3132 = vpack.c.b16 %v2420, %v2412
    %v3133 = vpack.c.b16 %v2421, %v2413
    %v3134 = vpack.c.b16 %v2422, %v2414
    %v3135 = vpack.c.b16 %v2431, %v2423
    %v3136 = vpack.c.b16 %v2432, %v2424
    %v3137 = vpack.c.b16 %v2433, %v2425
    %v3138 = vpack.c.b16 %v2434, %v2426
    %v3139 = vpack.c.b16 %v2435, %v2427
    %v3140 = vpack.c.b16 %v2436, %v2428
    %v3141 = vpack.c.b16 %v2437, %v2429
    %v3142 = vpack.c.b16 %v2438, %v2430
    %v3143 = vpack.c.b16 %v2447, %v2439
    %v3144 = vpack.c.b16 %v2448, %v2440
    %v3145 = vpack.c.b16 %v2449, %v2441
    %v3146 = vpack.c.b16 %v2450, %v2442
    %v3147 = vpack.c.b16 %v2451, %v2443
    %v3148 = vpack.c.b16 %v2452, %v2444
    %v3149 = vpack.c.b16 %v2453, %v2445
    %v3150 = vpack.c.b16 %v2454, %v2446
    %v3151 = vpack.c.b16 %v2463, %v2455
    %v3152 = vpack.c.b16 %v2464, %v2456
    %v3153 = vpack.c.b16 %v2465, %v2457
    %v3154 = vpack.c.b16 %v2466, %v2458
    %v3155 = vpack.c.b16 %v2467, %v2459
    %v3156 = vpack.c.b16 %v2468, %v2460
    %v3157 = vpack.c.b16 %v2469, %v2461
    %v3158 = vpack.c.b16 %v2470, %v2462
    %v3159 = vpack.c.b16 %v2479, %v2471
    %v3160 = vpack.c.b16 %v2480, %v2472
    %v3161 = vpack.c.b16 %v2481, %v2473
    %v3162 = vpack.c.b16 %v2482, %v2474
    %v3163 = vpack.c.b16 %v2483, %v2475
    %v3164 = vpack.c.b16 %v2484, %v2476
    %v3165 = vpack.c.b16 %v2485, %v2477
    %v3166 = vpack.c.b16 %v2486, %v2478
    %v3167 = vpack.c.b16 %v2495, %v2487
    %v3168 = vpack.c.b16 %v2496, %v2488
    %v3169 = vpack.c.b16 %v2497, %v2489
    %v3170 = vpack.c.b16 %v2498, %v2490
    %v3171 = vpack.c.b16 %v2499, %v2491
    %v3172 = vpack.c.b16 %v2500, %v2492
    %v3173 = vpack.c.b16 %v2501, %v2493
    %v3174 = vpack.c.b16 %v2502, %v2494
    %v3175 = vpack.c.b16 %v2511, %v2503
    %v3176 = vpack.c.b16 %v2512, %v2504
    %v3177 = vpack.c.b16 %v2513, %v2505
    %v3178 = vpack.c.b16 %v2514, %v2506
    %v3179 = vpack.c.b16 %v2515, %v2507
    %v3180 = vpack.c.b16 %v2516, %v2508
    %v3181 = vpack.c.b16 %v2517, %v2509
    %v3182 = vpack.c.b16 %v2518, %v2510
    %v3183 = vpack.c.b16 %v2527, %v2519
    %v3184 = vpack.c.b16 %v2528, %v2520
    %v3185 = vpack.c.b16 %v2529, %v2521
    %v3186 = vpack.c.b16 %v2530, %v2522
    %v3187 = vpack.c.b16 %v2531, %v2523
    %v3188 = vpack.c.b16 %v2532, %v2524
    %v3189 = vpack.c.b16 %v2533, %v2525
    %v3190 = vpack.c.b16 %v2534, %v2526
    %v3191 = vpack.c.b16 %v2543, %v2535
    %v3192 = vpack.c.b16 %v2544, %v2536
    %v3193 = vpack.c.b16 %v2545, %v2537
    %v3194 = vpack.c.b16 %v2546, %v2538
    %v3195 = vpack.c.b16 %v2547, %v2539
    %v3196 = vpack.c.b16 %v2548, %v2540
    %v3197 = vpack.c.b16 %v2549, %v2541
    %v3198 = vpack.c.b16 %v2550, %v2542
    %v3199 = vpack.c.b16 %v2559, %v2551
    %v3200 = vpack.c.b16 %v2560, %v2552
    %v3201 = vpack.c.b16 %v2561, %v2553
    %v3202 = vpack.c.b16 %v2562, %v2554
    %v3203 = vpack.c.b16 %v2563, %v2555
    %v3204 = vpack.c.b16 %v2564, %v2556
    %v3205 = vpack.c.b16 %v2565, %v2557
    %v3206 = vpack.c.b16 %v2566, %v2558
    %v3207 = vpack.c.b16 %v2575, %v2567
    %v3208 = vpack.c.b16 %v2576, %v2568
    %v3209 = vpack.c.b16 %v2577, %v2569
    %v3210 = vpack.c.b16 %v2578, %v2570
    %v3211 = vpack.c.b16 %v2579, %v2571
    %v3212 = vpack.c.b16 %v2580, %v2572
    %v3213 = vpack.c.b16 %v2581, %v2573
    %v3214 = vpack.c.b16 %v2582, %v2574
    %v3215 = vpack.c.b16 %v2591, %v2583
    %v3216 = vpack.c.b16 %v2592, %v2584
    %v3217 = vpack.c.b16 %v2593, %v2585
    %v3218 = vpack.c.b16 %v2594, %v2586
    %v3219 = vpack.c.b16 %v2595, %v2587
    %v3220 = vpack.c.b16 %v2596, %v2588
    %v3221 = vpack.c.b16 %v2597, %v2589
    %v3222 = vpack.c.b16 %v2598, %v2590
    %v3223 = vpack.c.b16 %v2607, %v2599
    %v3224 = vpack.c.b16 %v2608, %v2600
    %v3225 = vpack.c.b16 %v2609, %v2601
    %v3226 = vpack.c.b16 %v2610, %v2602
    %v3227 = vpack.c.b16 %v2611, %v2603
    %v3228 = vpack.c.b16 %v2612, %v2604
    %v3229 = vpack.c.b16 %v2613, %v2605
    %v3230 = vpack.c.b16 %v2614, %v2606
    %v3231 = vpack.c.b16 %v2623, %v2615
    %v3232 = vpack.c.b16 %v2624, %v2616
    %v3233 = vpack.c.b16 %v2625, %v2617
    %v3234 = vpack.c.b16 %v2626, %v2618
    %v3235 = vpack.c.b16 %v2627, %v2619
    %v3236 = vpack.c.b16 %v2628, %v2620
    %v3237 = vpack.c.b16 %v2629, %v2621
    %v3238 = vpack.c.b16 %v2630, %v2622
    %v3239 = vpack.c.b16 %v2639, %v2631
    %v3240 = vpack.c.b16 %v2640, %v2632
    %v3241 = vpack.c.b16 %v2641, %v2633
    %v3242 = vpack.c.b16 %v2642, %v2634
    %v3243 = vpack.c.b16 %v2643, %v2635
    %v3244 = vpack.c.b16 %v2644, %v2636
    %v3245 = vpack.c.b16 %v2645, %v2637
    %v3246 = vpack.c.b16 %v2646, %v2638
    %v3247 = vpack.c.b16 %v2655, %v2647
    %v3248 = vpack.c.b16 %v2656, %v2648
    %v3249 = vpack.c.b16 %v2657, %v2649
    %v3250 = vpack.c.b16 %v2658, %v2650
    %v3251 = vpack.c.b16 %v2659, %v2651
    %v3252 = vpack.c.b16 %v2660, %v2652
    %v3253 = vpack.c.b16 %v2661, %v2653
    %v3254 = vpack.c.b16 %v2662, %v2654
    %v3255 = vpack.c.b16 %v2671, %v2663
    %v3256 = vpack.c.b16 %v2672, %v2664
    %v3257 = vpack.c.b16 %v2673, %v2665
    %v3258 = vpack.c.b16 %v2674, %v2666
    %v3259 = vpack.c.b16 %v2675, %v2667
    %v3260 = vpack.c.b16 %v2676, %v2668
    %v3261 = vpack.c.b16 %v2677, %v2669
    %v3262 = vpack.c.b16 %v2678, %v2670
    %v3263 = vpack.c.b16 %v2687, %v2679
    %v3264 = vpack.c.b16 %v2688, %v2680
    %v3265 = vpack.c.b16 %v2689, %v2681
    %v3266 = vpack.c.b16 %v2690, %v2682
    %v3267 = vpack.c.b16 %v2691, %v2683
    %v3268 = vpack.c.b16 %v2692, %v2684
    %v3269 = vpack.c.b16 %v2693, %v2685
    %v3270 = vpack.c.b16 %v2694, %v2686
    %v3271 = vpack.c.b16 %v2703, %v2695
    %v3272 = vpack.c.b16 %v2704, %v2696
    %v3273 = vpack.c.b16 %v2705, %v2697
    %v3274 = vpack.c.b16 %v2706, %v2698
    %v3275 = vpack.c.b16 %v2707, %v2699
    %v3276 = vpack.c.b16 %v2708, %v2700
    %v3277 = vpack.c.b16 %v2709, %v2701
    %v3278 = vpack.c.b16 %v2710, %v2702
    %v3279 = vpack.c.b16 %v2719, %v2711
    %v3280 = vpack.c.b16 %v2720, %v2712
    %v3281 = vpack.c.b16 %v2721, %v2713
    %v3282 = vpack.c.b16 %v2722, %v2714
    %v3283 = vpack.c.b16 %v2723, %v2715
    %v3284 = vpack.c.b16 %v2724, %v2716
    %v3285 = vpack.c.b16 %v2725, %v2717
    %v3286 = vpack.c.b16 %v2726, %v2718
    %v3287 = vpack.c.b16 %v2735, %v2727
    %v3288 = vpack.c.b16 %v2736, %v2728
    %v3289 = vpack.c.b16 %v2737, %v2729
    %v3290 = vpack.c.b16 %v2738, %v2730
    %v3291 = vpack.c.b16 %v2739, %v2731
    %v3292 = vpack.c.b16 %v2740, %v2732
    %v3293 = vpack.c.b16 %v2741, %v2733
    %v3294 = vpack.c.b16 %v2742, %v2734
    %v3295 = vpack.c.b16 %v2751, %v2743
    %v3296 = vpack.c.b16 %v2752, %v2744
    %v3297 = vpack.c.b16 %v2753, %v2745
    %v3298 = vpack.c.b16 %v2754, %v2746
    %v3299 = vpack.c.b16 %v2755, %v2747
    %v3300 = vpack.c.b16 %v2756, %v2748
    %v3301 = vpack.c.b16 %v2757, %v2749
    %v3302 = vpack.c.b16 %v2758, %v2750
    %v3303 = vpack.c.b16 %v2767, %v2759
    %v3304 = vpack.c.b16 %v2768, %v2760
    %v3305 = vpack.c.b16 %v2769, %v2761
    %v3306 = vpack.c.b16 %v2770, %v2762
    %v3307 = vpack.c.b16 %v2771, %v2763
    %v3308 = vpack.c.b16 %v2772, %v2764
    %v3309 = vpack.c.b16 %v2773, %v2765
    %v3310 = vpack.c.b16 %v2774, %v2766
    %v3311 = vpack.c.b16 %v2783, %v2775
    %v3312 = vpack.c.b16 %v2784, %v2776
    %v3313 = vpack.c.b16 %v2785, %v2777
    %v3314 = vpack.c.b16 %v2786, %v2778
    %v3315 = vpack.c.b16 %v2787, %v2779
    %v3316 = vpack.c.b16 %v2788, %v2780
    %v3317 = vpack.c.b16 %v2789, %v2781
    %v3318 = vpack.c.b16 %v2790, %v2782
    %v3319 = vpack.c.b16 %v2799, %v2791
    %v3320 = vpack.c.b16 %v2800, %v2792
    %v3321 = vpack.c.b16 %v2801, %v2793
    %v3322 = vpack.c.b16 %v2802, %v2794
    %v3323 = vpack.c.b16 %v2803, %v2795
    %v3324 = vpack.c.b16 %v2804, %v2796
    %v3325 = vpack.c.b16 %v2805, %v2797
    %v3326 = vpack.c.b16 %v2806, %v2798
    %v3327 = vpack.c.b16 %v2815, %v2807
    %v3328 = vpack.c.b16 %v2816, %v2808
    %v3329 = vpack.c.b16 %v2817, %v2809
    %v3330 = vpack.c.b16 %v2818, %v2810
    %v3331 = vpack.c.b16 %v2819, %v2811
    %v3332 = vpack.c.b16 %v2820, %v2812
    %v3333 = vpack.c.b16 %v2821, %v2813
    %v3334 = vpack.c.b16 %v2822, %v2814
    %3847 = vmatprep.subr.bf16.mxu0 %v2824
    %3848 = vmatpush1.bf16.msra.mxu0 %v2823
    %3849 = vmatprep.subr.bf16.mxu0 %v2832
    %3850 = vmatpush1.bf16.msra.mxu0 %v2831
    %3851 = vmatprep.subr.bf16.mxu0 %v2840
    %3852 = vmatpush1.bf16.msra.mxu0 %v2839
    %3853 = vmatprep.subr.bf16.mxu0 %v2848
    %3854 = vmatpush1.bf16.msra.mxu0 %v2847
    %3855 = vmatprep.subr.bf16.mxu0 %v2856
    %3856 = vmatpush1.bf16.msra.mxu0 %v2855
    %3857 = vmatprep.subr.bf16.mxu0 %v2864
    %3858 = vmatpush1.bf16.msra.mxu0 %v2863
    %3859 = vmatprep.subr.bf16.mxu0 %v2872
    %3860 = vmatpush1.bf16.msra.mxu0 %v2871
    %3861 = vmatprep.subr.bf16.mxu0 %v2880
    %3862 = vmatpush1.bf16.msra.mxu0 %v2879
    %3863 = vmatprep.subr.bf16.mxu0 %v2888
    %3864 = vmatpush1.bf16.msra.mxu0 %v2887
    %3865 = vmatprep.subr.bf16.mxu0 %v2896
    %3866 = vmatpush1.bf16.msra.mxu0 %v2895
    %3867 = vmatprep.subr.bf16.mxu0 %v2904
    %3868 = vmatpush1.bf16.msra.mxu0 %v2903
    %3869 = vmatprep.subr.bf16.mxu0 %v2912
    %3870 = vmatpush1.bf16.msra.mxu0 %v2911
    %3871 = vmatprep.subr.bf16.mxu0 %v2920
    %3872 = vmatpush1.bf16.msra.mxu0 %v2919
    %3873 = vmatprep.subr.bf16.mxu0 %v2928
    %3874 = vmatpush1.bf16.msra.mxu0 %v2927
    %3875 = vmatprep.subr.bf16.mxu0 %v2936
    %3876 = vmatpush1.bf16.msra.mxu0 %v2935
    %3877 = vmatprep.subr.bf16.mxu0 %v2944
    %3878 = vmatpush1.bf16.msra.mxu0 %v2943
    %3879 = vmatprep.mubr.bf16.mxu0 %v726
    %3880 = vmatmul.mubr.bf16.gmra.mrb[0].mxu0 %v725
    %v3881 = vpop.f32.mrb[0].mxu0
    %v3882 = vadd.f32 %v1250, %v3881
    %v3883 = vpop.f32.mrb[0].mxu0
    %v3884 = vadd.f32 %v1254, %v3883
    %v3885 = vpop.f32.mrb[0].mxu0
    %v3886 = vadd.f32 %v1250, %v3885
    %v3887 = vpop.f32.mrb[0].mxu0
    %v3888 = vadd.f32 %v1254, %v3887
    %3889 = vdwg.mxu0
    %3890 = vmatprep.subr.bf16.mxu0 %v2952
    %3891 = vmatpush1.bf16.msra.mxu0 %v2951
    %3892 = vmatprep.subr.bf16.mxu0 %v2960
    %3893 = vmatpush1.bf16.msra.mxu0 %v2959
    %3894 = vmatprep.subr.bf16.mxu0 %v2968
    %3895 = vmatpush1.bf16.msra.mxu0 %v2967
    %3896 = vmatprep.subr.bf16.mxu0 %v2976
    %3897 = vmatpush1.bf16.msra.mxu0 %v2975
    %3898 = vmatprep.subr.bf16.mxu0 %v2984
    %3899 = vmatpush1.bf16.msra.mxu0 %v2983
    %3900 = vmatprep.subr.bf16.mxu0 %v2992
    %3901 = vmatpush1.bf16.msra.mxu0 %v2991
    %3902 = vmatprep.subr.bf16.mxu0 %v3000
    %3903 = vmatpush1.bf16.msra.mxu0 %v2999
    %3904 = vmatprep.subr.bf16.mxu0 %v3008
    %3905 = vmatpush1.bf16.msra.mxu0 %v3007
    %3906 = vmatprep.subr.bf16.mxu0 %v3016
    %3907 = vmatpush1.bf16.msra.mxu0 %v3015
    %3908 = vmatprep.subr.bf16.mxu0 %v3024
    %3909 = vmatpush1.bf16.msra.mxu0 %v3023
    %3910 = vmatprep.subr.bf16.mxu0 %v3032
    %3911 = vmatpush1.bf16.msra.mxu0 %v3031
    %3912 = vmatprep.subr.bf16.mxu0 %v3040
    %3913 = vmatpush1.bf16.msra.mxu0 %v3039
    %3914 = vmatprep.subr.bf16.mxu0 %v3048
    %3915 = vmatpush1.bf16.msra.mxu0 %v3047
    %3916 = vmatprep.subr.bf16.mxu0 %v3056
    %3917 = vmatpush1.bf16.msra.mxu0 %v3055
    %3918 = vmatprep.subr.bf16.mxu0 %v3064
    %3919 = vmatpush1.bf16.msra.mxu0 %v3063
    %3920 = vmatprep.subr.bf16.mxu0 %v3072
    %3921 = vmatpush1.bf16.msra.mxu0 %v3071
    %3922 = vmatprep.mubr.bf16.mxu0 %v728
    %3923 = vmatmul.mubr.bf16.gmra.mrb[0].mxu0 %v727
    %v3924 = vpop.f32.mrb[0].mxu0
    %v3925 = vadd.f32 %v3882, %v3924
    %v3926 = vpop.f32.mrb[0].mxu0
    %v3927 = vadd.f32 %v3884, %v3926
    %v3928 = vpop.f32.mrb[0].mxu0
    %v3929 = vadd.f32 %v3886, %v3928
    %v3930 = vpop.f32.mrb[0].mxu0
    %v3931 = vadd.f32 %v3888, %v3930
    %3932 = vdwg.mxu0
    %3933 = vmatprep.subr.bf16.mxu0 %v3080
    %3934 = vmatpush1.bf16.msra.mxu0 %v3079
    %3935 = vmatprep.subr.bf16.mxu0 %v3088
    %3936 = vmatpush1.bf16.msra.mxu0 %v3087
    %3937 = vmatprep.subr.bf16.mxu0 %v3096
    %3938 = vmatpush1.bf16.msra.mxu0 %v3095
    %3939 = vmatprep.subr.bf16.mxu0 %v3104
    %3940 = vmatpush1.bf16.msra.mxu0 %v3103
    %3941 = vmatprep.subr.bf16.mxu0 %v3112
    %3942 = vmatpush1.bf16.msra.mxu0 %v3111
    %3943 = vmatprep.subr.bf16.mxu0 %v3120
    %3944 = vmatpush1.bf16.msra.mxu0 %v3119
    %3945 = vmatprep.subr.bf16.mxu0 %v3128
    %3946 = vmatpush1.bf16.msra.mxu0 %v3127
    %3947 = vmatprep.subr.bf16.mxu0 %v3136
    %3948 = vmatpush1.bf16.msra.mxu0 %v3135
    %3949 = vmatprep.subr.bf16.mxu0 %v3144
    %3950 = vmatpush1.bf16.msra.mxu0 %v3143
    %3951 = vmatprep.subr.bf16.mxu0 %v3152
    %3952 = vmatpush1.bf16.msra.mxu0 %v3151
    %3953 = vmatprep.subr.bf16.mxu0 %v3160
    %3954 = vmatpush1.bf16.msra.mxu0 %v3159
    %3955 = vmatprep.subr.bf16.mxu0 %v3168
    %3956 = vmatpush1.bf16.msra.mxu0 %v3167
    %3957 = vmatprep.subr.bf16.mxu0 %v3176
    %3958 = vmatpush1.bf16.msra.mxu0 %v3175
    %3959 = vmatprep.subr.bf16.mxu0 %v3184
    %3960 = vmatpush1.bf16.msra.mxu0 %v3183
    %3961 = vmatprep.subr.bf16.mxu0 %v3192
    %3962 = vmatpush1.bf16.msra.mxu0 %v3191
    %3963 = vmatprep.subr.bf16.mxu0 %v3200
    %3964 = vmatpush1.bf16.msra.mxu0 %v3199
    %3965 = vmatprep.mubr.bf16.mxu0 %v730
    %3966 = vmatmul.mubr.bf16.gmra.mrb[0].mxu0 %v729
    %v3967 = vpop.f32.mrb[0].mxu0
    %v3968 = vadd.f32 %v3925, %v3967
    %v3969 = vpop.f32.mrb[0].mxu0
    %v3970 = vadd.f32 %v3927, %v3969
    %v3971 = vpop.f32.mrb[0].mxu0
    %v3972 = vadd.f32 %v3929, %v3971
    %v3973 = vpop.f32.mrb[0].mxu0
    %v3974 = vadd.f32 %v3931, %v3973
    %3975 = vdwg.mxu0
    %3976 = vmatprep.subr.bf16.mxu0 %v3208
    %3977 = vmatpush1.bf16.msra.mxu0 %v3207
    %3978 = vmatprep.subr.bf16.mxu0 %v3216
    %3979 = vmatpush1.bf16.msra.mxu0 %v3215
    %3980 = vmatprep.subr.bf16.mxu0 %v3224
    %3981 = vmatpush1.bf16.msra.mxu0 %v3223
    %3982 = vmatprep.subr.bf16.mxu0 %v3232
    %3983 = vmatpush1.bf16.msra.mxu0 %v3231
    %3984 = vmatprep.subr.bf16.mxu0 %v3240
    %3985 = vmatpush1.bf16.msra.mxu0 %v3239
    %3986 = vmatprep.subr.bf16.mxu0 %v3248
    %3987 = vmatpush1.bf16.msra.mxu0 %v3247
    %3988 = vmatprep.subr.bf16.mxu0 %v3256
    %3989 = vmatpush1.bf16.msra.mxu0 %v3255
    %3990 = vmatprep.subr.bf16.mxu0 %v3264
    %3991 = vmatpush1.bf16.msra.mxu0 %v3263
    %3992 = vmatprep.subr.bf16.mxu0 %v3272
    %3993 = vmatpush1.bf16.msra.mxu0 %v3271
    %3994 = vmatprep.subr.bf16.mxu0 %v3280
    %3995 = vmatpush1.bf16.msra.mxu0 %v3279
    %3996 = vmatprep.subr.bf16.mxu0 %v3288
    %3997 = vmatpush1.bf16.msra.mxu0 %v3287
    %3998 = vmatprep.subr.bf16.mxu0 %v3296
    %3999 = vmatpush1.bf16.msra.mxu0 %v3295
    %4000 = vmatprep.subr.bf16.mxu0 %v3304
    %4001 = vmatpush1.bf16.msra.mxu0 %v3303
    %4002 = vmatprep.subr.bf16.mxu0 %v3312
    %4003 = vmatpush1.bf16.msra.mxu0 %v3311
    %4004 = vmatprep.subr.bf16.mxu0 %v3320
    %4005 = vmatpush1.bf16.msra.mxu0 %v3319
    %4006 = vmatprep.subr.bf16.mxu0 %v3328
    %4007 = vmatpush1.bf16.msra.mxu0 %v3327
    %4008 = vmatprep.mubr.bf16.mxu0 %v732
    %4009 = vmatmul.mubr.bf16.gmra.mrb[0].mxu0 %v731
    %v4010 = vpop.f32.mrb[0].mxu0
    %v4011 = vadd.f32 %v3968, %v4010
    %v4012 = vpop.f32.mrb[0].mxu0
    %v4013 = vadd.f32 %v3970, %v4012
    %v4014 = vpop.f32.mrb[0].mxu0
    %v4015 = vadd.f32 %v3972, %v4014
    %v4016 = vpop.f32.mrb[0].mxu0
    %v4017 = vadd.f32 %v3974, %v4016
    %4018 = vdwg.mxu0
    %4019 = vmatprep.subr.bf16.mxu0 %v2826
    %4020 = vmatpush1.bf16.msra.mxu0 %v2825
    %4021 = vmatprep.subr.bf16.mxu0 %v2834
    %4022 = vmatpush1.bf16.msra.mxu0 %v2833
    %4023 = vmatprep.subr.bf16.mxu0 %v2842
    %4024 = vmatpush1.bf16.msra.mxu0 %v2841
    %4025 = vmatprep.subr.bf16.mxu0 %v2850
    %4026 = vmatpush1.bf16.msra.mxu0 %v2849
    %4027 = vmatprep.subr.bf16.mxu0 %v2858
    %4028 = vmatpush1.bf16.msra.mxu0 %v2857
    %4029 = vmatprep.subr.bf16.mxu0 %v2866
    %4030 = vmatpush1.bf16.msra.mxu0 %v2865
    %4031 = vmatprep.subr.bf16.mxu0 %v2874
    %4032 = vmatpush1.bf16.msra.mxu0 %v2873
    %4033 = vmatprep.subr.bf16.mxu0 %v2882
    %4034 = vmatpush1.bf16.msra.mxu0 %v2881
    %4035 = vmatprep.subr.bf16.mxu0 %v2890
    %4036 = vmatpush1.bf16.msra.mxu0 %v2889
    %4037 = vmatprep.subr.bf16.mxu0 %v2898
    %4038 = vmatpush1.bf16.msra.mxu0 %v2897
    %4039 = vmatprep.subr.bf16.mxu0 %v2906
    %4040 = vmatpush1.bf16.msra.mxu0 %v2905
    %4041 = vmatprep.subr.bf16.mxu0 %v2914
    %4042 = vmatpush1.bf16.msra.mxu0 %v2913
    %4043 = vmatprep.subr.bf16.mxu0 %v2922
    %4044 = vmatpush1.bf16.msra.mxu0 %v2921
    %4045 = vmatprep.subr.bf16.mxu0 %v2930
    %4046 = vmatpush1.bf16.msra.mxu0 %v2929
    %4047 = vmatprep.subr.bf16.mxu0 %v2938
    %4048 = vmatpush1.bf16.msra.mxu0 %v2937
    %4049 = vmatprep.subr.bf16.mxu0 %v2946
    %4050 = vmatpush1.bf16.msra.mxu0 %v2945
    %4051 = vmatprep.mubr.bf16.mxu0 %v726
    %4052 = vmatmul.mubr.bf16.gmra.mrb[0].mxu0 %v725
    %v4053 = vpop.f32.mrb[0].mxu0
    %v4054 = vadd.f32 %v1258, %v4053
    %v4055 = vpop.f32.mrb[0].mxu0
    %v4056 = vadd.f32 %v1262, %v4055
    %v4057 = vpop.f32.mrb[0].mxu0
    %v4058 = vadd.f32 %v1258, %v4057
    %v4059 = vpop.f32.mrb[0].mxu0
    %v4060 = vadd.f32 %v1262, %v4059
    %4061 = vdwg.mxu0
    %4062 = vmatprep.subr.bf16.mxu0 %v2954
    %4063 = vmatpush1.bf16.msra.mxu0 %v2953
    %4064 = vmatprep.subr.bf16.mxu0 %v2962
    %4065 = vmatpush1.bf16.msra.mxu0 %v2961
    %4066 = vmatprep.subr.bf16.mxu0 %v2970
    %4067 = vmatpush1.bf16.msra.mxu0 %v2969
    %4068 = vmatprep.subr.bf16.mxu0 %v2978
    %4069 = vmatpush1.bf16.msra.mxu0 %v2977
    %4070 = vmatprep.subr.bf16.mxu0 %v2986
    %4071 = vmatpush1.bf16.msra.mxu0 %v2985
    %4072 = vmatprep.subr.bf16.mxu0 %v2994
    %4073 = vmatpush1.bf16.msra.mxu0 %v2993
    %4074 = vmatprep.subr.bf16.mxu0 %v3002
    %4075 = vmatpush1.bf16.msra.mxu0 %v3001
    %4076 = vmatprep.subr.bf16.mxu0 %v3010
    %4077 = vmatpush1.bf16.msra.mxu0 %v3009
    %4078 = vmatprep.subr.bf16.mxu0 %v3018
    %4079 = vmatpush1.bf16.msra.mxu0 %v3017
    %4080 = vmatprep.subr.bf16.mxu0 %v3026
    %4081 = vmatpush1.bf16.msra.mxu0 %v3025
    %4082 = vmatprep.subr.bf16.mxu0 %v3034
    %4083 = vmatpush1.bf16.msra.mxu0 %v3033
    %4084 = vmatprep.subr.bf16.mxu0 %v3042
    %4085 = vmatpush1.bf16.msra.mxu0 %v3041
    %4086 = vmatprep.subr.bf16.mxu0 %v3050
    %4087 = vmatpush1.bf16.msra.mxu0 %v3049
    %4088 = vmatprep.subr.bf16.mxu0 %v3058
    %4089 = vmatpush1.bf16.msra.mxu0 %v3057
    %4090 = vmatprep.subr.bf16.mxu0 %v3066
    %4091 = vmatpush1.bf16.msra.mxu0 %v3065
    %4092 = vmatprep.subr.bf16.mxu0 %v3074
    %4093 = vmatpush1.bf16.msra.mxu0 %v3073
    %4094 = vmatprep.mubr.bf16.mxu0 %v728
    %4095 = vmatmul.mubr.bf16.gmra.mrb[0].mxu0 %v727
    %v4096 = vpop.f32.mrb[0].mxu0
    %v4097 = vadd.f32 %v4054, %v4096
    %v4098 = vpop.f32.mrb[0].mxu0
    %v4099 = vadd.f32 %v4056, %v4098
    %v4100 = vpop.f32.mrb[0].mxu0
    %v4101 = vadd.f32 %v4058, %v4100
    %v4102 = vpop.f32.mrb[0].mxu0
    %v4103 = vadd.f32 %v4060, %v4102
    %4104 = vdwg.mxu0
    %4105 = vmatprep.subr.bf16.mxu0 %v3082
    %4106 = vmatpush1.bf16.msra.mxu0 %v3081
    %4107 = vmatprep.subr.bf16.mxu0 %v3090
    %4108 = vmatpush1.bf16.msra.mxu0 %v3089
    %4109 = vmatprep.subr.bf16.mxu0 %v3098
    %4110 = vmatpush1.bf16.msra.mxu0 %v3097
    %4111 = vmatprep.subr.bf16.mxu0 %v3106
    %4112 = vmatpush1.bf16.msra.mxu0 %v3105
    %4113 = vmatprep.subr.bf16.mxu0 %v3114
    %4114 = vmatpush1.bf16.msra.mxu0 %v3113
    %4115 = vmatprep.subr.bf16.mxu0 %v3122
    %4116 = vmatpush1.bf16.msra.mxu0 %v3121
    %4117 = vmatprep.subr.bf16.mxu0 %v3130
    %4118 = vmatpush1.bf16.msra.mxu0 %v3129
    %4119 = vmatprep.subr.bf16.mxu0 %v3138
    %4120 = vmatpush1.bf16.msra.mxu0 %v3137
    %4121 = vmatprep.subr.bf16.mxu0 %v3146
    %4122 = vmatpush1.bf16.msra.mxu0 %v3145
    %4123 = vmatprep.subr.bf16.mxu0 %v3154
    %4124 = vmatpush1.bf16.msra.mxu0 %v3153
    %4125 = vmatprep.subr.bf16.mxu0 %v3162
    %4126 = vmatpush1.bf16.msra.mxu0 %v3161
    %4127 = vmatprep.subr.bf16.mxu0 %v3170
    %4128 = vmatpush1.bf16.msra.mxu0 %v3169
    %4129 = vmatprep.subr.bf16.mxu0 %v3178
    %4130 = vmatpush1.bf16.msra.mxu0 %v3177
    %4131 = vmatprep.subr.bf16.mxu0 %v3186
    %4132 = vmatpush1.bf16.msra.mxu0 %v3185
    %4133 = vmatprep.subr.bf16.mxu0 %v3194
    %4134 = vmatpush1.bf16.msra.mxu0 %v3193
    %4135 = vmatprep.subr.bf16.mxu0 %v3202
    %4136 = vmatpush1.bf16.msra.mxu0 %v3201
    %4137 = vmatprep.mubr.bf16.mxu0 %v730
    %4138 = vmatmul.mubr.bf16.gmra.mrb[0].mxu0 %v729
    %v4139 = vpop.f32.mrb[0].mxu0
    %v4140 = vadd.f32 %v4097, %v4139
    %v4141 = vpop.f32.mrb[0].mxu0
    %v4142 = vadd.f32 %v4099, %v4141
    %v4143 = vpop.f32.mrb[0].mxu0
    %v4144 = vadd.f32 %v4101, %v4143
    %v4145 = vpop.f32.mrb[0].mxu0
    %v4146 = vadd.f32 %v4103, %v4145
    %4147 = vdwg.mxu0
    %4148 = vmatprep.subr.bf16.mxu0 %v3210
    %4149 = vmatpush1.bf16.msra.mxu0 %v3209
    %4150 = vmatprep.subr.bf16.mxu0 %v3218
    %4151 = vmatpush1.bf16.msra.mxu0 %v3217
    %4152 = vmatprep.subr.bf16.mxu0 %v3226
    %4153 = vmatpush1.bf16.msra.mxu0 %v3225
    %4154 = vmatprep.subr.bf16.mxu0 %v3234
    %4155 = vmatpush1.bf16.msra.mxu0 %v3233
    %4156 = vmatprep.subr.bf16.mxu0 %v3242
    %4157 = vmatpush1.bf16.msra.mxu0 %v3241
    %4158 = vmatprep.subr.bf16.mxu0 %v3250
    %4159 = vmatpush1.bf16.msra.mxu0 %v3249
    %4160 = vmatprep.subr.bf16.mxu0 %v3258
    %4161 = vmatpush1.bf16.msra.mxu0 %v3257
    %4162 = vmatprep.subr.bf16.mxu0 %v3266
    %4163 = vmatpush1.bf16.msra.mxu0 %v3265
    %4164 = vmatprep.subr.bf16.mxu0 %v3274
    %4165 = vmatpush1.bf16.msra.mxu0 %v3273
    %4166 = vmatprep.subr.bf16.mxu0 %v3282
    %4167 = vmatpush1.bf16.msra.mxu0 %v3281
    %4168 = vmatprep.subr.bf16.mxu0 %v3290
    %4169 = vmatpush1.bf16.msra.mxu0 %v3289
    %4170 = vmatprep.subr.bf16.mxu0 %v3298
    %4171 = vmatpush1.bf16.msra.mxu0 %v3297
    %4172 = vmatprep.subr.bf16.mxu0 %v3306
    %4173 = vmatpush1.bf16.msra.mxu0 %v3305
    %4174 = vmatprep.subr.bf16.mxu0 %v3314
    %4175 = vmatpush1.bf16.msra.mxu0 %v3313
    %4176 = vmatprep.subr.bf16.mxu0 %v3322
    %4177 = vmatpush1.bf16.msra.mxu0 %v3321
    %4178 = vmatprep.subr.bf16.mxu0 %v3330
    %4179 = vmatpush1.bf16.msra.mxu0 %v3329
    %4180 = vmatprep.mubr.bf16.mxu0 %v732
    %4181 = vmatmul.mubr.bf16.gmra.mrb[0].mxu0 %v731
    %v4182 = vpop.f32.mrb[0].mxu0
    %v4183 = vadd.f32 %v4140, %v4182
    %v4184 = vpop.f32.mrb[0].mxu0
    %v4185 = vadd.f32 %v4142, %v4184
    %v4186 = vpop.f32.mrb[0].mxu0
    %v4187 = vadd.f32 %v4144, %v4186
    %v4188 = vpop.f32.mrb[0].mxu0
    %v4189 = vadd.f32 %v4146, %v4188
    %4190 = vdwg.mxu0
    %4191 = vmatprep.subr.bf16.mxu0 %v2828
    %4192 = vmatpush1.bf16.msra.mxu0 %v2827
    %4193 = vmatprep.subr.bf16.mxu0 %v2836
    %4194 = vmatpush1.bf16.msra.mxu0 %v2835
    %4195 = vmatprep.subr.bf16.mxu0 %v2844
    %4196 = vmatpush1.bf16.msra.mxu0 %v2843
    %4197 = vmatprep.subr.bf16.mxu0 %v2852
    %4198 = vmatpush1.bf16.msra.mxu0 %v2851
    %4199 = vmatprep.subr.bf16.mxu0 %v2860
    %4200 = vmatpush1.bf16.msra.mxu0 %v2859
    %4201 = vmatprep.subr.bf16.mxu0 %v2868
    %4202 = vmatpush1.bf16.msra.mxu0 %v2867
    %4203 = vmatprep.subr.bf16.mxu0 %v2876
    %4204 = vmatpush1.bf16.msra.mxu0 %v2875
    %4205 = vmatprep.subr.bf16.mxu0 %v2884
    %4206 = vmatpush1.bf16.msra.mxu0 %v2883
    %4207 = vmatprep.subr.bf16.mxu0 %v2892
    %4208 = vmatpush1.bf16.msra.mxu0 %v2891
    %4209 = vmatprep.subr.bf16.mxu0 %v2900
    %4210 = vmatpush1.bf16.msra.mxu0 %v2899
    %4211 = vmatprep.subr.bf16.mxu0 %v2908
    %4212 = vmatpush1.bf16.msra.mxu0 %v2907
    %4213 = vmatprep.subr.bf16.mxu0 %v2916
    %4214 = vmatpush1.bf16.msra.mxu0 %v2915
    %4215 = vmatprep.subr.bf16.mxu0 %v2924
    %4216 = vmatpush1.bf16.msra.mxu0 %v2923
    %4217 = vmatprep.subr.bf16.mxu0 %v2932
    %4218 = vmatpush1.bf16.msra.mxu0 %v2931
    %4219 = vmatprep.subr.bf16.mxu0 %v2940
    %4220 = vmatpush1.bf16.msra.mxu0 %v2939
    %4221 = vmatprep.subr.bf16.mxu0 %v2948
    %4222 = vmatpush1.bf16.msra.mxu0 %v2947
    %4223 = vmatprep.mubr.bf16.mxu0 %v726
    %4224 = vmatmul.mubr.bf16.gmra.mrb[0].mxu0 %v725
    %v4225 = vpop.f32.mrb[0].mxu0
    %v4226 = vadd.f32 %v1266, %v4225
    %v4227 = vpop.f32.mrb[0].mxu0
    %v4228 = vadd.f32 %v1270, %v4227
    %v4229 = vpop.f32.mrb[0].mxu0
    %v4230 = vadd.f32 %v1266, %v4229
    %v4231 = vpop.f32.mrb[0].mxu0
    %v4232 = vadd.f32 %v1270, %v4231
    %4233 = vdwg.mxu0
    %4234 = vmatprep.subr.bf16.mxu0 %v2956
    %4235 = vmatpush1.bf16.msra.mxu0 %v2955
    %4236 = vmatprep.subr.bf16.mxu0 %v2964
    %4237 = vmatpush1.bf16.msra.mxu0 %v2963
    %4238 = vmatprep.subr.bf16.mxu0 %v2972
    %4239 = vmatpush1.bf16.msra.mxu0 %v2971
    %4240 = vmatprep.subr.bf16.mxu0 %v2980
    %4241 = vmatpush1.bf16.msra.mxu0 %v2979
    %4242 = vmatprep.subr.bf16.mxu0 %v2988
    %4243 = vmatpush1.bf16.msra.mxu0 %v2987
    %4244 = vmatprep.subr.bf16.mxu0 %v2996
    %4245 = vmatpush1.bf16.msra.mxu0 %v2995
    %4246 = vmatprep.subr.bf16.mxu0 %v3004
    %4247 = vmatpush1.bf16.msra.mxu0 %v3003
    %4248 = vmatprep.subr.bf16.mxu0 %v3012
    %4249 = vmatpush1.bf16.msra.mxu0 %v3011
    %4250 = vmatprep.subr.bf16.mxu0 %v3020
    %4251 = vmatpush1.bf16.msra.mxu0 %v3019
    %4252 = vmatprep.subr.bf16.mxu0 %v3028
    %4253 = vmatpush1.bf16.msra.mxu0 %v3027
    %4254 = vmatprep.subr.bf16.mxu0 %v3036
    %4255 = vmatpush1.bf16.msra.mxu0 %v3035
    %4256 = vmatprep.subr.bf16.mxu0 %v3044
    %4257 = vmatpush1.bf16.msra.mxu0 %v3043
    %4258 = vmatprep.subr.bf16.mxu0 %v3052
    %4259 = vmatpush1.bf16.msra.mxu0 %v3051
    %4260 = vmatprep.subr.bf16.mxu0 %v3060
    %4261 = vmatpush1.bf16.msra.mxu0 %v3059
    %4262 = vmatprep.subr.bf16.mxu0 %v3068
    %4263 = vmatpush1.bf16.msra.mxu0 %v3067
    %4264 = vmatprep.subr.bf16.mxu0 %v3076
    %4265 = vmatpush1.bf16.msra.mxu0 %v3075
    %4266 = vmatprep.mubr.bf16.mxu0 %v728
    %4267 = vmatmul.mubr.bf16.gmra.mrb[0].mxu0 %v727
    %v4268 = vpop.f32.mrb[0].mxu0
    %v4269 = vadd.f32 %v4226, %v4268
    %v4270 = vpop.f32.mrb[0].mxu0
    %v4271 = vadd.f32 %v4228, %v4270
    %v4272 = vpop.f32.mrb[0].mxu0
    %v4273 = vadd.f32 %v4230, %v4272
    %v4274 = vpop.f32.mrb[0].mxu0
    %v4275 = vadd.f32 %v4232, %v4274
    %4276 = vdwg.mxu0
    %4277 = vmatprep.subr.bf16.mxu0 %v3084
    %4278 = vmatpush1.bf16.msra.mxu0 %v3083
    %4279 = vmatprep.subr.bf16.mxu0 %v3092
    %4280 = vmatpush1.bf16.msra.mxu0 %v3091
    %4281 = vmatprep.subr.bf16.mxu0 %v3100
    %4282 = vmatpush1.bf16.msra.mxu0 %v3099
    %4283 = vmatprep.subr.bf16.mxu0 %v3108
    %4284 = vmatpush1.bf16.msra.mxu0 %v3107
    %4285 = vmatprep.subr.bf16.mxu0 %v3116
    %4286 = vmatpush1.bf16.msra.mxu0 %v3115
    %4287 = vmatprep.subr.bf16.mxu0 %v3124
    %4288 = vmatpush1.bf16.msra.mxu0 %v3123
    %4289 = vmatprep.subr.bf16.mxu0 %v3132
    %4290 = vmatpush1.bf16.msra.mxu0 %v3131
    %4291 = vmatprep.subr.bf16.mxu0 %v3140
    %4292 = vmatpush1.bf16.msra.mxu0 %v3139
    %4293 = vmatprep.subr.bf16.mxu0 %v3148
    %4294 = vmatpush1.bf16.msra.mxu0 %v3147
    %4295 = vmatprep.subr.bf16.mxu0 %v3156
    %4296 = vmatpush1.bf16.msra.mxu0 %v3155
    %4297 = vmatprep.subr.bf16.mxu0 %v3164
    %4298 = vmatpush1.bf16.msra.mxu0 %v3163
    %4299 = vmatprep.subr.bf16.mxu0 %v3172
    %4300 = vmatpush1.bf16.msra.mxu0 %v3171
    %4301 = vmatprep.subr.bf16.mxu0 %v3180
    %4302 = vmatpush1.bf16.msra.mxu0 %v3179
    %4303 = vmatprep.subr.bf16.mxu0 %v3188
    %4304 = vmatpush1.bf16.msra.mxu0 %v3187
    %4305 = vmatprep.subr.bf16.mxu0 %v3196
    %4306 = vmatpush1.bf16.msra.mxu0 %v3195
    %4307 = vmatprep.subr.bf16.mxu0 %v3204
    %4308 = vmatpush1.bf16.msra.mxu0 %v3203
    %4309 = vmatprep.mubr.bf16.mxu0 %v730
    %4310 = vmatmul.mubr.bf16.gmra.mrb[0].mxu0 %v729
    %v4311 = vpop.f32.mrb[0].mxu0
    %v4312 = vadd.f32 %v4269, %v4311
    %v4313 = vpop.f32.mrb[0].mxu0
    %v4314 = vadd.f32 %v4271, %v4313
    %v4315 = vpop.f32.mrb[0].mxu0
    %v4316 = vadd.f32 %v4273, %v4315
    %v4317 = vpop.f32.mrb[0].mxu0
    %v4318 = vadd.f32 %v4275, %v4317
    %4319 = vdwg.mxu0
    %4320 = vmatprep.subr.bf16.mxu0 %v3212
    %4321 = vmatpush1.bf16.msra.mxu0 %v3211
    %4322 = vmatprep.subr.bf16.mxu0 %v3220
    %4323 = vmatpush1.bf16.msra.mxu0 %v3219
    %4324 = vmatprep.subr.bf16.mxu0 %v3228
    %4325 = vmatpush1.bf16.msra.mxu0 %v3227
    %4326 = vmatprep.subr.bf16.mxu0 %v3236
    %4327 = vmatpush1.bf16.msra.mxu0 %v3235
    %4328 = vmatprep.subr.bf16.mxu0 %v3244
    %4329 = vmatpush1.bf16.msra.mxu0 %v3243
    %4330 = vmatprep.subr.bf16.mxu0 %v3252
    %4331 = vmatpush1.bf16.msra.mxu0 %v3251
    %4332 = vmatprep.subr.bf16.mxu0 %v3260
    %4333 = vmatpush1.bf16.msra.mxu0 %v3259
    %4334 = vmatprep.subr.bf16.mxu0 %v3268
    %4335 = vmatpush1.bf16.msra.mxu0 %v3267
    %4336 = vmatprep.subr.bf16.mxu0 %v3276
    %4337 = vmatpush1.bf16.msra.mxu0 %v3275
    %4338 = vmatprep.subr.bf16.mxu0 %v3284
    %4339 = vmatpush1.bf16.msra.mxu0 %v3283
    %4340 = vmatprep.subr.bf16.mxu0 %v3292
    %4341 = vmatpush1.bf16.msra.mxu0 %v3291
    %4342 = vmatprep.subr.bf16.mxu0 %v3300
    %4343 = vmatpush1.bf16.msra.mxu0 %v3299
    %4344 = vmatprep.subr.bf16.mxu0 %v3308
    %4345 = vmatpush1.bf16.msra.mxu0 %v3307
    %4346 = vmatprep.subr.bf16.mxu0 %v3316
    %4347 = vmatpush1.bf16.msra.mxu0 %v3315
    %4348 = vmatprep.subr.bf16.mxu0 %v3324
    %4349 = vmatpush1.bf16.msra.mxu0 %v3323
    %4350 = vmatprep.subr.bf16.mxu0 %v3332
    %4351 = vmatpush1.bf16.msra.mxu0 %v3331
    %4352 = vmatprep.mubr.bf16.mxu0 %v732
    %4353 = vmatmul.mubr.bf16.gmra.mrb[0].mxu0 %v731
    %v4354 = vpop.f32.mrb[0].mxu0
    %v4355 = vadd.f32 %v4312, %v4354
    %v4356 = vpop.f32.mrb[0].mxu0
    %v4357 = vadd.f32 %v4314, %v4356
    %v4358 = vpop.f32.mrb[0].mxu0
    %v4359 = vadd.f32 %v4316, %v4358
    %v4360 = vpop.f32.mrb[0].mxu0
    %v4361 = vadd.f32 %v4318, %v4360
    %4362 = vdwg.mxu0
    %4363 = vmatprep.subr.bf16.mxu0 %v2830
    %4364 = vmatpush1.bf16.msra.mxu0 %v2829
    %4365 = vmatprep.subr.bf16.mxu0 %v2838
    %4366 = vmatpush1.bf16.msra.mxu0 %v2837
    %4367 = vmatprep.subr.bf16.mxu0 %v2846
    %4368 = vmatpush1.bf16.msra.mxu0 %v2845
    %4369 = vmatprep.subr.bf16.mxu0 %v2854
    %4370 = vmatpush1.bf16.msra.mxu0 %v2853
    %4371 = vmatprep.subr.bf16.mxu0 %v2862
    %4372 = vmatpush1.bf16.msra.mxu0 %v2861
    %4373 = vmatprep.subr.bf16.mxu0 %v2870
    %4374 = vmatpush1.bf16.msra.mxu0 %v2869
    %4375 = vmatprep.subr.bf16.mxu0 %v2878
    %4376 = vmatpush1.bf16.msra.mxu0 %v2877
    %4377 = vmatprep.subr.bf16.mxu0 %v2886
    %4378 = vmatpush1.bf16.msra.mxu0 %v2885
    %4379 = vmatprep.subr.bf16.mxu0 %v2894
    %4380 = vmatpush1.bf16.msra.mxu0 %v2893
    %4381 = vmatprep.subr.bf16.mxu0 %v2902
    %4382 = vmatpush1.bf16.msra.mxu0 %v2901
    %4383 = vmatprep.subr.bf16.mxu0 %v2910
    %4384 = vmatpush1.bf16.msra.mxu0 %v2909
    %4385 = vmatprep.subr.bf16.mxu0 %v2918
    %4386 = vmatpush1.bf16.msra.mxu0 %v2917
    %4387 = vmatprep.subr.bf16.mxu0 %v2926
    %4388 = vmatpush1.bf16.msra.mxu0 %v2925
    %4389 = vmatprep.subr.bf16.mxu0 %v2934
    %4390 = vmatpush1.bf16.msra.mxu0 %v2933
    %4391 = vmatprep.subr.bf16.mxu0 %v2942
    %4392 = vmatpush1.bf16.msra.mxu0 %v2941
    %4393 = vmatprep.subr.bf16.mxu0 %v2950
    %4394 = vmatpush1.bf16.msra.mxu0 %v2949
    %4395 = vmatprep.mubr.bf16.mxu0 %v726
    %4396 = vmatmul.mubr.bf16.gmra.mrb[0].mxu0 %v725
    %v4397 = vpop.f32.mrb[0].mxu0
    %v4398 = vadd.f32 %v1274, %v4397
    %v4399 = vpop.f32.mrb[0].mxu0
    %v4400 = vadd.f32 %v1278, %v4399
    %v4401 = vpop.f32.mrb[0].mxu0
    %v4402 = vadd.f32 %v1274, %v4401
    %v4403 = vpop.f32.mrb[0].mxu0
    %v4404 = vadd.f32 %v1278, %v4403
    %4405 = vdwg.mxu0
    %4406 = vmatprep.subr.bf16.mxu0 %v2958
    %4407 = vmatpush1.bf16.msra.mxu0 %v2957
    %4408 = vmatprep.subr.bf16.mxu0 %v2966
    %4409 = vmatpush1.bf16.msra.mxu0 %v2965
    %4410 = vmatprep.subr.bf16.mxu0 %v2974
    %4411 = vmatpush1.bf16.msra.mxu0 %v2973
    %4412 = vmatprep.subr.bf16.mxu0 %v2982
    %4413 = vmatpush1.bf16.msra.mxu0 %v2981
    %4414 = vmatprep.subr.bf16.mxu0 %v2990
    %4415 = vmatpush1.bf16.msra.mxu0 %v2989
    %4416 = vmatprep.subr.bf16.mxu0 %v2998
    %4417 = vmatpush1.bf16.msra.mxu0 %v2997
    %4418 = vmatprep.subr.bf16.mxu0 %v3006
    %4419 = vmatpush1.bf16.msra.mxu0 %v3005
    %4420 = vmatprep.subr.bf16.mxu0 %v3014
    %4421 = vmatpush1.bf16.msra.mxu0 %v3013
    %4422 = vmatprep.subr.bf16.mxu0 %v3022
    %4423 = vmatpush1.bf16.msra.mxu0 %v3021
    %4424 = vmatprep.subr.bf16.mxu0 %v3030
    %4425 = vmatpush1.bf16.msra.mxu0 %v3029
    %4426 = vmatprep.subr.bf16.mxu0 %v3038
    %4427 = vmatpush1.bf16.msra.mxu0 %v3037
    %4428 = vmatprep.subr.bf16.mxu0 %v3046
    %4429 = vmatpush1.bf16.msra.mxu0 %v3045
    %4430 = vmatprep.subr.bf16.mxu0 %v3054
    %4431 = vmatpush1.bf16.msra.mxu0 %v3053
    %4432 = vmatprep.subr.bf16.mxu0 %v3062
    %4433 = vmatpush1.bf16.msra.mxu0 %v3061
    %4434 = vmatprep.subr.bf16.mxu0 %v3070
    %4435 = vmatpush1.bf16.msra.mxu0 %v3069
    %4436 = vmatprep.subr.bf16.mxu0 %v3078
    %4437 = vmatpush1.bf16.msra.mxu0 %v3077
    %4438 = vmatprep.mubr.bf16.mxu0 %v728
    %4439 = vmatmul.mubr.bf16.gmra.mrb[0].mxu0 %v727
    %v4440 = vpop.f32.mrb[0].mxu0
    %v4441 = vadd.f32 %v4398, %v4440
    %v4442 = vpop.f32.mrb[0].mxu0
    %v4443 = vadd.f32 %v4400, %v4442
    %v4444 = vpop.f32.mrb[0].mxu0
    %v4445 = vadd.f32 %v4402, %v4444
    %v4446 = vpop.f32.mrb[0].mxu0
    %v4447 = vadd.f32 %v4404, %v4446
    %4448 = vdwg.mxu0
    %4449 = vmatprep.subr.bf16.mxu0 %v3086
    %4450 = vmatpush1.bf16.msra.mxu0 %v3085
    %4451 = vmatprep.subr.bf16.mxu0 %v3094
    %4452 = vmatpush1.bf16.msra.mxu0 %v3093
    %4453 = vmatprep.subr.bf16.mxu0 %v3102
    %4454 = vmatpush1.bf16.msra.mxu0 %v3101
    %4455 = vmatprep.subr.bf16.mxu0 %v3110
    %4456 = vmatpush1.bf16.msra.mxu0 %v3109
    %4457 = vmatprep.subr.bf16.mxu0 %v3118
    %4458 = vmatpush1.bf16.msra.mxu0 %v3117
    %4459 = vmatprep.subr.bf16.mxu0 %v3126
    %4460 = vmatpush1.bf16.msra.mxu0 %v3125
    %4461 = vmatprep.subr.bf16.mxu0 %v3134
    %4462 = vmatpush1.bf16.msra.mxu0 %v3133
    %4463 = vmatprep.subr.bf16.mxu0 %v3142
    %4464 = vmatpush1.bf16.msra.mxu0 %v3141
    %4465 = vmatprep.subr.bf16.mxu0 %v3150
    %4466 = vmatpush1.bf16.msra.mxu0 %v3149
    %4467 = vmatprep.subr.bf16.mxu0 %v3158
    %4468 = vmatpush1.bf16.msra.mxu0 %v3157
    %4469 = vmatprep.subr.bf16.mxu0 %v3166
    %4470 = vmatpush1.bf16.msra.mxu0 %v3165
    %4471 = vmatprep.subr.bf16.mxu0 %v3174
    %4472 = vmatpush1.bf16.msra.mxu0 %v3173
    %4473 = vmatprep.subr.bf16.mxu0 %v3182
    %4474 = vmatpush1.bf16.msra.mxu0 %v3181
    %4475 = vmatprep.subr.bf16.mxu0 %v3190
    %4476 = vmatpush1.bf16.msra.mxu0 %v3189
    %4477 = vmatprep.subr.bf16.mxu0 %v3198
    %4478 = vmatpush1.bf16.msra.mxu0 %v3197
    %4479 = vmatprep.subr.bf16.mxu0 %v3206
    %4480 = vmatpush1.bf16.msra.mxu0 %v3205
    %4481 = vmatprep.mubr.bf16.mxu0 %v730
    %4482 = vmatmul.mubr.bf16.gmra.mrb[0].mxu0 %v729
    %v4483 = vpop.f32.mrb[0].mxu0
    %v4484 = vadd.f32 %v4441, %v4483
    %v4485 = vpop.f32.mrb[0].mxu0
    %v4486 = vadd.f32 %v4443, %v4485
    %v4487 = vpop.f32.mrb[0].mxu0
    %v4488 = vadd.f32 %v4445, %v4487
    %v4489 = vpop.f32.mrb[0].mxu0
    %v4490 = vadd.f32 %v4447, %v4489
    %4491 = vdwg.mxu0
    %4492 = vmatprep.subr.bf16.mxu0 %v3214
    %4493 = vmatpush1.bf16.msra.mxu0 %v3213
    %4494 = vmatprep.subr.bf16.mxu0 %v3222
    %4495 = vmatpush1.bf16.msra.mxu0 %v3221
    %4496 = vmatprep.subr.bf16.mxu0 %v3230
    %4497 = vmatpush1.bf16.msra.mxu0 %v3229
    %4498 = vmatprep.subr.bf16.mxu0 %v3238
    %4499 = vmatpush1.bf16.msra.mxu0 %v3237
    %4500 = vmatprep.subr.bf16.mxu0 %v3246
    %4501 = vmatpush1.bf16.msra.mxu0 %v3245
    %4502 = vmatprep.subr.bf16.mxu0 %v3254
    %4503 = vmatpush1.bf16.msra.mxu0 %v3253
    %4504 = vmatprep.subr.bf16.mxu0 %v3262
    %4505 = vmatpush1.bf16.msra.mxu0 %v3261
    %4506 = vmatprep.subr.bf16.mxu0 %v3270
    %4507 = vmatpush1.bf16.msra.mxu0 %v3269
    %4508 = vmatprep.subr.bf16.mxu0 %v3278
    %4509 = vmatpush1.bf16.msra.mxu0 %v3277
    %4510 = vmatprep.subr.bf16.mxu0 %v3286
    %4511 = vmatpush1.bf16.msra.mxu0 %v3285
    %4512 = vmatprep.subr.bf16.mxu0 %v3294
    %4513 = vmatpush1.bf16.msra.mxu0 %v3293
    %4514 = vmatprep.subr.bf16.mxu0 %v3302
    %4515 = vmatpush1.bf16.msra.mxu0 %v3301
    %4516 = vmatprep.subr.bf16.mxu0 %v3310
    %4517 = vmatpush1.bf16.msra.mxu0 %v3309
    %4518 = vmatprep.subr.bf16.mxu0 %v3318
    %4519 = vmatpush1.bf16.msra.mxu0 %v3317
    %4520 = vmatprep.subr.bf16.mxu0 %v3326
    %4521 = vmatpush1.bf16.msra.mxu0 %v3325
    %4522 = vmatprep.subr.bf16.mxu0 %v3334
    %4523 = vmatpush1.bf16.msra.mxu0 %v3333
    %4524 = vmatprep.mubr.bf16.mxu0 %v732
    %4525 = vmatmul.mubr.bf16.gmra.mrb[0].mxu0 %v731
    %v4526 = vpop.f32.mrb[0].mxu0
    %v4527 = vadd.f32 %v4484, %v4526
    %v4528 = vpop.f32.mrb[0].mxu0
    %v4529 = vadd.f32 %v4486, %v4528
    %v4530 = vpop.f32.mrb[0].mxu0
    %v4531 = vadd.f32 %v4488, %v4530
    %v4532 = vpop.f32.mrb[0].mxu0
    %v4533 = vadd.f32 %v4490, %v4532
    %4534 = vdwg.mxu0
    %v4535 = vmax.f32 %v4011, 0.0
    %v4536 = vmax.f32 %v4013, 0.0
    %v4537 = vmax.f32 %v4183, 0.0
    %v4538 = vmax.f32 %v4185, 0.0
    %v4539 = vmax.f32 %v4355, 0.0
    %v4540 = vmax.f32 %v4357, 0.0
    %v4541 = vmax.f32 %v4527, 0.0
    %v4542 = vmax.f32 %v4529, 0.0
    %v4543 = vmax.f32 %v4015, 0.0
    %v4544 = vmax.f32 %v4017, 0.0
    %v4545 = vmax.f32 %v4187, 0.0
    %v4546 = vmax.f32 %v4189, 0.0
    %v4547 = vmax.f32 %v4359, 0.0
    %v4548 = vmax.f32 %v4361, 0.0
    %v4549 = vmax.f32 %v4531, 0.0
    %v4550 = vmax.f32 %v4533, 0.0
    %v4551 = vpack.c.bf16 %v4543, %v4535
    %v4552 = vpack.c.bf16 %v4544, %v4536
    %v4553 = vpack.c.bf16 %v4545, %v4537
    %v4554 = vpack.c.bf16 %v4546, %v4538
    %v4555 = vpack.c.bf16 %v4547, %v4539
    %v4556 = vpack.c.bf16 %v4548, %v4540
    %v4557 = vpack.c.bf16 %v4549, %v4541
    %v4558 = vpack.c.bf16 %v4550, %v4542
    %v4559 = vld [vmem:[#allocation9] sm:$0xf]
    %v4560 = vld [vmem:[#allocation9 + $0x4] sm:$0xf]
    %v4561 = vld [vmem:[#allocation9 + $0x8] sm:$0xf]
    %v4562 = vld [vmem:[#allocation9 + $0xc] sm:$0xf]
    %v4563 = vld [vmem:[#allocation9 + $0x10] sm:$0xf]
    %v4564 = vld [vmem:[#allocation9 + $0x14] sm:$0xf]
    %v4565 = vld [vmem:[#allocation9 + $0x18] sm:$0xf]
    %v4566 = vld [vmem:[#allocation9 + $0x1c] sm:$0xf]
    %v4567 = vld [vmem:[#allocation9 + $0x20] sm:$0xf]
    %v4568 = vld [vmem:[#allocation9 + $0x24] sm:$0xf]
    %v4569 = vld [vmem:[#allocation9 + $0x28] sm:$0xf]
    %v4570 = vld [vmem:[#allocation9 + $0x2c] sm:$0xf]
    %v4571 = vld [vmem:[#allocation9 + $0x30] sm:$0xf]
    %v4572 = vld [vmem:[#allocation9 + $0x34] sm:$0xf]
    %v4573 = vld [vmem:[#allocation9 + $0x38] sm:$0xf]
    %v4574 = vld [vmem:[#allocation9 + $0x3c] sm:$0xf]
    %v4575 = vld [vmem:[#allocation9 + $0x40] sm:$0xf]
    %v4576 = vld [vmem:[#allocation9 + $0x44] sm:$0xf]
    %v4577 = vld [vmem:[#allocation9 + $0x48] sm:$0xf]
    %v4578 = vld [vmem:[#allocation9 + $0x4c] sm:$0xf]
    %v4579 = vld [vmem:[#allocation9 + $0x50] sm:$0xf]
    %v4580 = vld [vmem:[#allocation9 + $0x54] sm:$0xf]
    %v4581 = vld [vmem:[#allocation9 + $0x58] sm:$0xf]
    %v4582 = vld [vmem:[#allocation9 + $0x5c] sm:$0xf]
    %v4583 = vld [vmem:[#allocation9 + $0x60] sm:$0xf]
    %v4584 = vld [vmem:[#allocation9 + $0x64] sm:$0xf]
    %v4585 = vld [vmem:[#allocation9 + $0x68] sm:$0xf]
    %v4586 = vld [vmem:[#allocation9 + $0x6c] sm:$0xf]
    %v4587 = vld [vmem:[#allocation9 + $0x70] sm:$0xf]
    %v4588 = vld [vmem:[#allocation9 + $0x74] sm:$0xf]
    %v4589 = vld [vmem:[#allocation9 + $0x78] sm:$0xf]
    %v4590 = vld [vmem:[#allocation9 + $0x7c] sm:$0xf]
    %v4591 = vld [vmem:[#allocation9 + $0x80] sm:$0xf]
    %v4592 = vld [vmem:[#allocation9 + $0x84] sm:$0xf]
    %v4593 = vld [vmem:[#allocation9 + $0x88] sm:$0xf]
    %v4594 = vld [vmem:[#allocation9 + $0x8c] sm:$0xf]
    %v4595 = vld [vmem:[#allocation9 + $0x90] sm:$0xf]
    %v4596 = vld [vmem:[#allocation9 + $0x94] sm:$0xf]
    %v4597 = vld [vmem:[#allocation9 + $0x98] sm:$0xf]
    %v4598 = vld [vmem:[#allocation9 + $0x9c] sm:$0xf]
    %v4599 = vld [vmem:[#allocation9 + $0xa0] sm:$0xf]
    %v4600 = vld [vmem:[#allocation9 + $0xa4] sm:$0xf]
    %v4601 = vld [vmem:[#allocation9 + $0xa8] sm:$0xf]
    %v4602 = vld [vmem:[#allocation9 + $0xac] sm:$0xf]
    %v4603 = vld [vmem:[#allocation9 + $0xb0] sm:$0xf]
    %v4604 = vld [vmem:[#allocation9 + $0xb4] sm:$0xf]
    %v4605 = vld [vmem:[#allocation9 + $0xb8] sm:$0xf]
    %v4606 = vld [vmem:[#allocation9 + $0xbc] sm:$0xf]
    %v4607 = vld [vmem:[#allocation9 + $0xc0] sm:$0xf]
    %v4608 = vld [vmem:[#allocation9 + $0xc4] sm:$0xf]
    %v4609 = vld [vmem:[#allocation9 + $0xc8] sm:$0xf]
    %v4610 = vld [vmem:[#allocation9 + $0xcc] sm:$0xf]
    %v4611 = vld [vmem:[#allocation9 + $0xd0] sm:$0xf]
    %v4612 = vld [vmem:[#allocation9 + $0xd4] sm:$0xf]
    %v4613 = vld [vmem:[#allocation9 + $0xd8] sm:$0xf]
    %v4614 = vld [vmem:[#allocation9 + $0xdc] sm:$0xf]
    %v4615 = vld [vmem:[#allocation9 + $0xe0] sm:$0xf]
    %v4616 = vld [vmem:[#allocation9 + $0xe4] sm:$0xf]
    %v4617 = vld [vmem:[#allocation9 + $0xe8] sm:$0xf]
    %v4618 = vld [vmem:[#allocation9 + $0xec] sm:$0xf]
    %v4619 = vld [vmem:[#allocation9 + $0xf0] sm:$0xf]
    %v4620 = vld [vmem:[#allocation9 + $0xf4] sm:$0xf]
    %v4621 = vld [vmem:[#allocation9 + $0xf8] sm:$0xf]
    %v4622 = vld [vmem:[#allocation9 + $0xfc] sm:$0xf]
    %v4623 = vld [vmem:[#allocation9 + $0x100] sm:$0xf]
    %v4624 = vld [vmem:[#allocation9 + $0x104] sm:$0xf]
    %v4625 = vld [vmem:[#allocation9 + $0x108] sm:$0xf]
    %v4626 = vld [vmem:[#allocation9 + $0x10c] sm:$0xf]
    %v4627 = vld [vmem:[#allocation9 + $0x110] sm:$0xf]
    %v4628 = vld [vmem:[#allocation9 + $0x114] sm:$0xf]
    %v4629 = vld [vmem:[#allocation9 + $0x118] sm:$0xf]
    %v4630 = vld [vmem:[#allocation9 + $0x11c] sm:$0xf]
    %v4631 = vld [vmem:[#allocation9 + $0x120] sm:$0xf]
    %v4632 = vld [vmem:[#allocation9 + $0x124] sm:$0xf]
    %v4633 = vld [vmem:[#allocation9 + $0x128] sm:$0xf]
    %v4634 = vld [vmem:[#allocation9 + $0x12c] sm:$0xf]
    %v4635 = vld [vmem:[#allocation9 + $0x130] sm:$0xf]
    %v4636 = vld [vmem:[#allocation9 + $0x134] sm:$0xf]
    %v4637 = vld [vmem:[#allocation9 + $0x138] sm:$0xf]
    %v4638 = vld [vmem:[#allocation9 + $0x13c] sm:$0xf]
    %v4639 = vld [vmem:[#allocation9 + $0x140] sm:$0xf]
    %v4640 = vld [vmem:[#allocation9 + $0x144] sm:$0xf]
    %v4641 = vld [vmem:[#allocation9 + $0x148] sm:$0xf]
    %v4642 = vld [vmem:[#allocation9 + $0x14c] sm:$0xf]
    %v4643 = vld [vmem:[#allocation9 + $0x150] sm:$0xf]
    %v4644 = vld [vmem:[#allocation9 + $0x154] sm:$0xf]
    %v4645 = vld [vmem:[#allocation9 + $0x158] sm:$0xf]
    %v4646 = vld [vmem:[#allocation9 + $0x15c] sm:$0xf]
    %v4647 = vld [vmem:[#allocation9 + $0x160] sm:$0xf]
    %v4648 = vld [vmem:[#allocation9 + $0x164] sm:$0xf]
    %v4649 = vld [vmem:[#allocation9 + $0x168] sm:$0xf]
    %v4650 = vld [vmem:[#allocation9 + $0x16c] sm:$0xf]
    %v4651 = vld [vmem:[#allocation9 + $0x170] sm:$0xf]
    %v4652 = vld [vmem:[#allocation9 + $0x174] sm:$0xf]
    %v4653 = vld [vmem:[#allocation9 + $0x178] sm:$0xf]
    %v4654 = vld [vmem:[#allocation9 + $0x17c] sm:$0xf]
    %v4655 = vld [vmem:[#allocation9 + $0x180] sm:$0xf]
    %v4656 = vld [vmem:[#allocation9 + $0x184] sm:$0xf]
    %v4657 = vld [vmem:[#allocation9 + $0x188] sm:$0xf]
    %v4658 = vld [vmem:[#allocation9 + $0x18c] sm:$0xf]
    %v4659 = vld [vmem:[#allocation9 + $0x190] sm:$0xf]
    %v4660 = vld [vmem:[#allocation9 + $0x194] sm:$0xf]
    %v4661 = vld [vmem:[#allocation9 + $0x198] sm:$0xf]
    %v4662 = vld [vmem:[#allocation9 + $0x19c] sm:$0xf]
    %v4663 = vld [vmem:[#allocation9 + $0x1a0] sm:$0xf]
    %v4664 = vld [vmem:[#allocation9 + $0x1a4] sm:$0xf]
    %v4665 = vld [vmem:[#allocation9 + $0x1a8] sm:$0xf]
    %v4666 = vld [vmem:[#allocation9 + $0x1ac] sm:$0xf]
    %v4667 = vld [vmem:[#allocation9 + $0x1b0] sm:$0xf]
    %v4668 = vld [vmem:[#allocation9 + $0x1b4] sm:$0xf]
    %v4669 = vld [vmem:[#allocation9 + $0x1b8] sm:$0xf]
    %v4670 = vld [vmem:[#allocation9 + $0x1bc] sm:$0xf]
    %v4671 = vld [vmem:[#allocation9 + $0x1c0] sm:$0xf]
    %v4672 = vld [vmem:[#allocation9 + $0x1c4] sm:$0xf]
    %v4673 = vld [vmem:[#allocation9 + $0x1c8] sm:$0xf]
    %v4674 = vld [vmem:[#allocation9 + $0x1cc] sm:$0xf]
    %v4675 = vld [vmem:[#allocation9 + $0x1d0] sm:$0xf]
    %v4676 = vld [vmem:[#allocation9 + $0x1d4] sm:$0xf]
    %v4677 = vld [vmem:[#allocation9 + $0x1d8] sm:$0xf]
    %v4678 = vld [vmem:[#allocation9 + $0x1dc] sm:$0xf]
    %v4679 = vld [vmem:[#allocation9 + $0x1e0] sm:$0xf]
    %v4680 = vld [vmem:[#allocation9 + $0x1e4] sm:$0xf]
    %v4681 = vld [vmem:[#allocation9 + $0x1e8] sm:$0xf]
    %v4682 = vld [vmem:[#allocation9 + $0x1ec] sm:$0xf]
    %v4683 = vld [vmem:[#allocation9 + $0x1f0] sm:$0xf]
    %v4684 = vld [vmem:[#allocation9 + $0x1f4] sm:$0xf]
    %v4685 = vld [vmem:[#allocation9 + $0x1f8] sm:$0xf]
    %v4686 = vld [vmem:[#allocation9 + $0x1fc] sm:$0xf]
    %v4687 = vld [vmem:[#allocation10] sm:$0x1]
    %v4689 = vlaneseq
    %v4690 = vshrl.u32 %v4689, 7
    %v4691 = vsub.s32 0, %v4690
    %v4692 = vrot.slane %v4687, %v4691
    %v4822 = vunpack.c.l.b16 %v4559
    %v4823 = vunpack.c.l.b16 %v4560
    %v4824 = vunpack.c.l.b16 %v4561
    %v4825 = vunpack.c.l.b16 %v4562
    %v4826 = vunpack.c.l.b16 %v4563
    %v4827 = vunpack.c.l.b16 %v4564
    %v4828 = vunpack.c.l.b16 %v4565
    %v4829 = vunpack.c.l.b16 %v4566
    %v4830 = vunpack.c.l.b16 %v4567
    %v4831 = vunpack.c.l.b16 %v4568
    %v4832 = vunpack.c.l.b16 %v4569
    %v4833 = vunpack.c.l.b16 %v4570
    %v4834 = vunpack.c.l.b16 %v4571
    %v4835 = vunpack.c.l.b16 %v4572
    %v4836 = vunpack.c.l.b16 %v4573
    %v4837 = vunpack.c.l.b16 %v4574
    %v4838 = vunpack.c.l.b16 %v4575
    %v4839 = vunpack.c.l.b16 %v4576
    %v4840 = vunpack.c.l.b16 %v4577
    %v4841 = vunpack.c.l.b16 %v4578
    %v4842 = vunpack.c.l.b16 %v4579
    %v4843 = vunpack.c.l.b16 %v4580
    %v4844 = vunpack.c.l.b16 %v4581
    %v4845 = vunpack.c.l.b16 %v4582
    %v4846 = vunpack.c.l.b16 %v4583
    %v4847 = vunpack.c.l.b16 %v4584
    %v4848 = vunpack.c.l.b16 %v4585
    %v4849 = vunpack.c.l.b16 %v4586
    %v4850 = vunpack.c.l.b16 %v4587
    %v4851 = vunpack.c.l.b16 %v4588
    %v4852 = vunpack.c.l.b16 %v4589
    %v4853 = vunpack.c.l.b16 %v4590
    %v4854 = vunpack.c.l.b16 %v4591
    %v4855 = vunpack.c.l.b16 %v4592
    %v4856 = vunpack.c.l.b16 %v4593
    %v4857 = vunpack.c.l.b16 %v4594
    %v4858 = vunpack.c.l.b16 %v4595
    %v4859 = vunpack.c.l.b16 %v4596
    %v4860 = vunpack.c.l.b16 %v4597
    %v4861 = vunpack.c.l.b16 %v4598
    %v4862 = vunpack.c.l.b16 %v4599
    %v4863 = vunpack.c.l.b16 %v4600
    %v4864 = vunpack.c.l.b16 %v4601
    %v4865 = vunpack.c.l.b16 %v4602
    %v4866 = vunpack.c.l.b16 %v4603
    %v4867 = vunpack.c.l.b16 %v4604
    %v4868 = vunpack.c.l.b16 %v4605
    %v4869 = vunpack.c.l.b16 %v4606
    %v4870 = vunpack.c.l.b16 %v4607
    %v4871 = vunpack.c.l.b16 %v4608
    %v4872 = vunpack.c.l.b16 %v4609
    %v4873 = vunpack.c.l.b16 %v4610
    %v4874 = vunpack.c.l.b16 %v4611
    %v4875 = vunpack.c.l.b16 %v4612
    %v4876 = vunpack.c.l.b16 %v4613
    %v4877 = vunpack.c.l.b16 %v4614
    %v4878 = vunpack.c.l.b16 %v4615
    %v4879 = vunpack.c.l.b16 %v4616
    %v4880 = vunpack.c.l.b16 %v4617
    %v4881 = vunpack.c.l.b16 %v4618
    %v4882 = vunpack.c.l.b16 %v4619
    %v4883 = vunpack.c.l.b16 %v4620
    %v4884 = vunpack.c.l.b16 %v4621
    %v4885 = vunpack.c.l.b16 %v4622
    %v4886 = vunpack.c.l.b16 %v4623
    %v4887 = vunpack.c.l.b16 %v4624
    %v4888 = vunpack.c.l.b16 %v4625
    %v4889 = vunpack.c.l.b16 %v4626
    %v4890 = vunpack.c.l.b16 %v4627
    %v4891 = vunpack.c.l.b16 %v4628
    %v4892 = vunpack.c.l.b16 %v4629
    %v4893 = vunpack.c.l.b16 %v4630
    %v4894 = vunpack.c.l.b16 %v4631
    %v4895 = vunpack.c.l.b16 %v4632
    %v4896 = vunpack.c.l.b16 %v4633
    %v4897 = vunpack.c.l.b16 %v4634
    %v4898 = vunpack.c.l.b16 %v4635
    %v4899 = vunpack.c.l.b16 %v4636
    %v4900 = vunpack.c.l.b16 %v4637
    %v4901 = vunpack.c.l.b16 %v4638
    %v4902 = vunpack.c.l.b16 %v4639
    %v4903 = vunpack.c.l.b16 %v4640
    %v4904 = vunpack.c.l.b16 %v4641
    %v4905 = vunpack.c.l.b16 %v4642
    %v4906 = vunpack.c.l.b16 %v4643
    %v4907 = vunpack.c.l.b16 %v4644
    %v4908 = vunpack.c.l.b16 %v4645
    %v4909 = vunpack.c.l.b16 %v4646
    %v4910 = vunpack.c.l.b16 %v4647
    %v4911 = vunpack.c.l.b16 %v4648
    %v4912 = vunpack.c.l.b16 %v4649
    %v4913 = vunpack.c.l.b16 %v4650
    %v4914 = vunpack.c.l.b16 %v4651
    %v4915 = vunpack.c.l.b16 %v4652
    %v4916 = vunpack.c.l.b16 %v4653
    %v4917 = vunpack.c.l.b16 %v4654
    %v4918 = vunpack.c.l.b16 %v4655
    %v4919 = vunpack.c.l.b16 %v4656
    %v4920 = vunpack.c.l.b16 %v4657
    %v4921 = vunpack.c.l.b16 %v4658
    %v4922 = vunpack.c.l.b16 %v4659
    %v4923 = vunpack.c.l.b16 %v4660
    %v4924 = vunpack.c.l.b16 %v4661
    %v4925 = vunpack.c.l.b16 %v4662
    %v4926 = vunpack.c.l.b16 %v4663
    %v4927 = vunpack.c.l.b16 %v4664
    %v4928 = vunpack.c.l.b16 %v4665
    %v4929 = vunpack.c.l.b16 %v4666
    %v4930 = vunpack.c.l.b16 %v4667
    %v4931 = vunpack.c.l.b16 %v4668
    %v4932 = vunpack.c.l.b16 %v4669
    %v4933 = vunpack.c.l.b16 %v4670
    %v4934 = vunpack.c.l.b16 %v4671
    %v4935 = vunpack.c.l.b16 %v4672
    %v4936 = vunpack.c.l.b16 %v4673
    %v4937 = vunpack.c.l.b16 %v4674
    %v4938 = vunpack.c.l.b16 %v4675
    %v4939 = vunpack.c.l.b16 %v4676
    %v4940 = vunpack.c.l.b16 %v4677
    %v4941 = vunpack.c.l.b16 %v4678
    %v4942 = vunpack.c.l.b16 %v4679
    %v4943 = vunpack.c.l.b16 %v4680
    %v4944 = vunpack.c.l.b16 %v4681
    %v4945 = vunpack.c.l.b16 %v4682
    %v4946 = vunpack.c.l.b16 %v4683
    %v4947 = vunpack.c.l.b16 %v4684
    %v4948 = vunpack.c.l.b16 %v4685
    %v4949 = vunpack.c.l.b16 %v4686
    %v4950 = vpack.c.b16 %v4823, %v4822
    %v4951 = vpack.c.b16 %v4825, %v4824
    %v4952 = vpack.c.b16 %v4827, %v4826
    %v4953 = vpack.c.b16 %v4829, %v4828
    %v4954 = vpack.c.b16 %v4831, %v4830
    %v4955 = vpack.c.b16 %v4833, %v4832
    %v4956 = vpack.c.b16 %v4835, %v4834
    %v4957 = vpack.c.b16 %v4837, %v4836
    %v4958 = vpack.c.b16 %v4839, %v4838
    %v4959 = vpack.c.b16 %v4841, %v4840
    %v4960 = vpack.c.b16 %v4843, %v4842
    %v4961 = vpack.c.b16 %v4845, %v4844
    %v4962 = vpack.c.b16 %v4847, %v4846
    %v4963 = vpack.c.b16 %v4849, %v4848
    %v4964 = vpack.c.b16 %v4851, %v4850
    %v4965 = vpack.c.b16 %v4853, %v4852
    %v4966 = vpack.c.b16 %v4855, %v4854
    %v4967 = vpack.c.b16 %v4857, %v4856
    %v4968 = vpack.c.b16 %v4859, %v4858
    %v4969 = vpack.c.b16 %v4861, %v4860
    %v4970 = vpack.c.b16 %v4863, %v4862
    %v4971 = vpack.c.b16 %v4865, %v4864
    %v4972 = vpack.c.b16 %v4867, %v4866
    %v4973 = vpack.c.b16 %v4869, %v4868
    %v4974 = vpack.c.b16 %v4871, %v4870
    %v4975 = vpack.c.b16 %v4873, %v4872
    %v4976 = vpack.c.b16 %v4875, %v4874
    %v4977 = vpack.c.b16 %v4877, %v4876
    %v4978 = vpack.c.b16 %v4879, %v4878
    %v4979 = vpack.c.b16 %v4881, %v4880
    %v4980 = vpack.c.b16 %v4883, %v4882
    %v4981 = vpack.c.b16 %v4885, %v4884
    %v4982 = vpack.c.b16 %v4887, %v4886
    %v4983 = vpack.c.b16 %v4889, %v4888
    %v4984 = vpack.c.b16 %v4891, %v4890
    %v4985 = vpack.c.b16 %v4893, %v4892
    %v4986 = vpack.c.b16 %v4895, %v4894
    %v4987 = vpack.c.b16 %v4897, %v4896
    %v4988 = vpack.c.b16 %v4899, %v4898
    %v4989 = vpack.c.b16 %v4901, %v4900
    %v4990 = vpack.c.b16 %v4903, %v4902
    %v4991 = vpack.c.b16 %v4905, %v4904
    %v4992 = vpack.c.b16 %v4907, %v4906
    %v4993 = vpack.c.b16 %v4909, %v4908
    %v4994 = vpack.c.b16 %v4911, %v4910
    %v4995 = vpack.c.b16 %v4913, %v4912
    %v4996 = vpack.c.b16 %v4915, %v4914
    %v4997 = vpack.c.b16 %v4917, %v4916
    %v4998 = vpack.c.b16 %v4919, %v4918
    %v4999 = vpack.c.b16 %v4921, %v4920
    %v5000 = vpack.c.b16 %v4923, %v4922
    %v5001 = vpack.c.b16 %v4925, %v4924
    %v5002 = vpack.c.b16 %v4927, %v4926
    %v5003 = vpack.c.b16 %v4929, %v4928
    %v5004 = vpack.c.b16 %v4931, %v4930
    %v5005 = vpack.c.b16 %v4933, %v4932
    %v5006 = vpack.c.b16 %v4935, %v4934
    %v5007 = vpack.c.b16 %v4937, %v4936
    %v5008 = vpack.c.b16 %v4939, %v4938
    %v5009 = vpack.c.b16 %v4941, %v4940
    %v5010 = vpack.c.b16 %v4943, %v4942
    %v5011 = vpack.c.b16 %v4945, %v4944
    %v5012 = vpack.c.b16 %v4947, %v4946
    %v5013 = vpack.c.b16 %v4949, %v4948
    %5078 = vmatprep.subr.bf16.mxu0 0
    %5079 = vmatpush1.bf16.msra.mxu0 %v4950
    %5080 = vmatprep.subr.bf16.mxu0 0
    %5081 = vmatpush1.bf16.msra.mxu0 %v4951
    %5082 = vmatprep.subr.bf16.mxu0 0
    %5083 = vmatpush1.bf16.msra.mxu0 %v4952
    %5084 = vmatprep.subr.bf16.mxu0 0
    %5085 = vmatpush1.bf16.msra.mxu0 %v4953
    %5086 = vmatprep.subr.bf16.mxu0 0
    %5087 = vmatpush1.bf16.msra.mxu0 %v4954
    %5088 = vmatprep.subr.bf16.mxu0 0
    %5089 = vmatpush1.bf16.msra.mxu0 %v4955
    %5090 = vmatprep.subr.bf16.mxu0 0
    %5091 = vmatpush1.bf16.msra.mxu0 %v4956
    %5092 = vmatprep.subr.bf16.mxu0 0
    %5093 = vmatpush1.bf16.msra.mxu0 %v4957
    %5094 = vmatprep.subr.bf16.mxu0 0
    %5095 = vmatpush1.bf16.msra.mxu0 %v4958
    %5096 = vmatprep.subr.bf16.mxu0 0
    %5097 = vmatpush1.bf16.msra.mxu0 %v4959
    %5098 = vmatprep.subr.bf16.mxu0 0
    %5099 = vmatpush1.bf16.msra.mxu0 %v4960
    %5100 = vmatprep.subr.bf16.mxu0 0
    %5101 = vmatpush1.bf16.msra.mxu0 %v4961
    %5102 = vmatprep.subr.bf16.mxu0 0
    %5103 = vmatpush1.bf16.msra.mxu0 %v4962
    %5104 = vmatprep.subr.bf16.mxu0 0
    %5105 = vmatpush1.bf16.msra.mxu0 %v4963
    %5106 = vmatprep.subr.bf16.mxu0 0
    %5107 = vmatpush1.bf16.msra.mxu0 %v4964
    %5108 = vmatprep.subr.bf16.mxu0 0
    %5109 = vmatpush1.bf16.msra.mxu0 %v4965
    %5110 = vmatprep.mubr.bf16.mxu0 %v4552
    %5111 = vmatmul.mubr.bf16.gmra.mrb[0].mxu0 %v4551
    %v5112 = vpop.f32.mrb[0].mxu0
    %v5113 = vadd.f32 %v4692, %v5112
    %v5114 = vpop.f32.mrb[0].mxu0
    %v5115 = vpop.f32.mrb[0].mxu0
    %v5116 = vadd.f32 %v4692, %v5115
    %v5117 = vpop.f32.mrb[0].mxu0
    %5118 = vdwg.mxu0
    %5119 = vmatprep.subr.bf16.mxu0 0
    %5120 = vmatpush1.bf16.msra.mxu0 %v4966
    %5121 = vmatprep.subr.bf16.mxu0 0
    %5122 = vmatpush1.bf16.msra.mxu0 %v4967
    %5123 = vmatprep.subr.bf16.mxu0 0
    %5124 = vmatpush1.bf16.msra.mxu0 %v4968
    %5125 = vmatprep.subr.bf16.mxu0 0
    %5126 = vmatpush1.bf16.msra.mxu0 %v4969
    %5127 = vmatprep.subr.bf16.mxu0 0
    %5128 = vmatpush1.bf16.msra.mxu0 %v4970
    %5129 = vmatprep.subr.bf16.mxu0 0
    %5130 = vmatpush1.bf16.msra.mxu0 %v4971
    %5131 = vmatprep.subr.bf16.mxu0 0
    %5132 = vmatpush1.bf16.msra.mxu0 %v4972
    %5133 = vmatprep.subr.bf16.mxu0 0
    %5134 = vmatpush1.bf16.msra.mxu0 %v4973
    %5135 = vmatprep.subr.bf16.mxu0 0
    %5136 = vmatpush1.bf16.msra.mxu0 %v4974
    %5137 = vmatprep.subr.bf16.mxu0 0
    %5138 = vmatpush1.bf16.msra.mxu0 %v4975
    %5139 = vmatprep.subr.bf16.mxu0 0
    %5140 = vmatpush1.bf16.msra.mxu0 %v4976
    %5141 = vmatprep.subr.bf16.mxu0 0
    %5142 = vmatpush1.bf16.msra.mxu0 %v4977
    %5143 = vmatprep.subr.bf16.mxu0 0
    %5144 = vmatpush1.bf16.msra.mxu0 %v4978
    %5145 = vmatprep.subr.bf16.mxu0 0
    %5146 = vmatpush1.bf16.msra.mxu0 %v4979
    %5147 = vmatprep.subr.bf16.mxu0 0
    %5148 = vmatpush1.bf16.msra.mxu0 %v4980
    %5149 = vmatprep.subr.bf16.mxu0 0
    %5150 = vmatpush1.bf16.msra.mxu0 %v4981
    %5151 = vmatprep.mubr.bf16.mxu0 %v4554
    %5152 = vmatmul.mubr.bf16.gmra.mrb[0].mxu0 %v4553
    %v5153 = vpop.f32.mrb[0].mxu0
    %v5154 = vadd.f32 %v5113, %v5153
    %v5155 = vpop.f32.mrb[0].mxu0
    %v5156 = vpop.f32.mrb[0].mxu0
    %v5157 = vadd.f32 %v5116, %v5156
    %v5158 = vpop.f32.mrb[0].mxu0
    %5159 = vdwg.mxu0
    %5160 = vmatprep.subr.bf16.mxu0 0
    %5161 = vmatpush1.bf16.msra.mxu0 %v4982
    %5162 = vmatprep.subr.bf16.mxu0 0
    %5163 = vmatpush1.bf16.msra.mxu0 %v4983
    %5164 = vmatprep.subr.bf16.mxu0 0
    %5165 = vmatpush1.bf16.msra.mxu0 %v4984
    %5166 = vmatprep.subr.bf16.mxu0 0
    %5167 = vmatpush1.bf16.msra.mxu0 %v4985
    %5168 = vmatprep.subr.bf16.mxu0 0
    %5169 = vmatpush1.bf16.msra.mxu0 %v4986
    %5170 = vmatprep.subr.bf16.mxu0 0
    %5171 = vmatpush1.bf16.msra.mxu0 %v4987
    %5172 = vmatprep.subr.bf16.mxu0 0
    %5173 = vmatpush1.bf16.msra.mxu0 %v4988
    %5174 = vmatprep.subr.bf16.mxu0 0
    %5175 = vmatpush1.bf16.msra.mxu0 %v4989
    %5176 = vmatprep.subr.bf16.mxu0 0
    %5177 = vmatpush1.bf16.msra.mxu0 %v4990
    %5178 = vmatprep.subr.bf16.mxu0 0
    %5179 = vmatpush1.bf16.msra.mxu0 %v4991
    %5180 = vmatprep.subr.bf16.mxu0 0
    %5181 = vmatpush1.bf16.msra.mxu0 %v4992
    %5182 = vmatprep.subr.bf16.mxu0 0
    %5183 = vmatpush1.bf16.msra.mxu0 %v4993
    %5184 = vmatprep.subr.bf16.mxu0 0
    %5185 = vmatpush1.bf16.msra.mxu0 %v4994
    %5186 = vmatprep.subr.bf16.mxu0 0
    %5187 = vmatpush1.bf16.msra.mxu0 %v4995
    %5188 = vmatprep.subr.bf16.mxu0 0
    %5189 = vmatpush1.bf16.msra.mxu0 %v4996
    %5190 = vmatprep.subr.bf16.mxu0 0
    %5191 = vmatpush1.bf16.msra.mxu0 %v4997
    %5192 = vmatprep.mubr.bf16.mxu0 %v4556
    %5193 = vmatmul.mubr.bf16.gmra.mrb[0].mxu0 %v4555
    %v5194 = vpop.f32.mrb[0].mxu0
    %v5195 = vadd.f32 %v5154, %v5194
    %v5196 = vpop.f32.mrb[0].mxu0
    %v5197 = vpop.f32.mrb[0].mxu0
    %v5198 = vadd.f32 %v5157, %v5197
    %v5199 = vpop.f32.mrb[0].mxu0
    %5200 = vdwg.mxu0
    %5201 = vmatprep.subr.bf16.mxu0 0
    %5202 = vmatpush1.bf16.msra.mxu0 %v4998
    %5203 = vmatprep.subr.bf16.mxu0 0
    %5204 = vmatpush1.bf16.msra.mxu0 %v4999
    %5205 = vmatprep.subr.bf16.mxu0 0
    %5206 = vmatpush1.bf16.msra.mxu0 %v5000
    %5207 = vmatprep.subr.bf16.mxu0 0
    %5208 = vmatpush1.bf16.msra.mxu0 %v5001
    %5209 = vmatprep.subr.bf16.mxu0 0
    %5210 = vmatpush1.bf16.msra.mxu0 %v5002
    %5211 = vmatprep.subr.bf16.mxu0 0
    %5212 = vmatpush1.bf16.msra.mxu0 %v5003
    %5213 = vmatprep.subr.bf16.mxu0 0
    %5214 = vmatpush1.bf16.msra.mxu0 %v5004
    %5215 = vmatprep.subr.bf16.mxu0 0
    %5216 = vmatpush1.bf16.msra.mxu0 %v5005
    %5217 = vmatprep.subr.bf16.mxu0 0
    %5218 = vmatpush1.bf16.msra.mxu0 %v5006
    %5219 = vmatprep.subr.bf16.mxu0 0
    %5220 = vmatpush1.bf16.msra.mxu0 %v5007
    %5221 = vmatprep.subr.bf16.mxu0 0
    %5222 = vmatpush1.bf16.msra.mxu0 %v5008
    %5223 = vmatprep.subr.bf16.mxu0 0
    %5224 = vmatpush1.bf16.msra.mxu0 %v5009
    %5225 = vmatprep.subr.bf16.mxu0 0
    %5226 = vmatpush1.bf16.msra.mxu0 %v5010
    %5227 = vmatprep.subr.bf16.mxu0 0
    %5228 = vmatpush1.bf16.msra.mxu0 %v5011
    %5229 = vmatprep.subr.bf16.mxu0 0
    %5230 = vmatpush1.bf16.msra.mxu0 %v5012
    %5231 = vmatprep.subr.bf16.mxu0 0
    %5232 = vmatpush1.bf16.msra.mxu0 %v5013
    %5233 = vmatprep.mubr.bf16.mxu0 %v4558
    %5234 = vmatmul.mubr.bf16.gmra.mrb[0].mxu0 %v4557
    %v5235 = vpop.f32.mrb[0].mxu0
    %v5236 = vadd.f32 %v5195, %v5235
    %v5237 = vpop.f32.mrb[0].mxu0
    %v5238 = vpop.f32.mrb[0].mxu0
    %v5239 = vadd.f32 %v5198, %v5238
    %v5240 = vpop.f32.mrb[0].mxu0
    %5241 = vdwg.mxu0
    %5242 = vst [vmem:[%s7] sm:$0xff] %v5236
    %5243 = vst [vmem:[%s7 + $0x8] sm:$0xff] %v5239
    // Predicated region
    $region54: #{fibonacci_mlp_forward.1} parent=1 // pred_check
      _
    $region55: #{fibonacci_mlp_forward.1} parent=1 // pred_check_branch
      %5245 = sbr.rel (0) target = $region57
    $region56: #{fibonacci_mlp_forward.1} parent=1 // pred_region
      _
    $region57: #{fibonacci_mlp_forward.1} parent=1 // pred_fallthru
      _
    // Predicated region
    $region58: #{fibonacci_mlp_forward.1} parent=1 // pred_check
      _
    $region59: #{fibonacci_mlp_forward.1} parent=1 // pred_check_branch
      %5247 = sbr.rel (0) target = $region61
    $region60: #{fibonacci_mlp_forward.1} parent=1 // pred_region
      _
    $region61: #{fibonacci_mlp_forward.1} parent=1 // pred_fallthru
      _
    %5248 = vsyncpa [#allocation3], 1
    %5249 = vsyncpa [#allocation5], 1
    %5250 = vsyncpa [#allocation8], 1
    %5251 = vsyncpa [#allocation11], 1

</llo_original>
